<compile_context>
chip_gen: v5e
topology: v5e:2x2
jax: 0.10.0
libtpu: 0.0.40
codegen_flags: <defaults>
</compile_context>

<pallas_src>
import functools

import jax
import jax.numpy as jnp
from jax.experimental import pallas as pl
from jax.experimental.pallas import tpu as pltpu

C_FEAT = 2048          # ResNet-50 final channel count
N_CLS = 751            # Linear_layer output dim
N_PAD = 768            # 751 padded to 6*128 -> lane-dense logits stores
POOL = 7               # AvgPool2d kernel; stride=1 on a 7x7 map -> 1x1 output
MAX_TB = 128           # batch tile: fills the MXU M dimension on v5e/v6e/v7x


def _linear_kernel(x_ref, w_ref, b_ref, o_ref):
    # x_ref: (TB, 2048) f32 pooled features; w_ref: (2048, 768) bf16 (resident);
    # b_ref: (1, 768) f32; o_ref: (TB, 768) f32.
    x = x_ref[...].astype(jnp.bfloat16)          # cast only at the MXU operand
    acc = jnp.dot(x, w_ref[...], preferred_element_type=jnp.float32)
    o_ref[...] = acc + b_ref[...]                # (1, 768) bias broadcasts


def prepare_linear_params(w, b):
    """One-time prep: PyTorch (751, 2048) weight -> (2048, 768) bf16, bias -> (1, 768) f32."""
    w_pad = jnp.zeros((C_FEAT, N_PAD), jnp.bfloat16)
    w_pad = w_pad.at[:, :N_CLS].set(w.T.astype(jnp.bfloat16))
    b_pad = jnp.zeros((1, N_PAD), jnp.float32)
    b_pad = b_pad.at[:, :N_CLS].set(b.reshape(1, N_CLS).astype(jnp.float32))
    return w_pad, b_pad


@functools.partial(jax.jit)
def m1501_head(feat_nchw, w_pad, b_pad):
    """feat_nchw: (B, 2048, 7, 7) f32 backbone features (NCHW, as PyTorch).
    w_pad/b_pad: outputs of prepare_linear_params.
    Returns (x1: (B, 2048), x2: (B, 751))."""
    B, C, H, W = feat_nchw.shape
    assert C == C_FEAT and H == POOL and W == POOL

    # AvgPool2d(7, stride=1) on a 7x7 map == mean over all 49 positions.
    # Reduction over the last axis of a reshape: no transpose materialized, and
    # the (B, 2048) result is already lane-dense as the matmul LHS.
    x1 = jnp.mean(feat_nchw.reshape(B, C, H * W), axis=-1)       # (B, 2048) f32

    # Batch tiling: one (TB, 2048) x (2048, 768) GEMM per grid step.
    if B >= MAX_TB:
        tb = MAX_TB
    else:
        tb = max(8, -(-B // 8) * 8)       # round tiny batches up to a sublane multiple
    b_padded = -(-B // tb) * tb
    x1_in = x1 if b_padded == B else jnp.pad(x1, ((0, b_padded - B), (0, 0)))
    grid = (b_padded // tb,)

    cost = pl.CostEstimate(
        flops=2 * b_padded * C_FEAT * N_PAD,
        transcendentals=0,
        bytes_accessed=(x1_in.size * 4 + w_pad.size * 2 + b_pad.size * 4
                        + b_padded * N_PAD * 4),
    )

    x2_pad = pl.pallas_call(
        _linear_kernel,
        out_shape=jax.ShapeDtypeStruct((b_padded, N_PAD), jnp.float32),
        grid_spec=pltpu.PrefetchScalarGridSpec(
            num_scalar_prefetch=0,
            grid=grid,
            in_specs=[
                pl.BlockSpec((tb, C_FEAT), lambda i: (i, 0)),     # pooled activations
                pl.BlockSpec((C_FEAT, N_PAD), lambda i: (0, 0)),  # bf16 weight (constant index -> fetched once)
                pl.BlockSpec((1, N_PAD), lambda i: (0, 0)),       # bias (resident)
            ],
            out_specs=pl.BlockSpec((tb, N_PAD), lambda i: (i, 0)),
        ),
        compiler_params=pltpu.CompilerParams(
            # Grid axis = batch-tile axis: each v7x TensorCore gets >= one full
            # (TB, 2048) tile when there are >= 2 tiles; single tile -> no-op.
            dimension_semantics=("parallel",),
            # Real footprint ~10 MiB; 32 MiB fits all generations (v7x has only
            # 64 MiB physical VMEM, so the previous 96 MiB limit was invalid).
            vmem_limit_bytes=32 * 1024 * 1024,
        ),
        cost_estimate=cost,
    )(x1_in, w_pad, b_pad)

    return x1, x2_pad[:B, :N_CLS]


if __name__ == "__main__":
    key = jax.random.PRNGKey(0)
    k_feat, k_w, k_b = jax.random.split(key, 3)

    B = 2
    # Backbone output feature map (what self.resnet_layer(x) would produce).
    feats = jax.random.normal(k_feat, (B, C_FEAT, POOL, POOL), dtype=jnp.float32)

    # Deterministic Linear(2048, 751) parameters (PyTorch stores weight as (751, 2048)).
    bound = 1.0 / (C_FEAT ** 0.5)
    w = jax.random.uniform(k_w, (N_CLS, C_FEAT), jnp.float32, -bound, bound)
    b = jax.random.uniform(k_b, (N_CLS,), jnp.float32, -bound, bound)

    w_pad, b_pad = prepare_linear_params(w, b)
    x1, x2 = m1501_head(feats, w_pad, b_pad)
    jax.block_until_ready((x1, x2))

    # Pure-JAX f32 reference of the same head.
    x1_ref = jnp.mean(feats.reshape(B, C_FEAT, -1), axis=-1)    # (B, 2048)
    x2_ref = x1_ref @ w.T + b                                   # (B, 751)
    assert x1.shape == (B, C_FEAT) and x2.shape == (B, N_CLS)
    assert jnp.allclose(x1, x1_ref, atol=1e-5, rtol=1e-5)
    # bf16 weight/activation matmul over K=2048 -> ~1e-3-level error vs f32 ref.
    assert jnp.allclose(x2, x2_ref, atol=2e-2, rtol=2e-2)

    print("KERNEL_OK")
</pallas_src>

<mosaic_0001>
module attributes {stable_mosaic.version = 11 : i64} {
  func.func @_linear_kernel(%arg0: i32, %arg1: memref<8x2048xf32, #tpu.memory_space<vmem>>, %arg2: memref<2048x768xbf16, #tpu.memory_space<vmem>>, %arg3: memref<1x768xf32, #tpu.memory_space<vmem>>, %arg4: memref<8x768xf32, #tpu.memory_space<vmem>>) attributes {dimension_semantics = [#tpu.dimension_semantics<parallel>], iteration_bounds = array<i64: 1>, scalar_prefetch = 0 : i64, scratch_operands = 0 : i64, tpu.core_type = #tpu.core_type<tc>, window_params = [{transform_indices = @transform_0, window_bounds = array<i64: 8, 2048>}, {pipeline_mode = #tpu.pipeline_mode<synchronous>, transform_indices = @transform_1, window_bounds = array<i64: 2048, 768>}, {pipeline_mode = #tpu.pipeline_mode<synchronous>, transform_indices = @transform_2, window_bounds = array<i64: 1, 768>}, {transform_indices = @transform_3, window_bounds = array<i64: 8, 768>}]} {
    %c0 = arith.constant 0 : index
    %c0_0 = arith.constant 0 : index
    %0 = vector.load %arg1[%c0, %c0_0] : memref<8x2048xf32, #tpu.memory_space<vmem>>, vector<8x2048xf32>
    %1 = arith.truncf %0 : vector<8x2048xf32> to vector<8x2048xbf16>
    %c0_1 = arith.constant 0 : index
    %c0_2 = arith.constant 0 : index
    %2 = vector.load %arg2[%c0_1, %c0_2] : memref<2048x768xbf16, #tpu.memory_space<vmem>>, vector<2048x768xbf16>
    %cst = arith.constant dense<0.000000e+00> : vector<8x768xf32>
    %3 = tpu.matmul %1, %2, %cst {dimension_numbers = #tpu.dot_dimension_numbers<[1], [0], [0], [1], [0, 0, 1, 1], [], []>} : vector<8x2048xbf16>, vector<2048x768xbf16>, vector<8x768xf32> -> vector<8x768xf32>
    %c0_3 = arith.constant 0 : index
    %c0_4 = arith.constant 0 : index
    %4 = vector.load %arg3[%c0_3, %c0_4] : memref<1x768xf32, #tpu.memory_space<vmem>>, vector<1x768xf32>
    %5 = vector.broadcast %4 : vector<1x768xf32> to vector<8x768xf32>
    %6 = arith.addf %3, %5 : vector<8x768xf32>
    %c0_5 = arith.constant 0 : index
    %c0_6 = arith.constant 0 : index
    %7 = vector.load %arg4[%c0_5, %c0_6] : memref<8x768xf32, #tpu.memory_space<vmem>>, vector<8x768xf32>
    tpu.vector_store %arg4[%c0_5, %c0_6], %6 {strides = array<i32>} : memref<8x768xf32, #tpu.memory_space<vmem>>, vector<8x768xf32>,
    return
  }
  func.func @transform_0(%arg0: i32) -> (i32, i32) {
    %c0_i32 = arith.constant 0 : i32
    %c0_i32_0 = arith.constant 0 : i32
    return %arg0, %c0_i32 : i32, i32
  }
  func.func @transform_1(%arg0: i32) -> (i32, i32) {
    %c0_i32 = arith.constant 0 : i32
    %c0_i32_0 = arith.constant 0 : i32
    %c0_i32_1 = arith.constant 0 : i32
    return %c0_i32, %c0_i32_0 : i32, i32
  }
  func.func @transform_2(%arg0: i32) -> (i32, i32) {
    %c0_i32 = arith.constant 0 : i32
    %c0_i32_0 = arith.constant 0 : i32
    %c0_i32_1 = arith.constant 0 : i32
    return %c0_i32, %c0_i32_0 : i32, i32
  }
  func.func @transform_3(%arg0: i32) -> (i32, i32) {
    %c0_i32 = arith.constant 0 : i32
    %c0_i32_0 = arith.constant 0 : i32
    return %arg0, %c0_i32 : i32, i32
  }
}

</mosaic_0001>

<llo_original>
// kernel: m1501_head.1
$region0: #{m1501_head.1}
  #allocation0 [shape = 'u32[]', space=smem, size = 0x4, offset = 0x4, fixed_abs, tag = 'smem constant byte address 0x4 - core index']
  #allocation1 [shape = 'u32[72,128]{1,0:T(1,128)}', space=vmem, size = 0x9000, scoped, tag = 'internal scratch']
  %s0 = inlined_call_operand.vmem [shape: f32[8,2048], index: 0, kind: input, shape index: {}]
  %s1 = inlined_call_operand.hbm [shape: bf16[2048,768], index: 1, kind: input, shape index: {}]
  %s2 = inlined_call_operand.hbm [shape: f32[1,768], index: 2, kind: input, shape index: {}]
  %s3 = inlined_call_operand.vmem [shape: f32[8,768], index: 3, kind: output, shape index: {}]
  %s4 = sld [smem:[#allocation0]]
  $region30: #{m1501_head.1} parent=0
    _
  %s6 = ssub.s32 1, %s4
  %s7 = scalar_select 0, %s6, %s4
  $region1: #{m1501_head.1} parent=0
    #allocation2 [shape = 'u8[3145728]{0}', space=vmem, size = 0x300000, scoped, tag = 'input window, operand 1, single buffered']
    #allocation3 [shape = 's32[1]{0}', space=sflag, size = 0x4, scoped, tag = 'scoped memory for m1501_head.1']
    #allocation4 [shape = 'u8[3072]{0}', space=vmem, size = 0xc00, scoped, tag = 'input window, operand 2, single buffered']
    #allocation5 [shape = 's32[1]{0}', space=sflag, size = 0x4, scoped, tag = 'scoped memory for m1501_head.1']
    %8 = vsyncpa [#allocation3], 0
    %9 = vsyncpa [#allocation5], 0
    // Predicated region
    $region2: #{m1501_head.1} parent=1 // pred_check
      _
    $region3: #{m1501_head.1} parent=1 // pred_check_branch
      %11 = sbr.rel (0) target = $region5
    $region4: #{m1501_head.1} parent=1 // pred_region
      _
    $region5: #{m1501_head.1} parent=1 // pred_fallthru
      _
    // Predicated region
    $region6: #{m1501_head.1} parent=1 // pred_check
      _
    $region7: #{m1501_head.1} parent=1 // pred_check_branch
      %13 = sbr.rel (0) target = $region9
    $region8: #{m1501_head.1} parent=1 // pred_region
      %15 = vsyncadd [#allocation3], 0
      %s16 = sshll.u32 %s1, 4
      %s17 = int_to_ptr.hbm [resolvable:$true] %s16
      %s18 = sshll.u32 [#allocation2], 4
      %s19 = int_to_ptr.vmem [resolvable:$true] %s18
      %24 = dma.hbm_to_vmem [thread:$0]  %s17, 98304, %s19, [#allocation3], 384, 384, 24
    $region9: #{m1501_head.1} parent=1 // pred_fallthru
      _
    // Predicated region
    $region10: #{m1501_head.1} parent=1 // pred_check
      _
    $region11: #{m1501_head.1} parent=1 // pred_check_branch
      %26 = sbr.rel (0) target = $region13
    $region12: #{m1501_head.1} parent=1 // pred_region
      %28 = vsyncadd [#allocation5], 0
      %s30 = sshll.u32 %s2, 4
      %s31 = int_to_ptr.hbm [resolvable:$true] %s30
      %s32 = sshll.u32 [#allocation4], 4
      %s33 = int_to_ptr.vmem [resolvable:$true] %s32
      %35 = dma.hbm_to_vmem [thread:$0]  %s31, 96, %s33, [#allocation5]
    $region13: #{m1501_head.1} parent=1 // pred_fallthru
      _
    // Predicated region
    $region14: #{m1501_head.1} parent=1 // pred_check
      _
    $region15: #{m1501_head.1} parent=1 // pred_check_branch
      %37 = sbr.rel (0) target = $region17
    $region16: #{m1501_head.1} parent=1 // pred_region
      %39 = dma.done [#allocation3], 98304
    $region17: #{m1501_head.1} parent=1 // pred_fallthru
      _
    // Predicated region
    $region18: #{m1501_head.1} parent=1 // pred_check
      _
    $region19: #{m1501_head.1} parent=1 // pred_check_branch
      %41 = sbr.rel (0) target = $region21
    $region20: #{m1501_head.1} parent=1 // pred_region
      %43 = dma.done [#allocation5], 96
    $region21: #{m1501_head.1} parent=1 // pred_fallthru
      _
    %v44 = vld [vmem:[%s0] sm:$0xff]
    %v45 = vld [vmem:[%s0 + $0x8] sm:$0xff]
    %v46 = vld [vmem:[%s0 + $0x10] sm:$0xff]
    %v47 = vld [vmem:[%s0 + $0x18] sm:$0xff]
    %v48 = vld [vmem:[%s0 + $0x20] sm:$0xff]
    %v49 = vld [vmem:[%s0 + $0x28] sm:$0xff]
    %v50 = vld [vmem:[%s0 + $0x30] sm:$0xff]
    %v51 = vld [vmem:[%s0 + $0x38] sm:$0xff]
    %v52 = vld [vmem:[%s0 + $0x40] sm:$0xff]
    %v53 = vld [vmem:[%s0 + $0x48] sm:$0xff]
    %v54 = vld [vmem:[%s0 + $0x50] sm:$0xff]
    %v55 = vld [vmem:[%s0 + $0x58] sm:$0xff]
    %v56 = vld [vmem:[%s0 + $0x60] sm:$0xff]
    %v57 = vld [vmem:[%s0 + $0x68] sm:$0xff]
    %v58 = vld [vmem:[%s0 + $0x70] sm:$0xff]
    %v59 = vld [vmem:[%s0 + $0x78] sm:$0xff]
    %v60 = vpack.c.bf16 %v44, %v44
    %v61 = vpack.c.bf16 %v45, %v45
    %v62 = vpack.c.bf16 %v46, %v46
    %v63 = vpack.c.bf16 %v47, %v47
    %v64 = vpack.c.bf16 %v48, %v48
    %v65 = vpack.c.bf16 %v49, %v49
    %v66 = vpack.c.bf16 %v50, %v50
    %v67 = vpack.c.bf16 %v51, %v51
    %v68 = vpack.c.bf16 %v52, %v52
    %v69 = vpack.c.bf16 %v53, %v53
    %v70 = vpack.c.bf16 %v54, %v54
    %v71 = vpack.c.bf16 %v55, %v55
    %v72 = vpack.c.bf16 %v56, %v56
    %v73 = vpack.c.bf16 %v57, %v57
    %v74 = vpack.c.bf16 %v58, %v58
    %v75 = vpack.c.bf16 %v59, %v59
    %v76 = vld [vmem:[#allocation2] sm:$0xff]
    %v77 = vld [vmem:[#allocation2 + $0x8] sm:$0xff]
    %v78 = vld [vmem:[#allocation2 + $0x10] sm:$0xff]
    %v79 = vld [vmem:[#allocation2 + $0x18] sm:$0xff]
    %v80 = vld [vmem:[#allocation2 + $0x20] sm:$0xff]
    %v81 = vld [vmem:[#allocation2 + $0x28] sm:$0xff]
    %v82 = vld [vmem:[#allocation2 + $0x30] sm:$0xff]
    %v83 = vld [vmem:[#allocation2 + $0x38] sm:$0xff]
    %v84 = vld [vmem:[#allocation2 + $0x40] sm:$0xff]
    %v85 = vld [vmem:[#allocation2 + $0x48] sm:$0xff]
    %v86 = vld [vmem:[#allocation2 + $0x50] sm:$0xff]
    %v87 = vld [vmem:[#allocation2 + $0x58] sm:$0xff]
    %v88 = vld [vmem:[#allocation2 + $0x60] sm:$0xff]
    %v89 = vld [vmem:[#allocation2 + $0x68] sm:$0xff]
    %v90 = vld [vmem:[#allocation2 + $0x70] sm:$0xff]
    %v91 = vld [vmem:[#allocation2 + $0x78] sm:$0xff]
    %v92 = vld [vmem:[#allocation2 + $0x80] sm:$0xff]
    %v93 = vld [vmem:[#allocation2 + $0x88] sm:$0xff]
    %v94 = vld [vmem:[#allocation2 + $0x90] sm:$0xff]
    %v95 = vld [vmem:[#allocation2 + $0x98] sm:$0xff]
    %v96 = vld [vmem:[#allocation2 + $0xa0] sm:$0xff]
    %v97 = vld [vmem:[#allocation2 + $0xa8] sm:$0xff]
    %v98 = vld [vmem:[#allocation2 + $0xb0] sm:$0xff]
    %v99 = vld [vmem:[#allocation2 + $0xb8] sm:$0xff]
    %v100 = vld [vmem:[#allocation2 + $0xc0] sm:$0xff]
    %v101 = vld [vmem:[#allocation2 + $0xc8] sm:$0xff]
    %v102 = vld [vmem:[#allocation2 + $0xd0] sm:$0xff]
    %v103 = vld [vmem:[#allocation2 + $0xd8] sm:$0xff]
    %v104 = vld [vmem:[#allocation2 + $0xe0] sm:$0xff]
    %v105 = vld [vmem:[#allocation2 + $0xe8] sm:$0xff]
    %v106 = vld [vmem:[#allocation2 + $0xf0] sm:$0xff]
    %v107 = vld [vmem:[#allocation2 + $0xf8] sm:$0xff]
    %v108 = vld [vmem:[#allocation2 + $0x100] sm:$0xff]
    %v109 = vld [vmem:[#allocation2 + $0x108] sm:$0xff]
    %v110 = vld [vmem:[#allocation2 + $0x110] sm:$0xff]
    %v111 = vld [vmem:[#allocation2 + $0x118] sm:$0xff]
    %v112 = vld [vmem:[#allocation2 + $0x120] sm:$0xff]
    %v113 = vld [vmem:[#allocation2 + $0x128] sm:$0xff]
    %v114 = vld [vmem:[#allocation2 + $0x130] sm:$0xff]
    %v115 = vld [vmem:[#allocation2 + $0x138] sm:$0xff]
    %v116 = vld [vmem:[#allocation2 + $0x140] sm:$0xff]
    %v117 = vld [vmem:[#allocation2 + $0x148] sm:$0xff]
    %v118 = vld [vmem:[#allocation2 + $0x150] sm:$0xff]
    %v119 = vld [vmem:[#allocation2 + $0x158] sm:$0xff]
    %v120 = vld [vmem:[#allocation2 + $0x160] sm:$0xff]
    %v121 = vld [vmem:[#allocation2 + $0x168] sm:$0xff]
    %v122 = vld [vmem:[#allocation2 + $0x170] sm:$0xff]
    %v123 = vld [vmem:[#allocation2 + $0x178] sm:$0xff]
    %v124 = vld [vmem:[#allocation2 + $0x180] sm:$0xff]
    %v125 = vld [vmem:[#allocation2 + $0x188] sm:$0xff]
    %v126 = vld [vmem:[#allocation2 + $0x190] sm:$0xff]
    %v127 = vld [vmem:[#allocation2 + $0x198] sm:$0xff]
    %v128 = vld [vmem:[#allocation2 + $0x1a0] sm:$0xff]
    %v129 = vld [vmem:[#allocation2 + $0x1a8] sm:$0xff]
    %v130 = vld [vmem:[#allocation2 + $0x1b0] sm:$0xff]
    %v131 = vld [vmem:[#allocation2 + $0x1b8] sm:$0xff]
    %v132 = vld [vmem:[#allocation2 + $0x1c0] sm:$0xff]
    %v133 = vld [vmem:[#allocation2 + $0x1c8] sm:$0xff]
    %v134 = vld [vmem:[#allocation2 + $0x1d0] sm:$0xff]
    %v135 = vld [vmem:[#allocation2 + $0x1d8] sm:$0xff]
    %v136 = vld [vmem:[#allocation2 + $0x1e0] sm:$0xff]
    %v137 = vld [vmem:[#allocation2 + $0x1e8] sm:$0xff]
    %v138 = vld [vmem:[#allocation2 + $0x1f0] sm:$0xff]
    %v139 = vld [vmem:[#allocation2 + $0x1f8] sm:$0xff]
    %v140 = vld [vmem:[#allocation2 + $0x200] sm:$0xff]
    %v141 = vld [vmem:[#allocation2 + $0x208] sm:$0xff]
    %v142 = vld [vmem:[#allocation2 + $0x210] sm:$0xff]
    %v143 = vld [vmem:[#allocation2 + $0x218] sm:$0xff]
    %v144 = vld [vmem:[#allocation2 + $0x220] sm:$0xff]
    %v145 = vld [vmem:[#allocation2 + $0x228] sm:$0xff]
    %v146 = vld [vmem:[#allocation2 + $0x230] sm:$0xff]
    %v147 = vld [vmem:[#allocation2 + $0x238] sm:$0xff]
    %v148 = vld [vmem:[#allocation2 + $0x240] sm:$0xff]
    %v149 = vld [vmem:[#allocation2 + $0x248] sm:$0xff]
    %v150 = vld [vmem:[#allocation2 + $0x250] sm:$0xff]
    %v151 = vld [vmem:[#allocation2 + $0x258] sm:$0xff]
    %v152 = vld [vmem:[#allocation2 + $0x260] sm:$0xff]
    %v153 = vld [vmem:[#allocation2 + $0x268] sm:$0xff]
    %v154 = vld [vmem:[#allocation2 + $0x270] sm:$0xff]
    %v155 = vld [vmem:[#allocation2 + $0x278] sm:$0xff]
    %v156 = vld [vmem:[#allocation2 + $0x280] sm:$0xff]
    %v157 = vld [vmem:[#allocation2 + $0x288] sm:$0xff]
    %v158 = vld [vmem:[#allocation2 + $0x290] sm:$0xff]
    %v159 = vld [vmem:[#allocation2 + $0x298] sm:$0xff]
    %v160 = vld [vmem:[#allocation2 + $0x2a0] sm:$0xff]
    %v161 = vld [vmem:[#allocation2 + $0x2a8] sm:$0xff]
    %v162 = vld [vmem:[#allocation2 + $0x2b0] sm:$0xff]
    %v163 = vld [vmem:[#allocation2 + $0x2b8] sm:$0xff]
    %v164 = vld [vmem:[#allocation2 + $0x2c0] sm:$0xff]
    %v165 = vld [vmem:[#allocation2 + $0x2c8] sm:$0xff]
    %v166 = vld [vmem:[#allocation2 + $0x2d0] sm:$0xff]
    %v167 = vld [vmem:[#allocation2 + $0x2d8] sm:$0xff]
    %v168 = vld [vmem:[#allocation2 + $0x2e0] sm:$0xff]
    %v169 = vld [vmem:[#allocation2 + $0x2e8] sm:$0xff]
    %v170 = vld [vmem:[#allocation2 + $0x2f0] sm:$0xff]
    %v171 = vld [vmem:[#allocation2 + $0x2f8] sm:$0xff]
    %v172 = vld [vmem:[#allocation2 + $0x300] sm:$0xff]
    %v173 = vld [vmem:[#allocation2 + $0x308] sm:$0xff]
    %v174 = vld [vmem:[#allocation2 + $0x310] sm:$0xff]
    %v175 = vld [vmem:[#allocation2 + $0x318] sm:$0xff]
    %v176 = vld [vmem:[#allocation2 + $0x320] sm:$0xff]
    %v177 = vld [vmem:[#allocation2 + $0x328] sm:$0xff]
    %v178 = vld [vmem:[#allocation2 + $0x330] sm:$0xff]
    %v179 = vld [vmem:[#allocation2 + $0x338] sm:$0xff]
    %v180 = vld [vmem:[#allocation2 + $0x340] sm:$0xff]
    %v181 = vld [vmem:[#allocation2 + $0x348] sm:$0xff]
    %v182 = vld [vmem:[#allocation2 + $0x350] sm:$0xff]
    %v183 = vld [vmem:[#allocation2 + $0x358] sm:$0xff]
    %v184 = vld [vmem:[#allocation2 + $0x360] sm:$0xff]
    %v185 = vld [vmem:[#allocation2 + $0x368] sm:$0xff]
    %v186 = vld [vmem:[#allocation2 + $0x370] sm:$0xff]
    %v187 = vld [vmem:[#allocation2 + $0x378] sm:$0xff]
    %v188 = vld [vmem:[#allocation2 + $0x380] sm:$0xff]
    %v189 = vld [vmem:[#allocation2 + $0x388] sm:$0xff]
    %v190 = vld [vmem:[#allocation2 + $0x390] sm:$0xff]
    %v191 = vld [vmem:[#allocation2 + $0x398] sm:$0xff]
    %v192 = vld [vmem:[#allocation2 + $0x3a0] sm:$0xff]
    %v193 = vld [vmem:[#allocation2 + $0x3a8] sm:$0xff]
    %v194 = vld [vmem:[#allocation2 + $0x3b0] sm:$0xff]
    %v195 = vld [vmem:[#allocation2 + $0x3b8] sm:$0xff]
    %v196 = vld [vmem:[#allocation2 + $0x3c0] sm:$0xff]
    %v197 = vld [vmem:[#allocation2 + $0x3c8] sm:$0xff]
    %v198 = vld [vmem:[#allocation2 + $0x3d0] sm:$0xff]
    %v199 = vld [vmem:[#allocation2 + $0x3d8] sm:$0xff]
    %v200 = vld [vmem:[#allocation2 + $0x3e0] sm:$0xff]
    %v201 = vld [vmem:[#allocation2 + $0x3e8] sm:$0xff]
    %v202 = vld [vmem:[#allocation2 + $0x3f0] sm:$0xff]
    %v203 = vld [vmem:[#allocation2 + $0x3f8] sm:$0xff]
    %v204 = vld [vmem:[#allocation2 + $0x400] sm:$0xff]
    %v205 = vld [vmem:[#allocation2 + $0x408] sm:$0xff]
    %v206 = vld [vmem:[#allocation2 + $0x410] sm:$0xff]
    %v207 = vld [vmem:[#allocation2 + $0x418] sm:$0xff]
    %v208 = vld [vmem:[#allocation2 + $0x420] sm:$0xff]
    %v209 = vld [vmem:[#allocation2 + $0x428] sm:$0xff]
    %v210 = vld [vmem:[#allocation2 + $0x430] sm:$0xff]
    %v211 = vld [vmem:[#allocation2 + $0x438] sm:$0xff]
    %v212 = vld [vmem:[#allocation2 + $0x440] sm:$0xff]
    %v213 = vld [vmem:[#allocation2 + $0x448] sm:$0xff]
    %v214 = vld [vmem:[#allocation2 + $0x450] sm:$0xff]
    %v215 = vld [vmem:[#allocation2 + $0x458] sm:$0xff]
    %v216 = vld [vmem:[#allocation2 + $0x460] sm:$0xff]
    %v217 = vld [vmem:[#allocation2 + $0x468] sm:$0xff]
    %v218 = vld [vmem:[#allocation2 + $0x470] sm:$0xff]
    %v219 = vld [vmem:[#allocation2 + $0x478] sm:$0xff]
    %v220 = vld [vmem:[#allocation2 + $0x480] sm:$0xff]
    %v221 = vld [vmem:[#allocation2 + $0x488] sm:$0xff]
    %v222 = vld [vmem:[#allocation2 + $0x490] sm:$0xff]
    %v223 = vld [vmem:[#allocation2 + $0x498] sm:$0xff]
    %v224 = vld [vmem:[#allocation2 + $0x4a0] sm:$0xff]
    %v225 = vld [vmem:[#allocation2 + $0x4a8] sm:$0xff]
    %v226 = vld [vmem:[#allocation2 + $0x4b0] sm:$0xff]
    %v227 = vld [vmem:[#allocation2 + $0x4b8] sm:$0xff]
    %v228 = vld [vmem:[#allocation2 + $0x4c0] sm:$0xff]
    %v229 = vld [vmem:[#allocation2 + $0x4c8] sm:$0xff]
    %v230 = vld [vmem:[#allocation2 + $0x4d0] sm:$0xff]
    %v231 = vld [vmem:[#allocation2 + $0x4d8] sm:$0xff]
    %v232 = vld [vmem:[#allocation2 + $0x4e0] sm:$0xff]
    %v233 = vld [vmem:[#allocation2 + $0x4e8] sm:$0xff]
    %v234 = vld [vmem:[#allocation2 + $0x4f0] sm:$0xff]
    %v235 = vld [vmem:[#allocation2 + $0x4f8] sm:$0xff]
    %v236 = vld [vmem:[#allocation2 + $0x500] sm:$0xff]
    %v237 = vld [vmem:[#allocation2 + $0x508] sm:$0xff]
    %v238 = vld [vmem:[#allocation2 + $0x510] sm:$0xff]
    %v239 = vld [vmem:[#allocation2 + $0x518] sm:$0xff]
    %v240 = vld [vmem:[#allocation2 + $0x520] sm:$0xff]
    %v241 = vld [vmem:[#allocation2 + $0x528] sm:$0xff]
    %v242 = vld [vmem:[#allocation2 + $0x530] sm:$0xff]
    %v243 = vld [vmem:[#allocation2 + $0x538] sm:$0xff]
    %v244 = vld [vmem:[#allocation2 + $0x540] sm:$0xff]
    %v245 = vld [vmem:[#allocation2 + $0x548] sm:$0xff]
    %v246 = vld [vmem:[#allocation2 + $0x550] sm:$0xff]
    %v247 = vld [vmem:[#allocation2 + $0x558] sm:$0xff]
    %v248 = vld [vmem:[#allocation2 + $0x560] sm:$0xff]
    %v249 = vld [vmem:[#allocation2 + $0x568] sm:$0xff]
    %v250 = vld [vmem:[#allocation2 + $0x570] sm:$0xff]
    %v251 = vld [vmem:[#allocation2 + $0x578] sm:$0xff]
    %v252 = vld [vmem:[#allocation2 + $0x580] sm:$0xff]
    %v253 = vld [vmem:[#allocation2 + $0x588] sm:$0xff]
    %v254 = vld [vmem:[#allocation2 + $0x590] sm:$0xff]
    %v255 = vld [vmem:[#allocation2 + $0x598] sm:$0xff]
    %v256 = vld [vmem:[#allocation2 + $0x5a0] sm:$0xff]
    %v257 = vld [vmem:[#allocation2 + $0x5a8] sm:$0xff]
    %v258 = vld [vmem:[#allocation2 + $0x5b0] sm:$0xff]
    %v259 = vld [vmem:[#allocation2 + $0x5b8] sm:$0xff]
    %v260 = vld [vmem:[#allocation2 + $0x5c0] sm:$0xff]
    %v261 = vld [vmem:[#allocation2 + $0x5c8] sm:$0xff]
    %v262 = vld [vmem:[#allocation2 + $0x5d0] sm:$0xff]
    %v263 = vld [vmem:[#allocation2 + $0x5d8] sm:$0xff]
    %v264 = vld [vmem:[#allocation2 + $0x5e0] sm:$0xff]
    %v265 = vld [vmem:[#allocation2 + $0x5e8] sm:$0xff]
    %v266 = vld [vmem:[#allocation2 + $0x5f0] sm:$0xff]
    %v267 = vld [vmem:[#allocation2 + $0x5f8] sm:$0xff]
    %v268 = vld [vmem:[#allocation2 + $0x600] sm:$0xff]
    %v269 = vld [vmem:[#allocation2 + $0x608] sm:$0xff]
    %v270 = vld [vmem:[#allocation2 + $0x610] sm:$0xff]
    %v271 = vld [vmem:[#allocation2 + $0x618] sm:$0xff]
    %v272 = vld [vmem:[#allocation2 + $0x620] sm:$0xff]
    %v273 = vld [vmem:[#allocation2 + $0x628] sm:$0xff]
    %v274 = vld [vmem:[#allocation2 + $0x630] sm:$0xff]
    %v275 = vld [vmem:[#allocation2 + $0x638] sm:$0xff]
    %v276 = vld [vmem:[#allocation2 + $0x640] sm:$0xff]
    %v277 = vld [vmem:[#allocation2 + $0x648] sm:$0xff]
    %v278 = vld [vmem:[#allocation2 + $0x650] sm:$0xff]
    %v279 = vld [vmem:[#allocation2 + $0x658] sm:$0xff]
    %v280 = vld [vmem:[#allocation2 + $0x660] sm:$0xff]
    %v281 = vld [vmem:[#allocation2 + $0x668] sm:$0xff]
    %v282 = vld [vmem:[#allocation2 + $0x670] sm:$0xff]
    %v283 = vld [vmem:[#allocation2 + $0x678] sm:$0xff]
    %v284 = vld [vmem:[#allocation2 + $0x680] sm:$0xff]
    %v285 = vld [vmem:[#allocation2 + $0x688] sm:$0xff]
    %v286 = vld [vmem:[#allocation2 + $0x690] sm:$0xff]
    %v287 = vld [vmem:[#allocation2 + $0x698] sm:$0xff]
    %v288 = vld [vmem:[#allocation2 + $0x6a0] sm:$0xff]
    %v289 = vld [vmem:[#allocation2 + $0x6a8] sm:$0xff]
    %v290 = vld [vmem:[#allocation2 + $0x6b0] sm:$0xff]
    %v291 = vld [vmem:[#allocation2 + $0x6b8] sm:$0xff]
    %v292 = vld [vmem:[#allocation2 + $0x6c0] sm:$0xff]
    %v293 = vld [vmem:[#allocation2 + $0x6c8] sm:$0xff]
    %v294 = vld [vmem:[#allocation2 + $0x6d0] sm:$0xff]
    %v295 = vld [vmem:[#allocation2 + $0x6d8] sm:$0xff]
    %v296 = vld [vmem:[#allocation2 + $0x6e0] sm:$0xff]
    %v297 = vld [vmem:[#allocation2 + $0x6e8] sm:$0xff]
    %v298 = vld [vmem:[#allocation2 + $0x6f0] sm:$0xff]
    %v299 = vld [vmem:[#allocation2 + $0x6f8] sm:$0xff]
    %v300 = vld [vmem:[#allocation2 + $0x700] sm:$0xff]
    %v301 = vld [vmem:[#allocation2 + $0x708] sm:$0xff]
    %v302 = vld [vmem:[#allocation2 + $0x710] sm:$0xff]
    %v303 = vld [vmem:[#allocation2 + $0x718] sm:$0xff]
    %v304 = vld [vmem:[#allocation2 + $0x720] sm:$0xff]
    %v305 = vld [vmem:[#allocation2 + $0x728] sm:$0xff]
    %v306 = vld [vmem:[#allocation2 + $0x730] sm:$0xff]
    %v307 = vld [vmem:[#allocation2 + $0x738] sm:$0xff]
    %v308 = vld [vmem:[#allocation2 + $0x740] sm:$0xff]
    %v309 = vld [vmem:[#allocation2 + $0x748] sm:$0xff]
    %v310 = vld [vmem:[#allocation2 + $0x750] sm:$0xff]
    %v311 = vld [vmem:[#allocation2 + $0x758] sm:$0xff]
    %v312 = vld [vmem:[#allocation2 + $0x760] sm:$0xff]
    %v313 = vld [vmem:[#allocation2 + $0x768] sm:$0xff]
    %v314 = vld [vmem:[#allocation2 + $0x770] sm:$0xff]
    %v315 = vld [vmem:[#allocation2 + $0x778] sm:$0xff]
    %v316 = vld [vmem:[#allocation2 + $0x780] sm:$0xff]
    %v317 = vld [vmem:[#allocation2 + $0x788] sm:$0xff]
    %v318 = vld [vmem:[#allocation2 + $0x790] sm:$0xff]
    %v319 = vld [vmem:[#allocation2 + $0x798] sm:$0xff]
    %v320 = vld [vmem:[#allocation2 + $0x7a0] sm:$0xff]
    %v321 = vld [vmem:[#allocation2 + $0x7a8] sm:$0xff]
    %v322 = vld [vmem:[#allocation2 + $0x7b0] sm:$0xff]
    %v323 = vld [vmem:[#allocation2 + $0x7b8] sm:$0xff]
    %v324 = vld [vmem:[#allocation2 + $0x7c0] sm:$0xff]
    %v325 = vld [vmem:[#allocation2 + $0x7c8] sm:$0xff]
    %v326 = vld [vmem:[#allocation2 + $0x7d0] sm:$0xff]
    %v327 = vld [vmem:[#allocation2 + $0x7d8] sm:$0xff]
    %v328 = vld [vmem:[#allocation2 + $0x7e0] sm:$0xff]
    %v329 = vld [vmem:[#allocation2 + $0x7e8] sm:$0xff]
    %v330 = vld [vmem:[#allocation2 + $0x7f0] sm:$0xff]
    %v331 = vld [vmem:[#allocation2 + $0x7f8] sm:$0xff]
    %v332 = vld [vmem:[#allocation2 + $0x800] sm:$0xff]
    %v333 = vld [vmem:[#allocation2 + $0x808] sm:$0xff]
    %v334 = vld [vmem:[#allocation2 + $0x810] sm:$0xff]
    %v335 = vld [vmem:[#allocation2 + $0x818] sm:$0xff]
    %v336 = vld [vmem:[#allocation2 + $0x820] sm:$0xff]
    %v337 = vld [vmem:[#allocation2 + $0x828] sm:$0xff]
    %v338 = vld [vmem:[#allocation2 + $0x830] sm:$0xff]
    %v339 = vld [vmem:[#allocation2 + $0x838] sm:$0xff]
    %v340 = vld [vmem:[#allocation2 + $0x840] sm:$0xff]
    %v341 = vld [vmem:[#allocation2 + $0x848] sm:$0xff]
    %v342 = vld [vmem:[#allocation2 + $0x850] sm:$0xff]
    %v343 = vld [vmem:[#allocation2 + $0x858] sm:$0xff]
    %v344 = vld [vmem:[#allocation2 + $0x860] sm:$0xff]
    %v345 = vld [vmem:[#allocation2 + $0x868] sm:$0xff]
    %v346 = vld [vmem:[#allocation2 + $0x870] sm:$0xff]
    %v347 = vld [vmem:[#allocation2 + $0x878] sm:$0xff]
    %v348 = vld [vmem:[#allocation2 + $0x880] sm:$0xff]
    %v349 = vld [vmem:[#allocation2 + $0x888] sm:$0xff]
    %v350 = vld [vmem:[#allocation2 + $0x890] sm:$0xff]
    %v351 = vld [vmem:[#allocation2 + $0x898] sm:$0xff]
    %v352 = vld [vmem:[#allocation2 + $0x8a0] sm:$0xff]
    %v353 = vld [vmem:[#allocation2 + $0x8a8] sm:$0xff]
    %v354 = vld [vmem:[#allocation2 + $0x8b0] sm:$0xff]
    %v355 = vld [vmem:[#allocation2 + $0x8b8] sm:$0xff]
    %v356 = vld [vmem:[#allocation2 + $0x8c0] sm:$0xff]
    %v357 = vld [vmem:[#allocation2 + $0x8c8] sm:$0xff]
    %v358 = vld [vmem:[#allocation2 + $0x8d0] sm:$0xff]
    %v359 = vld [vmem:[#allocation2 + $0x8d8] sm:$0xff]
    %v360 = vld [vmem:[#allocation2 + $0x8e0] sm:$0xff]
    %v361 = vld [vmem:[#allocation2 + $0x8e8] sm:$0xff]
    %v362 = vld [vmem:[#allocation2 + $0x8f0] sm:$0xff]
    %v363 = vld [vmem:[#allocation2 + $0x8f8] sm:$0xff]
    %v364 = vld [vmem:[#allocation2 + $0x900] sm:$0xff]
    %v365 = vld [vmem:[#allocation2 + $0x908] sm:$0xff]
    %v366 = vld [vmem:[#allocation2 + $0x910] sm:$0xff]
    %v367 = vld [vmem:[#allocation2 + $0x918] sm:$0xff]
    %v368 = vld [vmem:[#allocation2 + $0x920] sm:$0xff]
    %v369 = vld [vmem:[#allocation2 + $0x928] sm:$0xff]
    %v370 = vld [vmem:[#allocation2 + $0x930] sm:$0xff]
    %v371 = vld [vmem:[#allocation2 + $0x938] sm:$0xff]
    %v372 = vld [vmem:[#allocation2 + $0x940] sm:$0xff]
    %v373 = vld [vmem:[#allocation2 + $0x948] sm:$0xff]
    %v374 = vld [vmem:[#allocation2 + $0x950] sm:$0xff]
    %v375 = vld [vmem:[#allocation2 + $0x958] sm:$0xff]
    %v376 = vld [vmem:[#allocation2 + $0x960] sm:$0xff]
    %v377 = vld [vmem:[#allocation2 + $0x968] sm:$0xff]
    %v378 = vld [vmem:[#allocation2 + $0x970] sm:$0xff]
    %v379 = vld [vmem:[#allocation2 + $0x978] sm:$0xff]
    %v380 = vld [vmem:[#allocation2 + $0x980] sm:$0xff]
    %v381 = vld [vmem:[#allocation2 + $0x988] sm:$0xff]
    %v382 = vld [vmem:[#allocation2 + $0x990] sm:$0xff]
    %v383 = vld [vmem:[#allocation2 + $0x998] sm:$0xff]
    %v384 = vld [vmem:[#allocation2 + $0x9a0] sm:$0xff]
    %v385 = vld [vmem:[#allocation2 + $0x9a8] sm:$0xff]
    %v386 = vld [vmem:[#allocation2 + $0x9b0] sm:$0xff]
    %v387 = vld [vmem:[#allocation2 + $0x9b8] sm:$0xff]
    %v388 = vld [vmem:[#allocation2 + $0x9c0] sm:$0xff]
    %v389 = vld [vmem:[#allocation2 + $0x9c8] sm:$0xff]
    %v390 = vld [vmem:[#allocation2 + $0x9d0] sm:$0xff]
    %v391 = vld [vmem:[#allocation2 + $0x9d8] sm:$0xff]
    %v392 = vld [vmem:[#allocation2 + $0x9e0] sm:$0xff]
    %v393 = vld [vmem:[#allocation2 + $0x9e8] sm:$0xff]
    %v394 = vld [vmem:[#allocation2 + $0x9f0] sm:$0xff]
    %v395 = vld [vmem:[#allocation2 + $0x9f8] sm:$0xff]
    %v396 = vld [vmem:[#allocation2 + $0xa00] sm:$0xff]
    %v397 = vld [vmem:[#allocation2 + $0xa08] sm:$0xff]
    %v398 = vld [vmem:[#allocation2 + $0xa10] sm:$0xff]
    %v399 = vld [vmem:[#allocation2 + $0xa18] sm:$0xff]
    %v400 = vld [vmem:[#allocation2 + $0xa20] sm:$0xff]
    %v401 = vld [vmem:[#allocation2 + $0xa28] sm:$0xff]
    %v402 = vld [vmem:[#allocation2 + $0xa30] sm:$0xff]
    %v403 = vld [vmem:[#allocation2 + $0xa38] sm:$0xff]
    %v404 = vld [vmem:[#allocation2 + $0xa40] sm:$0xff]
    %v405 = vld [vmem:[#allocation2 + $0xa48] sm:$0xff]
    %v406 = vld [vmem:[#allocation2 + $0xa50] sm:$0xff]
    %v407 = vld [vmem:[#allocation2 + $0xa58] sm:$0xff]
    %v408 = vld [vmem:[#allocation2 + $0xa60] sm:$0xff]
    %v409 = vld [vmem:[#allocation2 + $0xa68] sm:$0xff]
    %v410 = vld [vmem:[#allocation2 + $0xa70] sm:$0xff]
    %v411 = vld [vmem:[#allocation2 + $0xa78] sm:$0xff]
    %v412 = vld [vmem:[#allocation2 + $0xa80] sm:$0xff]
    %v413 = vld [vmem:[#allocation2 + $0xa88] sm:$0xff]
    %v414 = vld [vmem:[#allocation2 + $0xa90] sm:$0xff]
    %v415 = vld [vmem:[#allocation2 + $0xa98] sm:$0xff]
    %v416 = vld [vmem:[#allocation2 + $0xaa0] sm:$0xff]
    %v417 = vld [vmem:[#allocation2 + $0xaa8] sm:$0xff]
    %v418 = vld [vmem:[#allocation2 + $0xab0] sm:$0xff]
    %v419 = vld [vmem:[#allocation2 + $0xab8] sm:$0xff]
    %v420 = vld [vmem:[#allocation2 + $0xac0] sm:$0xff]
    %v421 = vld [vmem:[#allocation2 + $0xac8] sm:$0xff]
    %v422 = vld [vmem:[#allocation2 + $0xad0] sm:$0xff]
    %v423 = vld [vmem:[#allocation2 + $0xad8] sm:$0xff]
    %v424 = vld [vmem:[#allocation2 + $0xae0] sm:$0xff]
    %v425 = vld [vmem:[#allocation2 + $0xae8] sm:$0xff]
    %v426 = vld [vmem:[#allocation2 + $0xaf0] sm:$0xff]
    %v427 = vld [vmem:[#allocation2 + $0xaf8] sm:$0xff]
    %v428 = vld [vmem:[#allocation2 + $0xb00] sm:$0xff]
    %v429 = vld [vmem:[#allocation2 + $0xb08] sm:$0xff]
    %v430 = vld [vmem:[#allocation2 + $0xb10] sm:$0xff]
    %v431 = vld [vmem:[#allocation2 + $0xb18] sm:$0xff]
    %v432 = vld [vmem:[#allocation2 + $0xb20] sm:$0xff]
    %v433 = vld [vmem:[#allocation2 + $0xb28] sm:$0xff]
    %v434 = vld [vmem:[#allocation2 + $0xb30] sm:$0xff]
    %v435 = vld [vmem:[#allocation2 + $0xb38] sm:$0xff]
    %v436 = vld [vmem:[#allocation2 + $0xb40] sm:$0xff]
    %v437 = vld [vmem:[#allocation2 + $0xb48] sm:$0xff]
    %v438 = vld [vmem:[#allocation2 + $0xb50] sm:$0xff]
    %v439 = vld [vmem:[#allocation2 + $0xb58] sm:$0xff]
    %v440 = vld [vmem:[#allocation2 + $0xb60] sm:$0xff]
    %v441 = vld [vmem:[#allocation2 + $0xb68] sm:$0xff]
    %v442 = vld [vmem:[#allocation2 + $0xb70] sm:$0xff]
    %v443 = vld [vmem:[#allocation2 + $0xb78] sm:$0xff]
    %v444 = vld [vmem:[#allocation2 + $0xb80] sm:$0xff]
    %v445 = vld [vmem:[#allocation2 + $0xb88] sm:$0xff]
    %v446 = vld [vmem:[#allocation2 + $0xb90] sm:$0xff]
    %v447 = vld [vmem:[#allocation2 + $0xb98] sm:$0xff]
    %v448 = vld [vmem:[#allocation2 + $0xba0] sm:$0xff]
    %v449 = vld [vmem:[#allocation2 + $0xba8] sm:$0xff]
    %v450 = vld [vmem:[#allocation2 + $0xbb0] sm:$0xff]
    %v451 = vld [vmem:[#allocation2 + $0xbb8] sm:$0xff]
    %v452 = vld [vmem:[#allocation2 + $0xbc0] sm:$0xff]
    %v453 = vld [vmem:[#allocation2 + $0xbc8] sm:$0xff]
    %v454 = vld [vmem:[#allocation2 + $0xbd0] sm:$0xff]
    %v455 = vld [vmem:[#allocation2 + $0xbd8] sm:$0xff]
    %v456 = vld [vmem:[#allocation2 + $0xbe0] sm:$0xff]
    %v457 = vld [vmem:[#allocation2 + $0xbe8] sm:$0xff]
    %v458 = vld [vmem:[#allocation2 + $0xbf0] sm:$0xff]
    %v459 = vld [vmem:[#allocation2 + $0xbf8] sm:$0xff]
    %v460 = vld [vmem:[#allocation2 + $0xc00] sm:$0xff]
    %v461 = vld [vmem:[#allocation2 + $0xc08] sm:$0xff]
    %v462 = vld [vmem:[#allocation2 + $0xc10] sm:$0xff]
    %v463 = vld [vmem:[#allocation2 + $0xc18] sm:$0xff]
    %v464 = vld [vmem:[#allocation2 + $0xc20] sm:$0xff]
    %v465 = vld [vmem:[#allocation2 + $0xc28] sm:$0xff]
    %v466 = vld [vmem:[#allocation2 + $0xc30] sm:$0xff]
    %v467 = vld [vmem:[#allocation2 + $0xc38] sm:$0xff]
    %v468 = vld [vmem:[#allocation2 + $0xc40] sm:$0xff]
    %v469 = vld [vmem:[#allocation2 + $0xc48] sm:$0xff]
    %v470 = vld [vmem:[#allocation2 + $0xc50] sm:$0xff]
    %v471 = vld [vmem:[#allocation2 + $0xc58] sm:$0xff]
    %v472 = vld [vmem:[#allocation2 + $0xc60] sm:$0xff]
    %v473 = vld [vmem:[#allocation2 + $0xc68] sm:$0xff]
    %v474 = vld [vmem:[#allocation2 + $0xc70] sm:$0xff]
    %v475 = vld [vmem:[#allocation2 + $0xc78] sm:$0xff]
    %v476 = vld [vmem:[#allocation2 + $0xc80] sm:$0xff]
    %v477 = vld [vmem:[#allocation2 + $0xc88] sm:$0xff]
    %v478 = vld [vmem:[#allocation2 + $0xc90] sm:$0xff]
    %v479 = vld [vmem:[#allocation2 + $0xc98] sm:$0xff]
    %v480 = vld [vmem:[#allocation2 + $0xca0] sm:$0xff]
    %v481 = vld [vmem:[#allocation2 + $0xca8] sm:$0xff]
    %v482 = vld [vmem:[#allocation2 + $0xcb0] sm:$0xff]
    %v483 = vld [vmem:[#allocation2 + $0xcb8] sm:$0xff]
    %v484 = vld [vmem:[#allocation2 + $0xcc0] sm:$0xff]
    %v485 = vld [vmem:[#allocation2 + $0xcc8] sm:$0xff]
    %v486 = vld [vmem:[#allocation2 + $0xcd0] sm:$0xff]
    %v487 = vld [vmem:[#allocation2 + $0xcd8] sm:$0xff]
    %v488 = vld [vmem:[#allocation2 + $0xce0] sm:$0xff]
    %v489 = vld [vmem:[#allocation2 + $0xce8] sm:$0xff]
    %v490 = vld [vmem:[#allocation2 + $0xcf0] sm:$0xff]
    %v491 = vld [vmem:[#allocation2 + $0xcf8] sm:$0xff]
    %v492 = vld [vmem:[#allocation2 + $0xd00] sm:$0xff]
    %v493 = vld [vmem:[#allocation2 + $0xd08] sm:$0xff]
    %v494 = vld [vmem:[#allocation2 + $0xd10] sm:$0xff]
    %v495 = vld [vmem:[#allocation2 + $0xd18] sm:$0xff]
    %v496 = vld [vmem:[#allocation2 + $0xd20] sm:$0xff]
    %v497 = vld [vmem:[#allocation2 + $0xd28] sm:$0xff]
    %v498 = vld [vmem:[#allocation2 + $0xd30] sm:$0xff]
    %v499 = vld [vmem:[#allocation2 + $0xd38] sm:$0xff]
    %v500 = vld [vmem:[#allocation2 + $0xd40] sm:$0xff]
    %v501 = vld [vmem:[#allocation2 + $0xd48] sm:$0xff]
    %v502 = vld [vmem:[#allocation2 + $0xd50] sm:$0xff]
    %v503 = vld [vmem:[#allocation2 + $0xd58] sm:$0xff]
    %v504 = vld [vmem:[#allocation2 + $0xd60] sm:$0xff]
    %v505 = vld [vmem:[#allocation2 + $0xd68] sm:$0xff]
    %v506 = vld [vmem:[#allocation2 + $0xd70] sm:$0xff]
    %v507 = vld [vmem:[#allocation2 + $0xd78] sm:$0xff]
    %v508 = vld [vmem:[#allocation2 + $0xd80] sm:$0xff]
    %v509 = vld [vmem:[#allocation2 + $0xd88] sm:$0xff]
    %v510 = vld [vmem:[#allocation2 + $0xd90] sm:$0xff]
    %v511 = vld [vmem:[#allocation2 + $0xd98] sm:$0xff]
    %v512 = vld [vmem:[#allocation2 + $0xda0] sm:$0xff]
    %v513 = vld [vmem:[#allocation2 + $0xda8] sm:$0xff]
    %v514 = vld [vmem:[#allocation2 + $0xdb0] sm:$0xff]
    %v515 = vld [vmem:[#allocation2 + $0xdb8] sm:$0xff]
    %v516 = vld [vmem:[#allocation2 + $0xdc0] sm:$0xff]
    %v517 = vld [vmem:[#allocation2 + $0xdc8] sm:$0xff]
    %v518 = vld [vmem:[#allocation2 + $0xdd0] sm:$0xff]
    %v519 = vld [vmem:[#allocation2 + $0xdd8] sm:$0xff]
    %v520 = vld [vmem:[#allocation2 + $0xde0] sm:$0xff]
    %v521 = vld [vmem:[#allocation2 + $0xde8] sm:$0xff]
    %v522 = vld [vmem:[#allocation2 + $0xdf0] sm:$0xff]
    %v523 = vld [vmem:[#allocation2 + $0xdf8] sm:$0xff]
    %v524 = vld [vmem:[#allocation2 + $0xe00] sm:$0xff]
    %v525 = vld [vmem:[#allocation2 + $0xe08] sm:$0xff]
    %v526 = vld [vmem:[#allocation2 + $0xe10] sm:$0xff]
    %v527 = vld [vmem:[#allocation2 + $0xe18] sm:$0xff]
    %v528 = vld [vmem:[#allocation2 + $0xe20] sm:$0xff]
    %v529 = vld [vmem:[#allocation2 + $0xe28] sm:$0xff]
    %v530 = vld [vmem:[#allocation2 + $0xe30] sm:$0xff]
    %v531 = vld [vmem:[#allocation2 + $0xe38] sm:$0xff]
    %v532 = vld [vmem:[#allocation2 + $0xe40] sm:$0xff]
    %v533 = vld [vmem:[#allocation2 + $0xe48] sm:$0xff]
    %v534 = vld [vmem:[#allocation2 + $0xe50] sm:$0xff]
    %v535 = vld [vmem:[#allocation2 + $0xe58] sm:$0xff]
    %v536 = vld [vmem:[#allocation2 + $0xe60] sm:$0xff]
    %v537 = vld [vmem:[#allocation2 + $0xe68] sm:$0xff]
    %v538 = vld [vmem:[#allocation2 + $0xe70] sm:$0xff]
    %v539 = vld [vmem:[#allocation2 + $0xe78] sm:$0xff]
    %v540 = vld [vmem:[#allocation2 + $0xe80] sm:$0xff]
    %v541 = vld [vmem:[#allocation2 + $0xe88] sm:$0xff]
    %v542 = vld [vmem:[#allocation2 + $0xe90] sm:$0xff]
    %v543 = vld [vmem:[#allocation2 + $0xe98] sm:$0xff]
    %v544 = vld [vmem:[#allocation2 + $0xea0] sm:$0xff]
    %v545 = vld [vmem:[#allocation2 + $0xea8] sm:$0xff]
    %v546 = vld [vmem:[#allocation2 + $0xeb0] sm:$0xff]
    %v547 = vld [vmem:[#allocation2 + $0xeb8] sm:$0xff]
    %v548 = vld [vmem:[#allocation2 + $0xec0] sm:$0xff]
    %v549 = vld [vmem:[#allocation2 + $0xec8] sm:$0xff]
    %v550 = vld [vmem:[#allocation2 + $0xed0] sm:$0xff]
    %v551 = vld [vmem:[#allocation2 + $0xed8] sm:$0xff]
    %v552 = vld [vmem:[#allocation2 + $0xee0] sm:$0xff]
    %v553 = vld [vmem:[#allocation2 + $0xee8] sm:$0xff]
    %v554 = vld [vmem:[#allocation2 + $0xef0] sm:$0xff]
    %v555 = vld [vmem:[#allocation2 + $0xef8] sm:$0xff]
    %v556 = vld [vmem:[#allocation2 + $0xf00] sm:$0xff]
    %v557 = vld [vmem:[#allocation2 + $0xf08] sm:$0xff]
    %v558 = vld [vmem:[#allocation2 + $0xf10] sm:$0xff]
    %v559 = vld [vmem:[#allocation2 + $0xf18] sm:$0xff]
    %v560 = vld [vmem:[#allocation2 + $0xf20] sm:$0xff]
    %v561 = vld [vmem:[#allocation2 + $0xf28] sm:$0xff]
    %v562 = vld [vmem:[#allocation2 + $0xf30] sm:$0xff]
    %v563 = vld [vmem:[#allocation2 + $0xf38] sm:$0xff]
    %v564 = vld [vmem:[#allocation2 + $0xf40] sm:$0xff]
    %v565 = vld [vmem:[#allocation2 + $0xf48] sm:$0xff]
    %v566 = vld [vmem:[#allocation2 + $0xf50] sm:$0xff]
    %v567 = vld [vmem:[#allocation2 + $0xf58] sm:$0xff]
    %v568 = vld [vmem:[#allocation2 + $0xf60] sm:$0xff]
    %v569 = vld [vmem:[#allocation2 + $0xf68] sm:$0xff]
    %v570 = vld [vmem:[#allocation2 + $0xf70] sm:$0xff]
    %v571 = vld [vmem:[#allocation2 + $0xf78] sm:$0xff]
    %v572 = vld [vmem:[#allocation2 + $0xf80] sm:$0xff]
    %v573 = vld [vmem:[#allocation2 + $0xf88] sm:$0xff]
    %v574 = vld [vmem:[#allocation2 + $0xf90] sm:$0xff]
    %v575 = vld [vmem:[#allocation2 + $0xf98] sm:$0xff]
    %v576 = vld [vmem:[#allocation2 + $0xfa0] sm:$0xff]
    %v577 = vld [vmem:[#allocation2 + $0xfa8] sm:$0xff]
    %v578 = vld [vmem:[#allocation2 + $0xfb0] sm:$0xff]
    %v579 = vld [vmem:[#allocation2 + $0xfb8] sm:$0xff]
    %v580 = vld [vmem:[#allocation2 + $0xfc0] sm:$0xff]
    %v581 = vld [vmem:[#allocation2 + $0xfc8] sm:$0xff]
    %v582 = vld [vmem:[#allocation2 + $0xfd0] sm:$0xff]
    %v583 = vld [vmem:[#allocation2 + $0xfd8] sm:$0xff]
    %v584 = vld [vmem:[#allocation2 + $0xfe0] sm:$0xff]
    %v585 = vld [vmem:[#allocation2 + $0xfe8] sm:$0xff]
    %v586 = vld [vmem:[#allocation2 + $0xff0] sm:$0xff]
    %v587 = vld [vmem:[#allocation2 + $0xff8] sm:$0xff]
    %v588 = vld [vmem:[#allocation2 + $0x1000] sm:$0xff]
    %v589 = vld [vmem:[#allocation2 + $0x1008] sm:$0xff]
    %v590 = vld [vmem:[#allocation2 + $0x1010] sm:$0xff]
    %v591 = vld [vmem:[#allocation2 + $0x1018] sm:$0xff]
    %v592 = vld [vmem:[#allocation2 + $0x1020] sm:$0xff]
    %v593 = vld [vmem:[#allocation2 + $0x1028] sm:$0xff]
    %v594 = vld [vmem:[#allocation2 + $0x1030] sm:$0xff]
    %v595 = vld [vmem:[#allocation2 + $0x1038] sm:$0xff]
    %v596 = vld [vmem:[#allocation2 + $0x1040] sm:$0xff]
    %v597 = vld [vmem:[#allocation2 + $0x1048] sm:$0xff]
    %v598 = vld [vmem:[#allocation2 + $0x1050] sm:$0xff]
    %v599 = vld [vmem:[#allocation2 + $0x1058] sm:$0xff]
    %v600 = vld [vmem:[#allocation2 + $0x1060] sm:$0xff]
    %v601 = vld [vmem:[#allocation2 + $0x1068] sm:$0xff]
    %v602 = vld [vmem:[#allocation2 + $0x1070] sm:$0xff]
    %v603 = vld [vmem:[#allocation2 + $0x1078] sm:$0xff]
    %v604 = vld [vmem:[#allocation2 + $0x1080] sm:$0xff]
    %v605 = vld [vmem:[#allocation2 + $0x1088] sm:$0xff]
    %v606 = vld [vmem:[#allocation2 + $0x1090] sm:$0xff]
    %v607 = vld [vmem:[#allocation2 + $0x1098] sm:$0xff]
    %v608 = vld [vmem:[#allocation2 + $0x10a0] sm:$0xff]
    %v609 = vld [vmem:[#allocation2 + $0x10a8] sm:$0xff]
    %v610 = vld [vmem:[#allocation2 + $0x10b0] sm:$0xff]
    %v611 = vld [vmem:[#allocation2 + $0x10b8] sm:$0xff]
    %v612 = vld [vmem:[#allocation2 + $0x10c0] sm:$0xff]
    %v613 = vld [vmem:[#allocation2 + $0x10c8] sm:$0xff]
    %v614 = vld [vmem:[#allocation2 + $0x10d0] sm:$0xff]
    %v615 = vld [vmem:[#allocation2 + $0x10d8] sm:$0xff]
    %v616 = vld [vmem:[#allocation2 + $0x10e0] sm:$0xff]
    %v617 = vld [vmem:[#allocation2 + $0x10e8] sm:$0xff]
    %v618 = vld [vmem:[#allocation2 + $0x10f0] sm:$0xff]
    %v619 = vld [vmem:[#allocation2 + $0x10f8] sm:$0xff]
    %v620 = vld [vmem:[#allocation2 + $0x1100] sm:$0xff]
    %v621 = vld [vmem:[#allocation2 + $0x1108] sm:$0xff]
    %v622 = vld [vmem:[#allocation2 + $0x1110] sm:$0xff]
    %v623 = vld [vmem:[#allocation2 + $0x1118] sm:$0xff]
    %v624 = vld [vmem:[#allocation2 + $0x1120] sm:$0xff]
    %v625 = vld [vmem:[#allocation2 + $0x1128] sm:$0xff]
    %v626 = vld [vmem:[#allocation2 + $0x1130] sm:$0xff]
    %v627 = vld [vmem:[#allocation2 + $0x1138] sm:$0xff]
    %v628 = vld [vmem:[#allocation2 + $0x1140] sm:$0xff]
    %v629 = vld [vmem:[#allocation2 + $0x1148] sm:$0xff]
    %v630 = vld [vmem:[#allocation2 + $0x1150] sm:$0xff]
    %v631 = vld [vmem:[#allocation2 + $0x1158] sm:$0xff]
    %v632 = vld [vmem:[#allocation2 + $0x1160] sm:$0xff]
    %v633 = vld [vmem:[#allocation2 + $0x1168] sm:$0xff]
    %v634 = vld [vmem:[#allocation2 + $0x1170] sm:$0xff]
    %v635 = vld [vmem:[#allocation2 + $0x1178] sm:$0xff]
    %v636 = vld [vmem:[#allocation2 + $0x1180] sm:$0xff]
    %v637 = vld [vmem:[#allocation2 + $0x1188] sm:$0xff]
    %v638 = vld [vmem:[#allocation2 + $0x1190] sm:$0xff]
    %v639 = vld [vmem:[#allocation2 + $0x1198] sm:$0xff]
    %v640 = vld [vmem:[#allocation2 + $0x11a0] sm:$0xff]
    %v641 = vld [vmem:[#allocation2 + $0x11a8] sm:$0xff]
    %v642 = vld [vmem:[#allocation2 + $0x11b0] sm:$0xff]
    %v643 = vld [vmem:[#allocation2 + $0x11b8] sm:$0xff]
    %v644 = vld [vmem:[#allocation2 + $0x11c0] sm:$0xff]
    %v645 = vld [vmem:[#allocation2 + $0x11c8] sm:$0xff]
    %v646 = vld [vmem:[#allocation2 + $0x11d0] sm:$0xff]
    %v647 = vld [vmem:[#allocation2 + $0x11d8] sm:$0xff]
    %v648 = vld [vmem:[#allocation2 + $0x11e0] sm:$0xff]
    %v649 = vld [vmem:[#allocation2 + $0x11e8] sm:$0xff]
    %v650 = vld [vmem:[#allocation2 + $0x11f0] sm:$0xff]
    %v651 = vld [vmem:[#allocation2 + $0x11f8] sm:$0xff]
    %v652 = vld [vmem:[#allocation2 + $0x1200] sm:$0xff]
    %v653 = vld [vmem:[#allocation2 + $0x1208] sm:$0xff]
    %v654 = vld [vmem:[#allocation2 + $0x1210] sm:$0xff]
    %v655 = vld [vmem:[#allocation2 + $0x1218] sm:$0xff]
    %v656 = vld [vmem:[#allocation2 + $0x1220] sm:$0xff]
    %v657 = vld [vmem:[#allocation2 + $0x1228] sm:$0xff]
    %v658 = vld [vmem:[#allocation2 + $0x1230] sm:$0xff]
    %v659 = vld [vmem:[#allocation2 + $0x1238] sm:$0xff]
    %v660 = vld [vmem:[#allocation2 + $0x1240] sm:$0xff]
    %v661 = vld [vmem:[#allocation2 + $0x1248] sm:$0xff]
    %v662 = vld [vmem:[#allocation2 + $0x1250] sm:$0xff]
    %v663 = vld [vmem:[#allocation2 + $0x1258] sm:$0xff]
    %v664 = vld [vmem:[#allocation2 + $0x1260] sm:$0xff]
    %v665 = vld [vmem:[#allocation2 + $0x1268] sm:$0xff]
    %v666 = vld [vmem:[#allocation2 + $0x1270] sm:$0xff]
    %v667 = vld [vmem:[#allocation2 + $0x1278] sm:$0xff]
    %v668 = vld [vmem:[#allocation2 + $0x1280] sm:$0xff]
    %v669 = vld [vmem:[#allocation2 + $0x1288] sm:$0xff]
    %v670 = vld [vmem:[#allocation2 + $0x1290] sm:$0xff]
    %v671 = vld [vmem:[#allocation2 + $0x1298] sm:$0xff]
    %v672 = vld [vmem:[#allocation2 + $0x12a0] sm:$0xff]
    %v673 = vld [vmem:[#allocation2 + $0x12a8] sm:$0xff]
    %v674 = vld [vmem:[#allocation2 + $0x12b0] sm:$0xff]
    %v675 = vld [vmem:[#allocation2 + $0x12b8] sm:$0xff]
    %v676 = vld [vmem:[#allocation2 + $0x12c0] sm:$0xff]
    %v677 = vld [vmem:[#allocation2 + $0x12c8] sm:$0xff]
    %v678 = vld [vmem:[#allocation2 + $0x12d0] sm:$0xff]
    %v679 = vld [vmem:[#allocation2 + $0x12d8] sm:$0xff]
    %v680 = vld [vmem:[#allocation2 + $0x12e0] sm:$0xff]
    %v681 = vld [vmem:[#allocation2 + $0x12e8] sm:$0xff]
    %v682 = vld [vmem:[#allocation2 + $0x12f0] sm:$0xff]
    %v683 = vld [vmem:[#allocation2 + $0x12f8] sm:$0xff]
    %v684 = vld [vmem:[#allocation2 + $0x1300] sm:$0xff]
    %v685 = vld [vmem:[#allocation2 + $0x1308] sm:$0xff]
    %v686 = vld [vmem:[#allocation2 + $0x1310] sm:$0xff]
    %v687 = vld [vmem:[#allocation2 + $0x1318] sm:$0xff]
    %v688 = vld [vmem:[#allocation2 + $0x1320] sm:$0xff]
    %v689 = vld [vmem:[#allocation2 + $0x1328] sm:$0xff]
    %v690 = vld [vmem:[#allocation2 + $0x1330] sm:$0xff]
    %v691 = vld [vmem:[#allocation2 + $0x1338] sm:$0xff]
    %v692 = vld [vmem:[#allocation2 + $0x1340] sm:$0xff]
    %v693 = vld [vmem:[#allocation2 + $0x1348] sm:$0xff]
    %v694 = vld [vmem:[#allocation2 + $0x1350] sm:$0xff]
    %v695 = vld [vmem:[#allocation2 + $0x1358] sm:$0xff]
    %v696 = vld [vmem:[#allocation2 + $0x1360] sm:$0xff]
    %v697 = vld [vmem:[#allocation2 + $0x1368] sm:$0xff]
    %v698 = vld [vmem:[#allocation2 + $0x1370] sm:$0xff]
    %v699 = vld [vmem:[#allocation2 + $0x1378] sm:$0xff]
    %v700 = vld [vmem:[#allocation2 + $0x1380] sm:$0xff]
    %v701 = vld [vmem:[#allocation2 + $0x1388] sm:$0xff]
    %v702 = vld [vmem:[#allocation2 + $0x1390] sm:$0xff]
    %v703 = vld [vmem:[#allocation2 + $0x1398] sm:$0xff]
    %v704 = vld [vmem:[#allocation2 + $0x13a0] sm:$0xff]
    %v705 = vld [vmem:[#allocation2 + $0x13a8] sm:$0xff]
    %v706 = vld [vmem:[#allocation2 + $0x13b0] sm:$0xff]
    %v707 = vld [vmem:[#allocation2 + $0x13b8] sm:$0xff]
    %v708 = vld [vmem:[#allocation2 + $0x13c0] sm:$0xff]
    %v709 = vld [vmem:[#allocation2 + $0x13c8] sm:$0xff]
    %v710 = vld [vmem:[#allocation2 + $0x13d0] sm:$0xff]
    %v711 = vld [vmem:[#allocation2 + $0x13d8] sm:$0xff]
    %v712 = vld [vmem:[#allocation2 + $0x13e0] sm:$0xff]
    %v713 = vld [vmem:[#allocation2 + $0x13e8] sm:$0xff]
    %v714 = vld [vmem:[#allocation2 + $0x13f0] sm:$0xff]
    %v715 = vld [vmem:[#allocation2 + $0x13f8] sm:$0xff]
    %v716 = vld [vmem:[#allocation2 + $0x1400] sm:$0xff]
    %v717 = vld [vmem:[#allocation2 + $0x1408] sm:$0xff]
    %v718 = vld [vmem:[#allocation2 + $0x1410] sm:$0xff]
    %v719 = vld [vmem:[#allocation2 + $0x1418] sm:$0xff]
    %v720 = vld [vmem:[#allocation2 + $0x1420] sm:$0xff]
    %v721 = vld [vmem:[#allocation2 + $0x1428] sm:$0xff]
    %v722 = vld [vmem:[#allocation2 + $0x1430] sm:$0xff]
    %v723 = vld [vmem:[#allocation2 + $0x1438] sm:$0xff]
    %v724 = vld [vmem:[#allocation2 + $0x1440] sm:$0xff]
    %v725 = vld [vmem:[#allocation2 + $0x1448] sm:$0xff]
    %v726 = vld [vmem:[#allocation2 + $0x1450] sm:$0xff]
    %v727 = vld [vmem:[#allocation2 + $0x1458] sm:$0xff]
    %v728 = vld [vmem:[#allocation2 + $0x1460] sm:$0xff]
    %v729 = vld [vmem:[#allocation2 + $0x1468] sm:$0xff]
    %v730 = vld [vmem:[#allocation2 + $0x1470] sm:$0xff]
    %v731 = vld [vmem:[#allocation2 + $0x1478] sm:$0xff]
    %v732 = vld [vmem:[#allocation2 + $0x1480] sm:$0xff]
    %v733 = vld [vmem:[#allocation2 + $0x1488] sm:$0xff]
    %v734 = vld [vmem:[#allocation2 + $0x1490] sm:$0xff]
    %v735 = vld [vmem:[#allocation2 + $0x1498] sm:$0xff]
    %v736 = vld [vmem:[#allocation2 + $0x14a0] sm:$0xff]
    %v737 = vld [vmem:[#allocation2 + $0x14a8] sm:$0xff]
    %v738 = vld [vmem:[#allocation2 + $0x14b0] sm:$0xff]
    %v739 = vld [vmem:[#allocation2 + $0x14b8] sm:$0xff]
    %v740 = vld [vmem:[#allocation2 + $0x14c0] sm:$0xff]
    %v741 = vld [vmem:[#allocation2 + $0x14c8] sm:$0xff]
    %v742 = vld [vmem:[#allocation2 + $0x14d0] sm:$0xff]
    %v743 = vld [vmem:[#allocation2 + $0x14d8] sm:$0xff]
    %v744 = vld [vmem:[#allocation2 + $0x14e0] sm:$0xff]
    %v745 = vld [vmem:[#allocation2 + $0x14e8] sm:$0xff]
    %v746 = vld [vmem:[#allocation2 + $0x14f0] sm:$0xff]
    %v747 = vld [vmem:[#allocation2 + $0x14f8] sm:$0xff]
    %v748 = vld [vmem:[#allocation2 + $0x1500] sm:$0xff]
    %v749 = vld [vmem:[#allocation2 + $0x1508] sm:$0xff]
    %v750 = vld [vmem:[#allocation2 + $0x1510] sm:$0xff]
    %v751 = vld [vmem:[#allocation2 + $0x1518] sm:$0xff]
    %v752 = vld [vmem:[#allocation2 + $0x1520] sm:$0xff]
    %v753 = vld [vmem:[#allocation2 + $0x1528] sm:$0xff]
    %v754 = vld [vmem:[#allocation2 + $0x1530] sm:$0xff]
    %v755 = vld [vmem:[#allocation2 + $0x1538] sm:$0xff]
    %v756 = vld [vmem:[#allocation2 + $0x1540] sm:$0xff]
    %v757 = vld [vmem:[#allocation2 + $0x1548] sm:$0xff]
    %v758 = vld [vmem:[#allocation2 + $0x1550] sm:$0xff]
    %v759 = vld [vmem:[#allocation2 + $0x1558] sm:$0xff]
    %v760 = vld [vmem:[#allocation2 + $0x1560] sm:$0xff]
    %v761 = vld [vmem:[#allocation2 + $0x1568] sm:$0xff]
    %v762 = vld [vmem:[#allocation2 + $0x1570] sm:$0xff]
    %v763 = vld [vmem:[#allocation2 + $0x1578] sm:$0xff]
    %v764 = vld [vmem:[#allocation2 + $0x1580] sm:$0xff]
    %v765 = vld [vmem:[#allocation2 + $0x1588] sm:$0xff]
    %v766 = vld [vmem:[#allocation2 + $0x1590] sm:$0xff]
    %v767 = vld [vmem:[#allocation2 + $0x1598] sm:$0xff]
    %v768 = vld [vmem:[#allocation2 + $0x15a0] sm:$0xff]
    %v769 = vld [vmem:[#allocation2 + $0x15a8] sm:$0xff]
    %v770 = vld [vmem:[#allocation2 + $0x15b0] sm:$0xff]
    %v771 = vld [vmem:[#allocation2 + $0x15b8] sm:$0xff]
    %v772 = vld [vmem:[#allocation2 + $0x15c0] sm:$0xff]
    %v773 = vld [vmem:[#allocation2 + $0x15c8] sm:$0xff]
    %v774 = vld [vmem:[#allocation2 + $0x15d0] sm:$0xff]
    %v775 = vld [vmem:[#allocation2 + $0x15d8] sm:$0xff]
    %v776 = vld [vmem:[#allocation2 + $0x15e0] sm:$0xff]
    %v777 = vld [vmem:[#allocation2 + $0x15e8] sm:$0xff]
    %v778 = vld [vmem:[#allocation2 + $0x15f0] sm:$0xff]
    %v779 = vld [vmem:[#allocation2 + $0x15f8] sm:$0xff]
    %v780 = vld [vmem:[#allocation2 + $0x1600] sm:$0xff]
    %v781 = vld [vmem:[#allocation2 + $0x1608] sm:$0xff]
    %v782 = vld [vmem:[#allocation2 + $0x1610] sm:$0xff]
    %v783 = vld [vmem:[#allocation2 + $0x1618] sm:$0xff]
    %v784 = vld [vmem:[#allocation2 + $0x1620] sm:$0xff]
    %v785 = vld [vmem:[#allocation2 + $0x1628] sm:$0xff]
    %v786 = vld [vmem:[#allocation2 + $0x1630] sm:$0xff]
    %v787 = vld [vmem:[#allocation2 + $0x1638] sm:$0xff]
    %v788 = vld [vmem:[#allocation2 + $0x1640] sm:$0xff]
    %v789 = vld [vmem:[#allocation2 + $0x1648] sm:$0xff]
    %v790 = vld [vmem:[#allocation2 + $0x1650] sm:$0xff]
    %v791 = vld [vmem:[#allocation2 + $0x1658] sm:$0xff]
    %v792 = vld [vmem:[#allocation2 + $0x1660] sm:$0xff]
    %v793 = vld [vmem:[#allocation2 + $0x1668] sm:$0xff]
    %v794 = vld [vmem:[#allocation2 + $0x1670] sm:$0xff]
    %v795 = vld [vmem:[#allocation2 + $0x1678] sm:$0xff]
    %v796 = vld [vmem:[#allocation2 + $0x1680] sm:$0xff]
    %v797 = vld [vmem:[#allocation2 + $0x1688] sm:$0xff]
    %v798 = vld [vmem:[#allocation2 + $0x1690] sm:$0xff]
    %v799 = vld [vmem:[#allocation2 + $0x1698] sm:$0xff]
    %v800 = vld [vmem:[#allocation2 + $0x16a0] sm:$0xff]
    %v801 = vld [vmem:[#allocation2 + $0x16a8] sm:$0xff]
    %v802 = vld [vmem:[#allocation2 + $0x16b0] sm:$0xff]
    %v803 = vld [vmem:[#allocation2 + $0x16b8] sm:$0xff]
    %v804 = vld [vmem:[#allocation2 + $0x16c0] sm:$0xff]
    %v805 = vld [vmem:[#allocation2 + $0x16c8] sm:$0xff]
    %v806 = vld [vmem:[#allocation2 + $0x16d0] sm:$0xff]
    %v807 = vld [vmem:[#allocation2 + $0x16d8] sm:$0xff]
    %v808 = vld [vmem:[#allocation2 + $0x16e0] sm:$0xff]
    %v809 = vld [vmem:[#allocation2 + $0x16e8] sm:$0xff]
    %v810 = vld [vmem:[#allocation2 + $0x16f0] sm:$0xff]
    %v811 = vld [vmem:[#allocation2 + $0x16f8] sm:$0xff]
    %v812 = vld [vmem:[#allocation2 + $0x1700] sm:$0xff]
    %v813 = vld [vmem:[#allocation2 + $0x1708] sm:$0xff]
    %v814 = vld [vmem:[#allocation2 + $0x1710] sm:$0xff]
    %v815 = vld [vmem:[#allocation2 + $0x1718] sm:$0xff]
    %v816 = vld [vmem:[#allocation2 + $0x1720] sm:$0xff]
    %v817 = vld [vmem:[#allocation2 + $0x1728] sm:$0xff]
    %v818 = vld [vmem:[#allocation2 + $0x1730] sm:$0xff]
    %v819 = vld [vmem:[#allocation2 + $0x1738] sm:$0xff]
    %v820 = vld [vmem:[#allocation2 + $0x1740] sm:$0xff]
    %v821 = vld [vmem:[#allocation2 + $0x1748] sm:$0xff]
    %v822 = vld [vmem:[#allocation2 + $0x1750] sm:$0xff]
    %v823 = vld [vmem:[#allocation2 + $0x1758] sm:$0xff]
    %v824 = vld [vmem:[#allocation2 + $0x1760] sm:$0xff]
    %v825 = vld [vmem:[#allocation2 + $0x1768] sm:$0xff]
    %v826 = vld [vmem:[#allocation2 + $0x1770] sm:$0xff]
    %v827 = vld [vmem:[#allocation2 + $0x1778] sm:$0xff]
    %v828 = vld [vmem:[#allocation2 + $0x1780] sm:$0xff]
    %v829 = vld [vmem:[#allocation2 + $0x1788] sm:$0xff]
    %v830 = vld [vmem:[#allocation2 + $0x1790] sm:$0xff]
    %v831 = vld [vmem:[#allocation2 + $0x1798] sm:$0xff]
    %v832 = vld [vmem:[#allocation2 + $0x17a0] sm:$0xff]
    %v833 = vld [vmem:[#allocation2 + $0x17a8] sm:$0xff]
    %v834 = vld [vmem:[#allocation2 + $0x17b0] sm:$0xff]
    %v835 = vld [vmem:[#allocation2 + $0x17b8] sm:$0xff]
    %v836 = vld [vmem:[#allocation2 + $0x17c0] sm:$0xff]
    %v837 = vld [vmem:[#allocation2 + $0x17c8] sm:$0xff]
    %v838 = vld [vmem:[#allocation2 + $0x17d0] sm:$0xff]
    %v839 = vld [vmem:[#allocation2 + $0x17d8] sm:$0xff]
    %v840 = vld [vmem:[#allocation2 + $0x17e0] sm:$0xff]
    %v841 = vld [vmem:[#allocation2 + $0x17e8] sm:$0xff]
    %v842 = vld [vmem:[#allocation2 + $0x17f0] sm:$0xff]
    %v843 = vld [vmem:[#allocation2 + $0x17f8] sm:$0xff]
    %v844 = vld [vmem:[#allocation4] sm:$0x3f]
    %v846 = vperm.slane %v844, 0
    %v847 = vperm.slane %v844, 1
    %v848 = vperm.slane %v844, 2
    %v849 = vperm.slane %v844, 3
    %v850 = vperm.slane %v844, 4
    %v851 = vperm.slane %v844, 5
    %v1626 = vunpack.c.l.b16 %v76
    %v1627 = vunpack.c.h.b16 %v76
    %v1628 = vunpack.c.l.b16 %v77
    %v1629 = vunpack.c.h.b16 %v77
    %v1630 = vunpack.c.l.b16 %v78
    %v1631 = vunpack.c.h.b16 %v78
    %v1632 = vunpack.c.l.b16 %v79
    %v1633 = vunpack.c.h.b16 %v79
    %v1634 = vunpack.c.l.b16 %v80
    %v1635 = vunpack.c.h.b16 %v80
    %v1636 = vunpack.c.l.b16 %v81
    %v1637 = vunpack.c.h.b16 %v81
    %v1638 = vunpack.c.l.b16 %v82
    %v1639 = vunpack.c.h.b16 %v82
    %v1640 = vunpack.c.l.b16 %v83
    %v1641 = vunpack.c.h.b16 %v83
    %v1642 = vunpack.c.l.b16 %v84
    %v1643 = vunpack.c.h.b16 %v84
    %v1644 = vunpack.c.l.b16 %v85
    %v1645 = vunpack.c.h.b16 %v85
    %v1646 = vunpack.c.l.b16 %v86
    %v1647 = vunpack.c.h.b16 %v86
    %v1648 = vunpack.c.l.b16 %v87
    %v1649 = vunpack.c.h.b16 %v87
    %v1650 = vunpack.c.l.b16 %v88
    %v1651 = vunpack.c.h.b16 %v88
    %v1652 = vunpack.c.l.b16 %v89
    %v1653 = vunpack.c.h.b16 %v89
    %v1654 = vunpack.c.l.b16 %v90
    %v1655 = vunpack.c.h.b16 %v90
    %v1656 = vunpack.c.l.b16 %v91
    %v1657 = vunpack.c.h.b16 %v91
    %v1658 = vunpack.c.l.b16 %v92
    %v1659 = vunpack.c.h.b16 %v92
    %v1660 = vunpack.c.l.b16 %v93
    %v1661 = vunpack.c.h.b16 %v93
    %v1662 = vunpack.c.l.b16 %v94
    %v1663 = vunpack.c.h.b16 %v94
    %v1664 = vunpack.c.l.b16 %v95
    %v1665 = vunpack.c.h.b16 %v95
    %v1666 = vunpack.c.l.b16 %v96
    %v1667 = vunpack.c.h.b16 %v96
    %v1668 = vunpack.c.l.b16 %v97
    %v1669 = vunpack.c.h.b16 %v97
    %v1670 = vunpack.c.l.b16 %v98
    %v1671 = vunpack.c.h.b16 %v98
    %v1672 = vunpack.c.l.b16 %v99
    %v1673 = vunpack.c.h.b16 %v99
    %v1674 = vunpack.c.l.b16 %v100
    %v1675 = vunpack.c.h.b16 %v100
    %v1676 = vunpack.c.l.b16 %v101
    %v1677 = vunpack.c.h.b16 %v101
    %v1678 = vunpack.c.l.b16 %v102
    %v1679 = vunpack.c.h.b16 %v102
    %v1680 = vunpack.c.l.b16 %v103
    %v1681 = vunpack.c.h.b16 %v103
    %v1682 = vunpack.c.l.b16 %v104
    %v1683 = vunpack.c.h.b16 %v104
    %v1684 = vunpack.c.l.b16 %v105
    %v1685 = vunpack.c.h.b16 %v105
    %v1686 = vunpack.c.l.b16 %v106
    %v1687 = vunpack.c.h.b16 %v106
    %v1688 = vunpack.c.l.b16 %v107
    %v1689 = vunpack.c.h.b16 %v107
    %v1690 = vunpack.c.l.b16 %v108
    %v1691 = vunpack.c.h.b16 %v108
    %v1692 = vunpack.c.l.b16 %v109
    %v1693 = vunpack.c.h.b16 %v109
    %v1694 = vunpack.c.l.b16 %v110
    %v1695 = vunpack.c.h.b16 %v110
    %v1696 = vunpack.c.l.b16 %v111
    %v1697 = vunpack.c.h.b16 %v111
    %v1698 = vunpack.c.l.b16 %v112
    %v1699 = vunpack.c.h.b16 %v112
    %v1700 = vunpack.c.l.b16 %v113
    %v1701 = vunpack.c.h.b16 %v113
    %v1702 = vunpack.c.l.b16 %v114
    %v1703 = vunpack.c.h.b16 %v114
    %v1704 = vunpack.c.l.b16 %v115
    %v1705 = vunpack.c.h.b16 %v115
    %v1706 = vunpack.c.l.b16 %v116
    %v1707 = vunpack.c.h.b16 %v116
    %v1708 = vunpack.c.l.b16 %v117
    %v1709 = vunpack.c.h.b16 %v117
    %v1710 = vunpack.c.l.b16 %v118
    %v1711 = vunpack.c.h.b16 %v118
    %v1712 = vunpack.c.l.b16 %v119
    %v1713 = vunpack.c.h.b16 %v119
    %v1714 = vunpack.c.l.b16 %v120
    %v1715 = vunpack.c.h.b16 %v120
    %v1716 = vunpack.c.l.b16 %v121
    %v1717 = vunpack.c.h.b16 %v121
    %v1718 = vunpack.c.l.b16 %v122
    %v1719 = vunpack.c.h.b16 %v122
    %v1720 = vunpack.c.l.b16 %v123
    %v1721 = vunpack.c.h.b16 %v123
    %v1722 = vunpack.c.l.b16 %v124
    %v1723 = vunpack.c.h.b16 %v124
    %v1724 = vunpack.c.l.b16 %v125
    %v1725 = vunpack.c.h.b16 %v125
    %v1726 = vunpack.c.l.b16 %v126
    %v1727 = vunpack.c.h.b16 %v126
    %v1728 = vunpack.c.l.b16 %v127
    %v1729 = vunpack.c.h.b16 %v127
    %v1730 = vunpack.c.l.b16 %v128
    %v1731 = vunpack.c.h.b16 %v128
    %v1732 = vunpack.c.l.b16 %v129
    %v1733 = vunpack.c.h.b16 %v129
    %v1734 = vunpack.c.l.b16 %v130
    %v1735 = vunpack.c.h.b16 %v130
    %v1736 = vunpack.c.l.b16 %v131
    %v1737 = vunpack.c.h.b16 %v131
    %v1738 = vunpack.c.l.b16 %v132
    %v1739 = vunpack.c.h.b16 %v132
    %v1740 = vunpack.c.l.b16 %v133
    %v1741 = vunpack.c.h.b16 %v133
    %v1742 = vunpack.c.l.b16 %v134
    %v1743 = vunpack.c.h.b16 %v134
    %v1744 = vunpack.c.l.b16 %v135
    %v1745 = vunpack.c.h.b16 %v135
    %v1746 = vunpack.c.l.b16 %v136
    %v1747 = vunpack.c.h.b16 %v136
    %v1748 = vunpack.c.l.b16 %v137
    %v1749 = vunpack.c.h.b16 %v137
    %v1750 = vunpack.c.l.b16 %v138
    %v1751 = vunpack.c.h.b16 %v138
    %v1752 = vunpack.c.l.b16 %v139
    %v1753 = vunpack.c.h.b16 %v139
    %v1754 = vunpack.c.l.b16 %v140
    %v1755 = vunpack.c.h.b16 %v140
    %v1756 = vunpack.c.l.b16 %v141
    %v1757 = vunpack.c.h.b16 %v141
    %v1758 = vunpack.c.l.b16 %v142
    %v1759 = vunpack.c.h.b16 %v142
    %v1760 = vunpack.c.l.b16 %v143
    %v1761 = vunpack.c.h.b16 %v143
    %v1762 = vunpack.c.l.b16 %v144
    %v1763 = vunpack.c.h.b16 %v144
    %v1764 = vunpack.c.l.b16 %v145
    %v1765 = vunpack.c.h.b16 %v145
    %v1766 = vunpack.c.l.b16 %v146
    %v1767 = vunpack.c.h.b16 %v146
    %v1768 = vunpack.c.l.b16 %v147
    %v1769 = vunpack.c.h.b16 %v147
    %v1770 = vunpack.c.l.b16 %v148
    %v1771 = vunpack.c.h.b16 %v148
    %v1772 = vunpack.c.l.b16 %v149
    %v1773 = vunpack.c.h.b16 %v149
    %v1774 = vunpack.c.l.b16 %v150
    %v1775 = vunpack.c.h.b16 %v150
    %v1776 = vunpack.c.l.b16 %v151
    %v1777 = vunpack.c.h.b16 %v151
    %v1778 = vunpack.c.l.b16 %v152
    %v1779 = vunpack.c.h.b16 %v152
    %v1780 = vunpack.c.l.b16 %v153
    %v1781 = vunpack.c.h.b16 %v153
    %v1782 = vunpack.c.l.b16 %v154
    %v1783 = vunpack.c.h.b16 %v154
    %v1784 = vunpack.c.l.b16 %v155
    %v1785 = vunpack.c.h.b16 %v155
    %v1786 = vunpack.c.l.b16 %v156
    %v1787 = vunpack.c.h.b16 %v156
    %v1788 = vunpack.c.l.b16 %v157
    %v1789 = vunpack.c.h.b16 %v157
    %v1790 = vunpack.c.l.b16 %v158
    %v1791 = vunpack.c.h.b16 %v158
    %v1792 = vunpack.c.l.b16 %v159
    %v1793 = vunpack.c.h.b16 %v159
    %v1794 = vunpack.c.l.b16 %v160
    %v1795 = vunpack.c.h.b16 %v160
    %v1796 = vunpack.c.l.b16 %v161
    %v1797 = vunpack.c.h.b16 %v161
    %v1798 = vunpack.c.l.b16 %v162
    %v1799 = vunpack.c.h.b16 %v162
    %v1800 = vunpack.c.l.b16 %v163
    %v1801 = vunpack.c.h.b16 %v163
    %v1802 = vunpack.c.l.b16 %v164
    %v1803 = vunpack.c.h.b16 %v164
    %v1804 = vunpack.c.l.b16 %v165
    %v1805 = vunpack.c.h.b16 %v165
    %v1806 = vunpack.c.l.b16 %v166
    %v1807 = vunpack.c.h.b16 %v166
    %v1808 = vunpack.c.l.b16 %v167
    %v1809 = vunpack.c.h.b16 %v167
    %v1810 = vunpack.c.l.b16 %v168
    %v1811 = vunpack.c.h.b16 %v168
    %v1812 = vunpack.c.l.b16 %v169
    %v1813 = vunpack.c.h.b16 %v169
    %v1814 = vunpack.c.l.b16 %v170
    %v1815 = vunpack.c.h.b16 %v170
    %v1816 = vunpack.c.l.b16 %v171
    %v1817 = vunpack.c.h.b16 %v171
    %v1818 = vunpack.c.l.b16 %v172
    %v1819 = vunpack.c.h.b16 %v172
    %v1820 = vunpack.c.l.b16 %v173
    %v1821 = vunpack.c.h.b16 %v173
    %v1822 = vunpack.c.l.b16 %v174
    %v1823 = vunpack.c.h.b16 %v174
    %v1824 = vunpack.c.l.b16 %v175
    %v1825 = vunpack.c.h.b16 %v175
    %v1826 = vunpack.c.l.b16 %v176
    %v1827 = vunpack.c.h.b16 %v176
    %v1828 = vunpack.c.l.b16 %v177
    %v1829 = vunpack.c.h.b16 %v177
    %v1830 = vunpack.c.l.b16 %v178
    %v1831 = vunpack.c.h.b16 %v178
    %v1832 = vunpack.c.l.b16 %v179
    %v1833 = vunpack.c.h.b16 %v179
    %v1834 = vunpack.c.l.b16 %v180
    %v1835 = vunpack.c.h.b16 %v180
    %v1836 = vunpack.c.l.b16 %v181
    %v1837 = vunpack.c.h.b16 %v181
    %v1838 = vunpack.c.l.b16 %v182
    %v1839 = vunpack.c.h.b16 %v182
    %v1840 = vunpack.c.l.b16 %v183
    %v1841 = vunpack.c.h.b16 %v183
    %v1842 = vunpack.c.l.b16 %v184
    %v1843 = vunpack.c.h.b16 %v184
    %v1844 = vunpack.c.l.b16 %v185
    %v1845 = vunpack.c.h.b16 %v185
    %v1846 = vunpack.c.l.b16 %v186
    %v1847 = vunpack.c.h.b16 %v186
    %v1848 = vunpack.c.l.b16 %v187
    %v1849 = vunpack.c.h.b16 %v187
    %v1850 = vunpack.c.l.b16 %v188
    %v1851 = vunpack.c.h.b16 %v188
    %v1852 = vunpack.c.l.b16 %v189
    %v1853 = vunpack.c.h.b16 %v189
    %v1854 = vunpack.c.l.b16 %v190
    %v1855 = vunpack.c.h.b16 %v190
    %v1856 = vunpack.c.l.b16 %v191
    %v1857 = vunpack.c.h.b16 %v191
    %v1858 = vunpack.c.l.b16 %v192
    %v1859 = vunpack.c.h.b16 %v192
    %v1860 = vunpack.c.l.b16 %v193
    %v1861 = vunpack.c.h.b16 %v193
    %v1862 = vunpack.c.l.b16 %v194
    %v1863 = vunpack.c.h.b16 %v194
    %v1864 = vunpack.c.l.b16 %v195
    %v1865 = vunpack.c.h.b16 %v195
    %v1866 = vunpack.c.l.b16 %v196
    %v1867 = vunpack.c.h.b16 %v196
    %v1868 = vunpack.c.l.b16 %v197
    %v1869 = vunpack.c.h.b16 %v197
    %v1870 = vunpack.c.l.b16 %v198
    %v1871 = vunpack.c.h.b16 %v198
    %v1872 = vunpack.c.l.b16 %v199
    %v1873 = vunpack.c.h.b16 %v199
    %v1874 = vunpack.c.l.b16 %v200
    %v1875 = vunpack.c.h.b16 %v200
    %v1876 = vunpack.c.l.b16 %v201
    %v1877 = vunpack.c.h.b16 %v201
    %v1878 = vunpack.c.l.b16 %v202
    %v1879 = vunpack.c.h.b16 %v202
    %v1880 = vunpack.c.l.b16 %v203
    %v1881 = vunpack.c.h.b16 %v203
    %v1882 = vunpack.c.l.b16 %v204
    %v1883 = vunpack.c.h.b16 %v204
    %v1884 = vunpack.c.l.b16 %v205
    %v1885 = vunpack.c.h.b16 %v205
    %v1886 = vunpack.c.l.b16 %v206
    %v1887 = vunpack.c.h.b16 %v206
    %v1888 = vunpack.c.l.b16 %v207
    %v1889 = vunpack.c.h.b16 %v207
    %v1890 = vunpack.c.l.b16 %v208
    %v1891 = vunpack.c.h.b16 %v208
    %v1892 = vunpack.c.l.b16 %v209
    %v1893 = vunpack.c.h.b16 %v209
    %v1894 = vunpack.c.l.b16 %v210
    %v1895 = vunpack.c.h.b16 %v210
    %v1896 = vunpack.c.l.b16 %v211
    %v1897 = vunpack.c.h.b16 %v211
    %v1898 = vunpack.c.l.b16 %v212
    %v1899 = vunpack.c.h.b16 %v212
    %v1900 = vunpack.c.l.b16 %v213
    %v1901 = vunpack.c.h.b16 %v213
    %v1902 = vunpack.c.l.b16 %v214
    %v1903 = vunpack.c.h.b16 %v214
    %v1904 = vunpack.c.l.b16 %v215
    %v1905 = vunpack.c.h.b16 %v215
    %v1906 = vunpack.c.l.b16 %v216
    %v1907 = vunpack.c.h.b16 %v216
    %v1908 = vunpack.c.l.b16 %v217
    %v1909 = vunpack.c.h.b16 %v217
    %v1910 = vunpack.c.l.b16 %v218
    %v1911 = vunpack.c.h.b16 %v218
    %v1912 = vunpack.c.l.b16 %v219
    %v1913 = vunpack.c.h.b16 %v219
    %v1914 = vunpack.c.l.b16 %v220
    %v1915 = vunpack.c.h.b16 %v220
    %v1916 = vunpack.c.l.b16 %v221
    %v1917 = vunpack.c.h.b16 %v221
    %v1918 = vunpack.c.l.b16 %v222
    %v1919 = vunpack.c.h.b16 %v222
    %v1920 = vunpack.c.l.b16 %v223
    %v1921 = vunpack.c.h.b16 %v223
    %v1922 = vunpack.c.l.b16 %v224
    %v1923 = vunpack.c.h.b16 %v224
    %v1924 = vunpack.c.l.b16 %v225
    %v1925 = vunpack.c.h.b16 %v225
    %v1926 = vunpack.c.l.b16 %v226
    %v1927 = vunpack.c.h.b16 %v226
    %v1928 = vunpack.c.l.b16 %v227
    %v1929 = vunpack.c.h.b16 %v227
    %v1930 = vunpack.c.l.b16 %v228
    %v1931 = vunpack.c.h.b16 %v228
    %v1932 = vunpack.c.l.b16 %v229
    %v1933 = vunpack.c.h.b16 %v229
    %v1934 = vunpack.c.l.b16 %v230
    %v1935 = vunpack.c.h.b16 %v230
    %v1936 = vunpack.c.l.b16 %v231
    %v1937 = vunpack.c.h.b16 %v231
    %v1938 = vunpack.c.l.b16 %v232
    %v1939 = vunpack.c.h.b16 %v232
    %v1940 = vunpack.c.l.b16 %v233
    %v1941 = vunpack.c.h.b16 %v233
    %v1942 = vunpack.c.l.b16 %v234
    %v1943 = vunpack.c.h.b16 %v234
    %v1944 = vunpack.c.l.b16 %v235
    %v1945 = vunpack.c.h.b16 %v235
    %v1946 = vunpack.c.l.b16 %v236
    %v1947 = vunpack.c.h.b16 %v236
    %v1948 = vunpack.c.l.b16 %v237
    %v1949 = vunpack.c.h.b16 %v237
    %v1950 = vunpack.c.l.b16 %v238
    %v1951 = vunpack.c.h.b16 %v238
    %v1952 = vunpack.c.l.b16 %v239
    %v1953 = vunpack.c.h.b16 %v239
    %v1954 = vunpack.c.l.b16 %v240
    %v1955 = vunpack.c.h.b16 %v240
    %v1956 = vunpack.c.l.b16 %v241
    %v1957 = vunpack.c.h.b16 %v241
    %v1958 = vunpack.c.l.b16 %v242
    %v1959 = vunpack.c.h.b16 %v242
    %v1960 = vunpack.c.l.b16 %v243
    %v1961 = vunpack.c.h.b16 %v243
    %v1962 = vunpack.c.l.b16 %v244
    %v1963 = vunpack.c.h.b16 %v244
    %v1964 = vunpack.c.l.b16 %v245
    %v1965 = vunpack.c.h.b16 %v245
    %v1966 = vunpack.c.l.b16 %v246
    %v1967 = vunpack.c.h.b16 %v246
    %v1968 = vunpack.c.l.b16 %v247
    %v1969 = vunpack.c.h.b16 %v247
    %v1970 = vunpack.c.l.b16 %v248
    %v1971 = vunpack.c.h.b16 %v248
    %v1972 = vunpack.c.l.b16 %v249
    %v1973 = vunpack.c.h.b16 %v249
    %v1974 = vunpack.c.l.b16 %v250
    %v1975 = vunpack.c.h.b16 %v250
    %v1976 = vunpack.c.l.b16 %v251
    %v1977 = vunpack.c.h.b16 %v251
    %v1978 = vunpack.c.l.b16 %v252
    %v1979 = vunpack.c.h.b16 %v252
    %v1980 = vunpack.c.l.b16 %v253
    %v1981 = vunpack.c.h.b16 %v253
    %v1982 = vunpack.c.l.b16 %v254
    %v1983 = vunpack.c.h.b16 %v254
    %v1984 = vunpack.c.l.b16 %v255
    %v1985 = vunpack.c.h.b16 %v255
    %v1986 = vunpack.c.l.b16 %v256
    %v1987 = vunpack.c.h.b16 %v256
    %v1988 = vunpack.c.l.b16 %v257
    %v1989 = vunpack.c.h.b16 %v257
    %v1990 = vunpack.c.l.b16 %v258
    %v1991 = vunpack.c.h.b16 %v258
    %v1992 = vunpack.c.l.b16 %v259
    %v1993 = vunpack.c.h.b16 %v259
    %v1994 = vunpack.c.l.b16 %v260
    %v1995 = vunpack.c.h.b16 %v260
    %v1996 = vunpack.c.l.b16 %v261
    %v1997 = vunpack.c.h.b16 %v261
    %v1998 = vunpack.c.l.b16 %v262
    %v1999 = vunpack.c.h.b16 %v262
    %v2000 = vunpack.c.l.b16 %v263
    %v2001 = vunpack.c.h.b16 %v263
    %v2002 = vunpack.c.l.b16 %v264
    %v2003 = vunpack.c.h.b16 %v264
    %v2004 = vunpack.c.l.b16 %v265
    %v2005 = vunpack.c.h.b16 %v265
    %v2006 = vunpack.c.l.b16 %v266
    %v2007 = vunpack.c.h.b16 %v266
    %v2008 = vunpack.c.l.b16 %v267
    %v2009 = vunpack.c.h.b16 %v267
    %v2010 = vunpack.c.l.b16 %v268
    %v2011 = vunpack.c.h.b16 %v268
    %v2012 = vunpack.c.l.b16 %v269
    %v2013 = vunpack.c.h.b16 %v269
    %v2014 = vunpack.c.l.b16 %v270
    %v2015 = vunpack.c.h.b16 %v270
    %v2016 = vunpack.c.l.b16 %v271
    %v2017 = vunpack.c.h.b16 %v271
    %v2018 = vunpack.c.l.b16 %v272
    %v2019 = vunpack.c.h.b16 %v272
    %v2020 = vunpack.c.l.b16 %v273
    %v2021 = vunpack.c.h.b16 %v273
    %v2022 = vunpack.c.l.b16 %v274
    %v2023 = vunpack.c.h.b16 %v274
    %v2024 = vunpack.c.l.b16 %v275
    %v2025 = vunpack.c.h.b16 %v275
    %v2026 = vunpack.c.l.b16 %v276
    %v2027 = vunpack.c.h.b16 %v276
    %v2028 = vunpack.c.l.b16 %v277
    %v2029 = vunpack.c.h.b16 %v277
    %v2030 = vunpack.c.l.b16 %v278
    %v2031 = vunpack.c.h.b16 %v278
    %v2032 = vunpack.c.l.b16 %v279
    %v2033 = vunpack.c.h.b16 %v279
    %v2034 = vunpack.c.l.b16 %v280
    %v2035 = vunpack.c.h.b16 %v280
    %v2036 = vunpack.c.l.b16 %v281
    %v2037 = vunpack.c.h.b16 %v281
    %v2038 = vunpack.c.l.b16 %v282
    %v2039 = vunpack.c.h.b16 %v282
    %v2040 = vunpack.c.l.b16 %v283
    %v2041 = vunpack.c.h.b16 %v283
    %v2042 = vunpack.c.l.b16 %v284
    %v2043 = vunpack.c.h.b16 %v284
    %v2044 = vunpack.c.l.b16 %v285
    %v2045 = vunpack.c.h.b16 %v285
    %v2046 = vunpack.c.l.b16 %v286
    %v2047 = vunpack.c.h.b16 %v286
    %v2048 = vunpack.c.l.b16 %v287
    %v2049 = vunpack.c.h.b16 %v287
    %v2050 = vunpack.c.l.b16 %v288
    %v2051 = vunpack.c.h.b16 %v288
    %v2052 = vunpack.c.l.b16 %v289
    %v2053 = vunpack.c.h.b16 %v289
    %v2054 = vunpack.c.l.b16 %v290
    %v2055 = vunpack.c.h.b16 %v290
    %v2056 = vunpack.c.l.b16 %v291
    %v2057 = vunpack.c.h.b16 %v291
    %v2058 = vunpack.c.l.b16 %v292
    %v2059 = vunpack.c.h.b16 %v292
    %v2060 = vunpack.c.l.b16 %v293
    %v2061 = vunpack.c.h.b16 %v293
    %v2062 = vunpack.c.l.b16 %v294
    %v2063 = vunpack.c.h.b16 %v294
    %v2064 = vunpack.c.l.b16 %v295
    %v2065 = vunpack.c.h.b16 %v295
    %v2066 = vunpack.c.l.b16 %v296
    %v2067 = vunpack.c.h.b16 %v296
    %v2068 = vunpack.c.l.b16 %v297
    %v2069 = vunpack.c.h.b16 %v297
    %v2070 = vunpack.c.l.b16 %v298
    %v2071 = vunpack.c.h.b16 %v298
    %v2072 = vunpack.c.l.b16 %v299
    %v2073 = vunpack.c.h.b16 %v299
    %v2074 = vunpack.c.l.b16 %v300
    %v2075 = vunpack.c.h.b16 %v300
    %v2076 = vunpack.c.l.b16 %v301
    %v2077 = vunpack.c.h.b16 %v301
    %v2078 = vunpack.c.l.b16 %v302
    %v2079 = vunpack.c.h.b16 %v302
    %v2080 = vunpack.c.l.b16 %v303
    %v2081 = vunpack.c.h.b16 %v303
    %v2082 = vunpack.c.l.b16 %v304
    %v2083 = vunpack.c.h.b16 %v304
    %v2084 = vunpack.c.l.b16 %v305
    %v2085 = vunpack.c.h.b16 %v305
    %v2086 = vunpack.c.l.b16 %v306
    %v2087 = vunpack.c.h.b16 %v306
    %v2088 = vunpack.c.l.b16 %v307
    %v2089 = vunpack.c.h.b16 %v307
    %v2090 = vunpack.c.l.b16 %v308
    %v2091 = vunpack.c.h.b16 %v308
    %v2092 = vunpack.c.l.b16 %v309
    %v2093 = vunpack.c.h.b16 %v309
    %v2094 = vunpack.c.l.b16 %v310
    %v2095 = vunpack.c.h.b16 %v310
    %v2096 = vunpack.c.l.b16 %v311
    %v2097 = vunpack.c.h.b16 %v311
    %v2098 = vunpack.c.l.b16 %v312
    %v2099 = vunpack.c.h.b16 %v312
    %v2100 = vunpack.c.l.b16 %v313
    %v2101 = vunpack.c.h.b16 %v313
    %v2102 = vunpack.c.l.b16 %v314
    %v2103 = vunpack.c.h.b16 %v314
    %v2104 = vunpack.c.l.b16 %v315
    %v2105 = vunpack.c.h.b16 %v315
    %v2106 = vunpack.c.l.b16 %v316
    %v2107 = vunpack.c.h.b16 %v316
    %v2108 = vunpack.c.l.b16 %v317
    %v2109 = vunpack.c.h.b16 %v317
    %v2110 = vunpack.c.l.b16 %v318
    %v2111 = vunpack.c.h.b16 %v318
    %v2112 = vunpack.c.l.b16 %v319
    %v2113 = vunpack.c.h.b16 %v319
    %v2114 = vunpack.c.l.b16 %v320
    %v2115 = vunpack.c.h.b16 %v320
    %v2116 = vunpack.c.l.b16 %v321
    %v2117 = vunpack.c.h.b16 %v321
    %v2118 = vunpack.c.l.b16 %v322
    %v2119 = vunpack.c.h.b16 %v322
    %v2120 = vunpack.c.l.b16 %v323
    %v2121 = vunpack.c.h.b16 %v323
    %v2122 = vunpack.c.l.b16 %v324
    %v2123 = vunpack.c.h.b16 %v324
    %v2124 = vunpack.c.l.b16 %v325
    %v2125 = vunpack.c.h.b16 %v325
    %v2126 = vunpack.c.l.b16 %v326
    %v2127 = vunpack.c.h.b16 %v326
    %v2128 = vunpack.c.l.b16 %v327
    %v2129 = vunpack.c.h.b16 %v327
    %v2130 = vunpack.c.l.b16 %v328
    %v2131 = vunpack.c.h.b16 %v328
    %v2132 = vunpack.c.l.b16 %v329
    %v2133 = vunpack.c.h.b16 %v329
    %v2134 = vunpack.c.l.b16 %v330
    %v2135 = vunpack.c.h.b16 %v330
    %v2136 = vunpack.c.l.b16 %v331
    %v2137 = vunpack.c.h.b16 %v331
    %v2138 = vunpack.c.l.b16 %v332
    %v2139 = vunpack.c.h.b16 %v332
    %v2140 = vunpack.c.l.b16 %v333
    %v2141 = vunpack.c.h.b16 %v333
    %v2142 = vunpack.c.l.b16 %v334
    %v2143 = vunpack.c.h.b16 %v334
    %v2144 = vunpack.c.l.b16 %v335
    %v2145 = vunpack.c.h.b16 %v335
    %v2146 = vunpack.c.l.b16 %v336
    %v2147 = vunpack.c.h.b16 %v336
    %v2148 = vunpack.c.l.b16 %v337
    %v2149 = vunpack.c.h.b16 %v337
    %v2150 = vunpack.c.l.b16 %v338
    %v2151 = vunpack.c.h.b16 %v338
    %v2152 = vunpack.c.l.b16 %v339
    %v2153 = vunpack.c.h.b16 %v339
    %v2154 = vunpack.c.l.b16 %v340
    %v2155 = vunpack.c.h.b16 %v340
    %v2156 = vunpack.c.l.b16 %v341
    %v2157 = vunpack.c.h.b16 %v341
    %v2158 = vunpack.c.l.b16 %v342
    %v2159 = vunpack.c.h.b16 %v342
    %v2160 = vunpack.c.l.b16 %v343
    %v2161 = vunpack.c.h.b16 %v343
    %v2162 = vunpack.c.l.b16 %v344
    %v2163 = vunpack.c.h.b16 %v344
    %v2164 = vunpack.c.l.b16 %v345
    %v2165 = vunpack.c.h.b16 %v345
    %v2166 = vunpack.c.l.b16 %v346
    %v2167 = vunpack.c.h.b16 %v346
    %v2168 = vunpack.c.l.b16 %v347
    %v2169 = vunpack.c.h.b16 %v347
    %v2170 = vunpack.c.l.b16 %v348
    %v2171 = vunpack.c.h.b16 %v348
    %v2172 = vunpack.c.l.b16 %v349
    %v2173 = vunpack.c.h.b16 %v349
    %v2174 = vunpack.c.l.b16 %v350
    %v2175 = vunpack.c.h.b16 %v350
    %v2176 = vunpack.c.l.b16 %v351
    %v2177 = vunpack.c.h.b16 %v351
    %v2178 = vunpack.c.l.b16 %v352
    %v2179 = vunpack.c.h.b16 %v352
    %v2180 = vunpack.c.l.b16 %v353
    %v2181 = vunpack.c.h.b16 %v353
    %v2182 = vunpack.c.l.b16 %v354
    %v2183 = vunpack.c.h.b16 %v354
    %v2184 = vunpack.c.l.b16 %v355
    %v2185 = vunpack.c.h.b16 %v355
    %v2186 = vunpack.c.l.b16 %v356
    %v2187 = vunpack.c.h.b16 %v356
    %v2188 = vunpack.c.l.b16 %v357
    %v2189 = vunpack.c.h.b16 %v357
    %v2190 = vunpack.c.l.b16 %v358
    %v2191 = vunpack.c.h.b16 %v358
    %v2192 = vunpack.c.l.b16 %v359
    %v2193 = vunpack.c.h.b16 %v359
    %v2194 = vunpack.c.l.b16 %v360
    %v2195 = vunpack.c.h.b16 %v360
    %v2196 = vunpack.c.l.b16 %v361
    %v2197 = vunpack.c.h.b16 %v361
    %v2198 = vunpack.c.l.b16 %v362
    %v2199 = vunpack.c.h.b16 %v362
    %v2200 = vunpack.c.l.b16 %v363
    %v2201 = vunpack.c.h.b16 %v363
    %v2202 = vunpack.c.l.b16 %v364
    %v2203 = vunpack.c.h.b16 %v364
    %v2204 = vunpack.c.l.b16 %v365
    %v2205 = vunpack.c.h.b16 %v365
    %v2206 = vunpack.c.l.b16 %v366
    %v2207 = vunpack.c.h.b16 %v366
    %v2208 = vunpack.c.l.b16 %v367
    %v2209 = vunpack.c.h.b16 %v367
    %v2210 = vunpack.c.l.b16 %v368
    %v2211 = vunpack.c.h.b16 %v368
    %v2212 = vunpack.c.l.b16 %v369
    %v2213 = vunpack.c.h.b16 %v369
    %v2214 = vunpack.c.l.b16 %v370
    %v2215 = vunpack.c.h.b16 %v370
    %v2216 = vunpack.c.l.b16 %v371
    %v2217 = vunpack.c.h.b16 %v371
    %v2218 = vunpack.c.l.b16 %v372
    %v2219 = vunpack.c.h.b16 %v372
    %v2220 = vunpack.c.l.b16 %v373
    %v2221 = vunpack.c.h.b16 %v373
    %v2222 = vunpack.c.l.b16 %v374
    %v2223 = vunpack.c.h.b16 %v374
    %v2224 = vunpack.c.l.b16 %v375
    %v2225 = vunpack.c.h.b16 %v375
    %v2226 = vunpack.c.l.b16 %v376
    %v2227 = vunpack.c.h.b16 %v376
    %v2228 = vunpack.c.l.b16 %v377
    %v2229 = vunpack.c.h.b16 %v377
    %v2230 = vunpack.c.l.b16 %v378
    %v2231 = vunpack.c.h.b16 %v378
    %v2232 = vunpack.c.l.b16 %v379
    %v2233 = vunpack.c.h.b16 %v379
    %v2234 = vunpack.c.l.b16 %v380
    %v2235 = vunpack.c.h.b16 %v380
    %v2236 = vunpack.c.l.b16 %v381
    %v2237 = vunpack.c.h.b16 %v381
    %v2238 = vunpack.c.l.b16 %v382
    %v2239 = vunpack.c.h.b16 %v382
    %v2240 = vunpack.c.l.b16 %v383
    %v2241 = vunpack.c.h.b16 %v383
    %v2242 = vunpack.c.l.b16 %v384
    %v2243 = vunpack.c.h.b16 %v384
    %v2244 = vunpack.c.l.b16 %v385
    %v2245 = vunpack.c.h.b16 %v385
    %v2246 = vunpack.c.l.b16 %v386
    %v2247 = vunpack.c.h.b16 %v386
    %v2248 = vunpack.c.l.b16 %v387
    %v2249 = vunpack.c.h.b16 %v387
    %v2250 = vunpack.c.l.b16 %v388
    %v2251 = vunpack.c.h.b16 %v388
    %v2252 = vunpack.c.l.b16 %v389
    %v2253 = vunpack.c.h.b16 %v389
    %v2254 = vunpack.c.l.b16 %v390
    %v2255 = vunpack.c.h.b16 %v390
    %v2256 = vunpack.c.l.b16 %v391
    %v2257 = vunpack.c.h.b16 %v391
    %v2258 = vunpack.c.l.b16 %v392
    %v2259 = vunpack.c.h.b16 %v392
    %v2260 = vunpack.c.l.b16 %v393
    %v2261 = vunpack.c.h.b16 %v393
    %v2262 = vunpack.c.l.b16 %v394
    %v2263 = vunpack.c.h.b16 %v394
    %v2264 = vunpack.c.l.b16 %v395
    %v2265 = vunpack.c.h.b16 %v395
    %v2266 = vunpack.c.l.b16 %v396
    %v2267 = vunpack.c.h.b16 %v396
    %v2268 = vunpack.c.l.b16 %v397
    %v2269 = vunpack.c.h.b16 %v397
    %v2270 = vunpack.c.l.b16 %v398
    %v2271 = vunpack.c.h.b16 %v398
    %v2272 = vunpack.c.l.b16 %v399
    %v2273 = vunpack.c.h.b16 %v399
    %v2274 = vunpack.c.l.b16 %v400
    %v2275 = vunpack.c.h.b16 %v400
    %v2276 = vunpack.c.l.b16 %v401
    %v2277 = vunpack.c.h.b16 %v401
    %v2278 = vunpack.c.l.b16 %v402
    %v2279 = vunpack.c.h.b16 %v402
    %v2280 = vunpack.c.l.b16 %v403
    %v2281 = vunpack.c.h.b16 %v403
    %v2282 = vunpack.c.l.b16 %v404
    %v2283 = vunpack.c.h.b16 %v404
    %v2284 = vunpack.c.l.b16 %v405
    %v2285 = vunpack.c.h.b16 %v405
    %v2286 = vunpack.c.l.b16 %v406
    %v2287 = vunpack.c.h.b16 %v406
    %v2288 = vunpack.c.l.b16 %v407
    %v2289 = vunpack.c.h.b16 %v407
    %v2290 = vunpack.c.l.b16 %v408
    %v2291 = vunpack.c.h.b16 %v408
    %v2292 = vunpack.c.l.b16 %v409
    %v2293 = vunpack.c.h.b16 %v409
    %v2294 = vunpack.c.l.b16 %v410
    %v2295 = vunpack.c.h.b16 %v410
    %v2296 = vunpack.c.l.b16 %v411
    %v2297 = vunpack.c.h.b16 %v411
    %v2298 = vunpack.c.l.b16 %v412
    %v2299 = vunpack.c.h.b16 %v412
    %v2300 = vunpack.c.l.b16 %v413
    %v2301 = vunpack.c.h.b16 %v413
    %v2302 = vunpack.c.l.b16 %v414
    %v2303 = vunpack.c.h.b16 %v414
    %v2304 = vunpack.c.l.b16 %v415
    %v2305 = vunpack.c.h.b16 %v415
    %v2306 = vunpack.c.l.b16 %v416
    %v2307 = vunpack.c.h.b16 %v416
    %v2308 = vunpack.c.l.b16 %v417
    %v2309 = vunpack.c.h.b16 %v417
    %v2310 = vunpack.c.l.b16 %v418
    %v2311 = vunpack.c.h.b16 %v418
    %v2312 = vunpack.c.l.b16 %v419
    %v2313 = vunpack.c.h.b16 %v419
    %v2314 = vunpack.c.l.b16 %v420
    %v2315 = vunpack.c.h.b16 %v420
    %v2316 = vunpack.c.l.b16 %v421
    %v2317 = vunpack.c.h.b16 %v421
    %v2318 = vunpack.c.l.b16 %v422
    %v2319 = vunpack.c.h.b16 %v422
    %v2320 = vunpack.c.l.b16 %v423
    %v2321 = vunpack.c.h.b16 %v423
    %v2322 = vunpack.c.l.b16 %v424
    %v2323 = vunpack.c.h.b16 %v424
    %v2324 = vunpack.c.l.b16 %v425
    %v2325 = vunpack.c.h.b16 %v425
    %v2326 = vunpack.c.l.b16 %v426
    %v2327 = vunpack.c.h.b16 %v426
    %v2328 = vunpack.c.l.b16 %v427
    %v2329 = vunpack.c.h.b16 %v427
    %v2330 = vunpack.c.l.b16 %v428
    %v2331 = vunpack.c.h.b16 %v428
    %v2332 = vunpack.c.l.b16 %v429
    %v2333 = vunpack.c.h.b16 %v429
    %v2334 = vunpack.c.l.b16 %v430
    %v2335 = vunpack.c.h.b16 %v430
    %v2336 = vunpack.c.l.b16 %v431
    %v2337 = vunpack.c.h.b16 %v431
    %v2338 = vunpack.c.l.b16 %v432
    %v2339 = vunpack.c.h.b16 %v432
    %v2340 = vunpack.c.l.b16 %v433
    %v2341 = vunpack.c.h.b16 %v433
    %v2342 = vunpack.c.l.b16 %v434
    %v2343 = vunpack.c.h.b16 %v434
    %v2344 = vunpack.c.l.b16 %v435
    %v2345 = vunpack.c.h.b16 %v435
    %v2346 = vunpack.c.l.b16 %v436
    %v2347 = vunpack.c.h.b16 %v436
    %v2348 = vunpack.c.l.b16 %v437
    %v2349 = vunpack.c.h.b16 %v437
    %v2350 = vunpack.c.l.b16 %v438
    %v2351 = vunpack.c.h.b16 %v438
    %v2352 = vunpack.c.l.b16 %v439
    %v2353 = vunpack.c.h.b16 %v439
    %v2354 = vunpack.c.l.b16 %v440
    %v2355 = vunpack.c.h.b16 %v440
    %v2356 = vunpack.c.l.b16 %v441
    %v2357 = vunpack.c.h.b16 %v441
    %v2358 = vunpack.c.l.b16 %v442
    %v2359 = vunpack.c.h.b16 %v442
    %v2360 = vunpack.c.l.b16 %v443
    %v2361 = vunpack.c.h.b16 %v443
    %v2362 = vunpack.c.l.b16 %v444
    %v2363 = vunpack.c.h.b16 %v444
    %v2364 = vunpack.c.l.b16 %v445
    %v2365 = vunpack.c.h.b16 %v445
    %v2366 = vunpack.c.l.b16 %v446
    %v2367 = vunpack.c.h.b16 %v446
    %v2368 = vunpack.c.l.b16 %v447
    %v2369 = vunpack.c.h.b16 %v447
    %v2370 = vunpack.c.l.b16 %v448
    %v2371 = vunpack.c.h.b16 %v448
    %v2372 = vunpack.c.l.b16 %v449
    %v2373 = vunpack.c.h.b16 %v449
    %v2374 = vunpack.c.l.b16 %v450
    %v2375 = vunpack.c.h.b16 %v450
    %v2376 = vunpack.c.l.b16 %v451
    %v2377 = vunpack.c.h.b16 %v451
    %v2378 = vunpack.c.l.b16 %v452
    %v2379 = vunpack.c.h.b16 %v452
    %v2380 = vunpack.c.l.b16 %v453
    %v2381 = vunpack.c.h.b16 %v453
    %v2382 = vunpack.c.l.b16 %v454
    %v2383 = vunpack.c.h.b16 %v454
    %v2384 = vunpack.c.l.b16 %v455
    %v2385 = vunpack.c.h.b16 %v455
    %v2386 = vunpack.c.l.b16 %v456
    %v2387 = vunpack.c.h.b16 %v456
    %v2388 = vunpack.c.l.b16 %v457
    %v2389 = vunpack.c.h.b16 %v457
    %v2390 = vunpack.c.l.b16 %v458
    %v2391 = vunpack.c.h.b16 %v458
    %v2392 = vunpack.c.l.b16 %v459
    %v2393 = vunpack.c.h.b16 %v459
    %v2394 = vunpack.c.l.b16 %v460
    %v2395 = vunpack.c.h.b16 %v460
    %v2396 = vunpack.c.l.b16 %v461
    %v2397 = vunpack.c.h.b16 %v461
    %v2398 = vunpack.c.l.b16 %v462
    %v2399 = vunpack.c.h.b16 %v462
    %v2400 = vunpack.c.l.b16 %v463
    %v2401 = vunpack.c.h.b16 %v463
    %v2402 = vunpack.c.l.b16 %v464
    %v2403 = vunpack.c.h.b16 %v464
    %v2404 = vunpack.c.l.b16 %v465
    %v2405 = vunpack.c.h.b16 %v465
    %v2406 = vunpack.c.l.b16 %v466
    %v2407 = vunpack.c.h.b16 %v466
    %v2408 = vunpack.c.l.b16 %v467
    %v2409 = vunpack.c.h.b16 %v467
    %v2410 = vunpack.c.l.b16 %v468
    %v2411 = vunpack.c.h.b16 %v468
    %v2412 = vunpack.c.l.b16 %v469
    %v2413 = vunpack.c.h.b16 %v469
    %v2414 = vunpack.c.l.b16 %v470
    %v2415 = vunpack.c.h.b16 %v470
    %v2416 = vunpack.c.l.b16 %v471
    %v2417 = vunpack.c.h.b16 %v471
    %v2418 = vunpack.c.l.b16 %v472
    %v2419 = vunpack.c.h.b16 %v472
    %v2420 = vunpack.c.l.b16 %v473
    %v2421 = vunpack.c.h.b16 %v473
    %v2422 = vunpack.c.l.b16 %v474
    %v2423 = vunpack.c.h.b16 %v474
    %v2424 = vunpack.c.l.b16 %v475
    %v2425 = vunpack.c.h.b16 %v475
    %v2426 = vunpack.c.l.b16 %v476
    %v2427 = vunpack.c.h.b16 %v476
    %v2428 = vunpack.c.l.b16 %v477
    %v2429 = vunpack.c.h.b16 %v477
    %v2430 = vunpack.c.l.b16 %v478
    %v2431 = vunpack.c.h.b16 %v478
    %v2432 = vunpack.c.l.b16 %v479
    %v2433 = vunpack.c.h.b16 %v479
    %v2434 = vunpack.c.l.b16 %v480
    %v2435 = vunpack.c.h.b16 %v480
    %v2436 = vunpack.c.l.b16 %v481
    %v2437 = vunpack.c.h.b16 %v481
    %v2438 = vunpack.c.l.b16 %v482
    %v2439 = vunpack.c.h.b16 %v482
    %v2440 = vunpack.c.l.b16 %v483
    %v2441 = vunpack.c.h.b16 %v483
    %v2442 = vunpack.c.l.b16 %v484
    %v2443 = vunpack.c.h.b16 %v484
    %v2444 = vunpack.c.l.b16 %v485
    %v2445 = vunpack.c.h.b16 %v485
    %v2446 = vunpack.c.l.b16 %v486
    %v2447 = vunpack.c.h.b16 %v486
    %v2448 = vunpack.c.l.b16 %v487
    %v2449 = vunpack.c.h.b16 %v487
    %v2450 = vunpack.c.l.b16 %v488
    %v2451 = vunpack.c.h.b16 %v488
    %v2452 = vunpack.c.l.b16 %v489
    %v2453 = vunpack.c.h.b16 %v489
    %v2454 = vunpack.c.l.b16 %v490
    %v2455 = vunpack.c.h.b16 %v490
    %v2456 = vunpack.c.l.b16 %v491
    %v2457 = vunpack.c.h.b16 %v491
    %v2458 = vunpack.c.l.b16 %v492
    %v2459 = vunpack.c.h.b16 %v492
    %v2460 = vunpack.c.l.b16 %v493
    %v2461 = vunpack.c.h.b16 %v493
    %v2462 = vunpack.c.l.b16 %v494
    %v2463 = vunpack.c.h.b16 %v494
    %v2464 = vunpack.c.l.b16 %v495
    %v2465 = vunpack.c.h.b16 %v495
    %v2466 = vunpack.c.l.b16 %v496
    %v2467 = vunpack.c.h.b16 %v496
    %v2468 = vunpack.c.l.b16 %v497
    %v2469 = vunpack.c.h.b16 %v497
    %v2470 = vunpack.c.l.b16 %v498
    %v2471 = vunpack.c.h.b16 %v498
    %v2472 = vunpack.c.l.b16 %v499
    %v2473 = vunpack.c.h.b16 %v499
    %v2474 = vunpack.c.l.b16 %v500
    %v2475 = vunpack.c.h.b16 %v500
    %v2476 = vunpack.c.l.b16 %v501
    %v2477 = vunpack.c.h.b16 %v501
    %v2478 = vunpack.c.l.b16 %v502
    %v2479 = vunpack.c.h.b16 %v502
    %v2480 = vunpack.c.l.b16 %v503
    %v2481 = vunpack.c.h.b16 %v503
    %v2482 = vunpack.c.l.b16 %v504
    %v2483 = vunpack.c.h.b16 %v504
    %v2484 = vunpack.c.l.b16 %v505
    %v2485 = vunpack.c.h.b16 %v505
    %v2486 = vunpack.c.l.b16 %v506
    %v2487 = vunpack.c.h.b16 %v506
    %v2488 = vunpack.c.l.b16 %v507
    %v2489 = vunpack.c.h.b16 %v507
    %v2490 = vunpack.c.l.b16 %v508
    %v2491 = vunpack.c.h.b16 %v508
    %v2492 = vunpack.c.l.b16 %v509
    %v2493 = vunpack.c.h.b16 %v509
    %v2494 = vunpack.c.l.b16 %v510
    %v2495 = vunpack.c.h.b16 %v510
    %v2496 = vunpack.c.l.b16 %v511
    %v2497 = vunpack.c.h.b16 %v511
    %v2498 = vunpack.c.l.b16 %v512
    %v2499 = vunpack.c.h.b16 %v512
    %v2500 = vunpack.c.l.b16 %v513
    %v2501 = vunpack.c.h.b16 %v513
    %v2502 = vunpack.c.l.b16 %v514
    %v2503 = vunpack.c.h.b16 %v514
    %v2504 = vunpack.c.l.b16 %v515
    %v2505 = vunpack.c.h.b16 %v515
    %v2506 = vunpack.c.l.b16 %v516
    %v2507 = vunpack.c.h.b16 %v516
    %v2508 = vunpack.c.l.b16 %v517
    %v2509 = vunpack.c.h.b16 %v517
    %v2510 = vunpack.c.l.b16 %v518
    %v2511 = vunpack.c.h.b16 %v518
    %v2512 = vunpack.c.l.b16 %v519
    %v2513 = vunpack.c.h.b16 %v519
    %v2514 = vunpack.c.l.b16 %v520
    %v2515 = vunpack.c.h.b16 %v520
    %v2516 = vunpack.c.l.b16 %v521
    %v2517 = vunpack.c.h.b16 %v521
    %v2518 = vunpack.c.l.b16 %v522
    %v2519 = vunpack.c.h.b16 %v522
    %v2520 = vunpack.c.l.b16 %v523
    %v2521 = vunpack.c.h.b16 %v523
    %v2522 = vunpack.c.l.b16 %v524
    %v2523 = vunpack.c.h.b16 %v524
    %v2524 = vunpack.c.l.b16 %v525
    %v2525 = vunpack.c.h.b16 %v525
    %v2526 = vunpack.c.l.b16 %v526
    %v2527 = vunpack.c.h.b16 %v526
    %v2528 = vunpack.c.l.b16 %v527
    %v2529 = vunpack.c.h.b16 %v527
    %v2530 = vunpack.c.l.b16 %v528
    %v2531 = vunpack.c.h.b16 %v528
    %v2532 = vunpack.c.l.b16 %v529
    %v2533 = vunpack.c.h.b16 %v529
    %v2534 = vunpack.c.l.b16 %v530
    %v2535 = vunpack.c.h.b16 %v530
    %v2536 = vunpack.c.l.b16 %v531
    %v2537 = vunpack.c.h.b16 %v531
    %v2538 = vunpack.c.l.b16 %v532
    %v2539 = vunpack.c.h.b16 %v532
    %v2540 = vunpack.c.l.b16 %v533
    %v2541 = vunpack.c.h.b16 %v533
    %v2542 = vunpack.c.l.b16 %v534
    %v2543 = vunpack.c.h.b16 %v534
    %v2544 = vunpack.c.l.b16 %v535
    %v2545 = vunpack.c.h.b16 %v535
    %v2546 = vunpack.c.l.b16 %v536
    %v2547 = vunpack.c.h.b16 %v536
    %v2548 = vunpack.c.l.b16 %v537
    %v2549 = vunpack.c.h.b16 %v537
    %v2550 = vunpack.c.l.b16 %v538
    %v2551 = vunpack.c.h.b16 %v538
    %v2552 = vunpack.c.l.b16 %v539
    %v2553 = vunpack.c.h.b16 %v539
    %v2554 = vunpack.c.l.b16 %v540
    %v2555 = vunpack.c.h.b16 %v540
    %v2556 = vunpack.c.l.b16 %v541
    %v2557 = vunpack.c.h.b16 %v541
    %v2558 = vunpack.c.l.b16 %v542
    %v2559 = vunpack.c.h.b16 %v542
    %v2560 = vunpack.c.l.b16 %v543
    %v2561 = vunpack.c.h.b16 %v543
    %v2562 = vunpack.c.l.b16 %v544
    %v2563 = vunpack.c.h.b16 %v544
    %v2564 = vunpack.c.l.b16 %v545
    %v2565 = vunpack.c.h.b16 %v545
    %v2566 = vunpack.c.l.b16 %v546
    %v2567 = vunpack.c.h.b16 %v546
    %v2568 = vunpack.c.l.b16 %v547
    %v2569 = vunpack.c.h.b16 %v547
    %v2570 = vunpack.c.l.b16 %v548
    %v2571 = vunpack.c.h.b16 %v548
    %v2572 = vunpack.c.l.b16 %v549
    %v2573 = vunpack.c.h.b16 %v549
    %v2574 = vunpack.c.l.b16 %v550
    %v2575 = vunpack.c.h.b16 %v550
    %v2576 = vunpack.c.l.b16 %v551
    %v2577 = vunpack.c.h.b16 %v551
    %v2578 = vunpack.c.l.b16 %v552
    %v2579 = vunpack.c.h.b16 %v552
    %v2580 = vunpack.c.l.b16 %v553
    %v2581 = vunpack.c.h.b16 %v553
    %v2582 = vunpack.c.l.b16 %v554
    %v2583 = vunpack.c.h.b16 %v554
    %v2584 = vunpack.c.l.b16 %v555
    %v2585 = vunpack.c.h.b16 %v555
    %v2586 = vunpack.c.l.b16 %v556
    %v2587 = vunpack.c.h.b16 %v556
    %v2588 = vunpack.c.l.b16 %v557
    %v2589 = vunpack.c.h.b16 %v557
    %v2590 = vunpack.c.l.b16 %v558
    %v2591 = vunpack.c.h.b16 %v558
    %v2592 = vunpack.c.l.b16 %v559
    %v2593 = vunpack.c.h.b16 %v559
    %v2594 = vunpack.c.l.b16 %v560
    %v2595 = vunpack.c.h.b16 %v560
    %v2596 = vunpack.c.l.b16 %v561
    %v2597 = vunpack.c.h.b16 %v561
    %v2598 = vunpack.c.l.b16 %v562
    %v2599 = vunpack.c.h.b16 %v562
    %v2600 = vunpack.c.l.b16 %v563
    %v2601 = vunpack.c.h.b16 %v563
    %v2602 = vunpack.c.l.b16 %v564
    %v2603 = vunpack.c.h.b16 %v564
    %v2604 = vunpack.c.l.b16 %v565
    %v2605 = vunpack.c.h.b16 %v565
    %v2606 = vunpack.c.l.b16 %v566
    %v2607 = vunpack.c.h.b16 %v566
    %v2608 = vunpack.c.l.b16 %v567
    %v2609 = vunpack.c.h.b16 %v567
    %v2610 = vunpack.c.l.b16 %v568
    %v2611 = vunpack.c.h.b16 %v568
    %v2612 = vunpack.c.l.b16 %v569
    %v2613 = vunpack.c.h.b16 %v569
    %v2614 = vunpack.c.l.b16 %v570
    %v2615 = vunpack.c.h.b16 %v570
    %v2616 = vunpack.c.l.b16 %v571
    %v2617 = vunpack.c.h.b16 %v571
    %v2618 = vunpack.c.l.b16 %v572
    %v2619 = vunpack.c.h.b16 %v572
    %v2620 = vunpack.c.l.b16 %v573
    %v2621 = vunpack.c.h.b16 %v573
    %v2622 = vunpack.c.l.b16 %v574
    %v2623 = vunpack.c.h.b16 %v574
    %v2624 = vunpack.c.l.b16 %v575
    %v2625 = vunpack.c.h.b16 %v575
    %v2626 = vunpack.c.l.b16 %v576
    %v2627 = vunpack.c.h.b16 %v576
    %v2628 = vunpack.c.l.b16 %v577
    %v2629 = vunpack.c.h.b16 %v577
    %v2630 = vunpack.c.l.b16 %v578
    %v2631 = vunpack.c.h.b16 %v578
    %v2632 = vunpack.c.l.b16 %v579
    %v2633 = vunpack.c.h.b16 %v579
    %v2634 = vunpack.c.l.b16 %v580
    %v2635 = vunpack.c.h.b16 %v580
    %v2636 = vunpack.c.l.b16 %v581
    %v2637 = vunpack.c.h.b16 %v581
    %v2638 = vunpack.c.l.b16 %v582
    %v2639 = vunpack.c.h.b16 %v582
    %v2640 = vunpack.c.l.b16 %v583
    %v2641 = vunpack.c.h.b16 %v583
    %v2642 = vunpack.c.l.b16 %v584
    %v2643 = vunpack.c.h.b16 %v584
    %v2644 = vunpack.c.l.b16 %v585
    %v2645 = vunpack.c.h.b16 %v585
    %v2646 = vunpack.c.l.b16 %v586
    %v2647 = vunpack.c.h.b16 %v586
    %v2648 = vunpack.c.l.b16 %v587
    %v2649 = vunpack.c.h.b16 %v587
    %v2650 = vunpack.c.l.b16 %v588
    %v2651 = vunpack.c.h.b16 %v588
    %v2652 = vunpack.c.l.b16 %v589
    %v2653 = vunpack.c.h.b16 %v589
    %v2654 = vunpack.c.l.b16 %v590
    %v2655 = vunpack.c.h.b16 %v590
    %v2656 = vunpack.c.l.b16 %v591
    %v2657 = vunpack.c.h.b16 %v591
    %v2658 = vunpack.c.l.b16 %v592
    %v2659 = vunpack.c.h.b16 %v592
    %v2660 = vunpack.c.l.b16 %v593
    %v2661 = vunpack.c.h.b16 %v593
    %v2662 = vunpack.c.l.b16 %v594
    %v2663 = vunpack.c.h.b16 %v594
    %v2664 = vunpack.c.l.b16 %v595
    %v2665 = vunpack.c.h.b16 %v595
    %v2666 = vunpack.c.l.b16 %v596
    %v2667 = vunpack.c.h.b16 %v596
    %v2668 = vunpack.c.l.b16 %v597
    %v2669 = vunpack.c.h.b16 %v597
    %v2670 = vunpack.c.l.b16 %v598
    %v2671 = vunpack.c.h.b16 %v598
    %v2672 = vunpack.c.l.b16 %v599
    %v2673 = vunpack.c.h.b16 %v599
    %v2674 = vunpack.c.l.b16 %v600
    %v2675 = vunpack.c.h.b16 %v600
    %v2676 = vunpack.c.l.b16 %v601
    %v2677 = vunpack.c.h.b16 %v601
    %v2678 = vunpack.c.l.b16 %v602
    %v2679 = vunpack.c.h.b16 %v602
    %v2680 = vunpack.c.l.b16 %v603
    %v2681 = vunpack.c.h.b16 %v603
    %v2682 = vunpack.c.l.b16 %v604
    %v2683 = vunpack.c.h.b16 %v604
    %v2684 = vunpack.c.l.b16 %v605
    %v2685 = vunpack.c.h.b16 %v605
    %v2686 = vunpack.c.l.b16 %v606
    %v2687 = vunpack.c.h.b16 %v606
    %v2688 = vunpack.c.l.b16 %v607
    %v2689 = vunpack.c.h.b16 %v607
    %v2690 = vunpack.c.l.b16 %v608
    %v2691 = vunpack.c.h.b16 %v608
    %v2692 = vunpack.c.l.b16 %v609
    %v2693 = vunpack.c.h.b16 %v609
    %v2694 = vunpack.c.l.b16 %v610
    %v2695 = vunpack.c.h.b16 %v610
    %v2696 = vunpack.c.l.b16 %v611
    %v2697 = vunpack.c.h.b16 %v611
    %v2698 = vunpack.c.l.b16 %v612
    %v2699 = vunpack.c.h.b16 %v612
    %v2700 = vunpack.c.l.b16 %v613
    %v2701 = vunpack.c.h.b16 %v613
    %v2702 = vunpack.c.l.b16 %v614
    %v2703 = vunpack.c.h.b16 %v614
    %v2704 = vunpack.c.l.b16 %v615
    %v2705 = vunpack.c.h.b16 %v615
    %v2706 = vunpack.c.l.b16 %v616
    %v2707 = vunpack.c.h.b16 %v616
    %v2708 = vunpack.c.l.b16 %v617
    %v2709 = vunpack.c.h.b16 %v617
    %v2710 = vunpack.c.l.b16 %v618
    %v2711 = vunpack.c.h.b16 %v618
    %v2712 = vunpack.c.l.b16 %v619
    %v2713 = vunpack.c.h.b16 %v619
    %v2714 = vunpack.c.l.b16 %v620
    %v2715 = vunpack.c.h.b16 %v620
    %v2716 = vunpack.c.l.b16 %v621
    %v2717 = vunpack.c.h.b16 %v621
    %v2718 = vunpack.c.l.b16 %v622
    %v2719 = vunpack.c.h.b16 %v622
    %v2720 = vunpack.c.l.b16 %v623
    %v2721 = vunpack.c.h.b16 %v623
    %v2722 = vunpack.c.l.b16 %v624
    %v2723 = vunpack.c.h.b16 %v624
    %v2724 = vunpack.c.l.b16 %v625
    %v2725 = vunpack.c.h.b16 %v625
    %v2726 = vunpack.c.l.b16 %v626
    %v2727 = vunpack.c.h.b16 %v626
    %v2728 = vunpack.c.l.b16 %v627
    %v2729 = vunpack.c.h.b16 %v627
    %v2730 = vunpack.c.l.b16 %v628
    %v2731 = vunpack.c.h.b16 %v628
    %v2732 = vunpack.c.l.b16 %v629
    %v2733 = vunpack.c.h.b16 %v629
    %v2734 = vunpack.c.l.b16 %v630
    %v2735 = vunpack.c.h.b16 %v630
    %v2736 = vunpack.c.l.b16 %v631
    %v2737 = vunpack.c.h.b16 %v631
    %v2738 = vunpack.c.l.b16 %v632
    %v2739 = vunpack.c.h.b16 %v632
    %v2740 = vunpack.c.l.b16 %v633
    %v2741 = vunpack.c.h.b16 %v633
    %v2742 = vunpack.c.l.b16 %v634
    %v2743 = vunpack.c.h.b16 %v634
    %v2744 = vunpack.c.l.b16 %v635
    %v2745 = vunpack.c.h.b16 %v635
    %v2746 = vunpack.c.l.b16 %v636
    %v2747 = vunpack.c.h.b16 %v636
    %v2748 = vunpack.c.l.b16 %v637
    %v2749 = vunpack.c.h.b16 %v637
    %v2750 = vunpack.c.l.b16 %v638
    %v2751 = vunpack.c.h.b16 %v638
    %v2752 = vunpack.c.l.b16 %v639
    %v2753 = vunpack.c.h.b16 %v639
    %v2754 = vunpack.c.l.b16 %v640
    %v2755 = vunpack.c.h.b16 %v640
    %v2756 = vunpack.c.l.b16 %v641
    %v2757 = vunpack.c.h.b16 %v641
    %v2758 = vunpack.c.l.b16 %v642
    %v2759 = vunpack.c.h.b16 %v642
    %v2760 = vunpack.c.l.b16 %v643
    %v2761 = vunpack.c.h.b16 %v643
    %v2762 = vunpack.c.l.b16 %v644
    %v2763 = vunpack.c.h.b16 %v644
    %v2764 = vunpack.c.l.b16 %v645
    %v2765 = vunpack.c.h.b16 %v645
    %v2766 = vunpack.c.l.b16 %v646
    %v2767 = vunpack.c.h.b16 %v646
    %v2768 = vunpack.c.l.b16 %v647
    %v2769 = vunpack.c.h.b16 %v647
    %v2770 = vunpack.c.l.b16 %v648
    %v2771 = vunpack.c.h.b16 %v648
    %v2772 = vunpack.c.l.b16 %v649
    %v2773 = vunpack.c.h.b16 %v649
    %v2774 = vunpack.c.l.b16 %v650
    %v2775 = vunpack.c.h.b16 %v650
    %v2776 = vunpack.c.l.b16 %v651
    %v2777 = vunpack.c.h.b16 %v651
    %v2778 = vunpack.c.l.b16 %v652
    %v2779 = vunpack.c.h.b16 %v652
    %v2780 = vunpack.c.l.b16 %v653
    %v2781 = vunpack.c.h.b16 %v653
    %v2782 = vunpack.c.l.b16 %v654
    %v2783 = vunpack.c.h.b16 %v654
    %v2784 = vunpack.c.l.b16 %v655
    %v2785 = vunpack.c.h.b16 %v655
    %v2786 = vunpack.c.l.b16 %v656
    %v2787 = vunpack.c.h.b16 %v656
    %v2788 = vunpack.c.l.b16 %v657
    %v2789 = vunpack.c.h.b16 %v657
    %v2790 = vunpack.c.l.b16 %v658
    %v2791 = vunpack.c.h.b16 %v658
    %v2792 = vunpack.c.l.b16 %v659
    %v2793 = vunpack.c.h.b16 %v659
    %v2794 = vunpack.c.l.b16 %v660
    %v2795 = vunpack.c.h.b16 %v660
    %v2796 = vunpack.c.l.b16 %v661
    %v2797 = vunpack.c.h.b16 %v661
    %v2798 = vunpack.c.l.b16 %v662
    %v2799 = vunpack.c.h.b16 %v662
    %v2800 = vunpack.c.l.b16 %v663
    %v2801 = vunpack.c.h.b16 %v663
    %v2802 = vunpack.c.l.b16 %v664
    %v2803 = vunpack.c.h.b16 %v664
    %v2804 = vunpack.c.l.b16 %v665
    %v2805 = vunpack.c.h.b16 %v665
    %v2806 = vunpack.c.l.b16 %v666
    %v2807 = vunpack.c.h.b16 %v666
    %v2808 = vunpack.c.l.b16 %v667
    %v2809 = vunpack.c.h.b16 %v667
    %v2810 = vunpack.c.l.b16 %v668
    %v2811 = vunpack.c.h.b16 %v668
    %v2812 = vunpack.c.l.b16 %v669
    %v2813 = vunpack.c.h.b16 %v669
    %v2814 = vunpack.c.l.b16 %v670
    %v2815 = vunpack.c.h.b16 %v670
    %v2816 = vunpack.c.l.b16 %v671
    %v2817 = vunpack.c.h.b16 %v671
    %v2818 = vunpack.c.l.b16 %v672
    %v2819 = vunpack.c.h.b16 %v672
    %v2820 = vunpack.c.l.b16 %v673
    %v2821 = vunpack.c.h.b16 %v673
    %v2822 = vunpack.c.l.b16 %v674
    %v2823 = vunpack.c.h.b16 %v674
    %v2824 = vunpack.c.l.b16 %v675
    %v2825 = vunpack.c.h.b16 %v675
    %v2826 = vunpack.c.l.b16 %v676
    %v2827 = vunpack.c.h.b16 %v676
    %v2828 = vunpack.c.l.b16 %v677
    %v2829 = vunpack.c.h.b16 %v677
    %v2830 = vunpack.c.l.b16 %v678
    %v2831 = vunpack.c.h.b16 %v678
    %v2832 = vunpack.c.l.b16 %v679
    %v2833 = vunpack.c.h.b16 %v679
    %v2834 = vunpack.c.l.b16 %v680
    %v2835 = vunpack.c.h.b16 %v680
    %v2836 = vunpack.c.l.b16 %v681
    %v2837 = vunpack.c.h.b16 %v681
    %v2838 = vunpack.c.l.b16 %v682
    %v2839 = vunpack.c.h.b16 %v682
    %v2840 = vunpack.c.l.b16 %v683
    %v2841 = vunpack.c.h.b16 %v683
    %v2842 = vunpack.c.l.b16 %v684
    %v2843 = vunpack.c.h.b16 %v684
    %v2844 = vunpack.c.l.b16 %v685
    %v2845 = vunpack.c.h.b16 %v685
    %v2846 = vunpack.c.l.b16 %v686
    %v2847 = vunpack.c.h.b16 %v686
    %v2848 = vunpack.c.l.b16 %v687
    %v2849 = vunpack.c.h.b16 %v687
    %v2850 = vunpack.c.l.b16 %v688
    %v2851 = vunpack.c.h.b16 %v688
    %v2852 = vunpack.c.l.b16 %v689
    %v2853 = vunpack.c.h.b16 %v689
    %v2854 = vunpack.c.l.b16 %v690
    %v2855 = vunpack.c.h.b16 %v690
    %v2856 = vunpack.c.l.b16 %v691
    %v2857 = vunpack.c.h.b16 %v691
    %v2858 = vunpack.c.l.b16 %v692
    %v2859 = vunpack.c.h.b16 %v692
    %v2860 = vunpack.c.l.b16 %v693
    %v2861 = vunpack.c.h.b16 %v693
    %v2862 = vunpack.c.l.b16 %v694
    %v2863 = vunpack.c.h.b16 %v694
    %v2864 = vunpack.c.l.b16 %v695
    %v2865 = vunpack.c.h.b16 %v695
    %v2866 = vunpack.c.l.b16 %v696
    %v2867 = vunpack.c.h.b16 %v696
    %v2868 = vunpack.c.l.b16 %v697
    %v2869 = vunpack.c.h.b16 %v697
    %v2870 = vunpack.c.l.b16 %v698
    %v2871 = vunpack.c.h.b16 %v698
    %v2872 = vunpack.c.l.b16 %v699
    %v2873 = vunpack.c.h.b16 %v699
    %v2874 = vunpack.c.l.b16 %v700
    %v2875 = vunpack.c.h.b16 %v700
    %v2876 = vunpack.c.l.b16 %v701
    %v2877 = vunpack.c.h.b16 %v701
    %v2878 = vunpack.c.l.b16 %v702
    %v2879 = vunpack.c.h.b16 %v702
    %v2880 = vunpack.c.l.b16 %v703
    %v2881 = vunpack.c.h.b16 %v703
    %v2882 = vunpack.c.l.b16 %v704
    %v2883 = vunpack.c.h.b16 %v704
    %v2884 = vunpack.c.l.b16 %v705
    %v2885 = vunpack.c.h.b16 %v705
    %v2886 = vunpack.c.l.b16 %v706
    %v2887 = vunpack.c.h.b16 %v706
    %v2888 = vunpack.c.l.b16 %v707
    %v2889 = vunpack.c.h.b16 %v707
    %v2890 = vunpack.c.l.b16 %v708
    %v2891 = vunpack.c.h.b16 %v708
    %v2892 = vunpack.c.l.b16 %v709
    %v2893 = vunpack.c.h.b16 %v709
    %v2894 = vunpack.c.l.b16 %v710
    %v2895 = vunpack.c.h.b16 %v710
    %v2896 = vunpack.c.l.b16 %v711
    %v2897 = vunpack.c.h.b16 %v711
    %v2898 = vunpack.c.l.b16 %v712
    %v2899 = vunpack.c.h.b16 %v712
    %v2900 = vunpack.c.l.b16 %v713
    %v2901 = vunpack.c.h.b16 %v713
    %v2902 = vunpack.c.l.b16 %v714
    %v2903 = vunpack.c.h.b16 %v714
    %v2904 = vunpack.c.l.b16 %v715
    %v2905 = vunpack.c.h.b16 %v715
    %v2906 = vunpack.c.l.b16 %v716
    %v2907 = vunpack.c.h.b16 %v716
    %v2908 = vunpack.c.l.b16 %v717
    %v2909 = vunpack.c.h.b16 %v717
    %v2910 = vunpack.c.l.b16 %v718
    %v2911 = vunpack.c.h.b16 %v718
    %v2912 = vunpack.c.l.b16 %v719
    %v2913 = vunpack.c.h.b16 %v719
    %v2914 = vunpack.c.l.b16 %v720
    %v2915 = vunpack.c.h.b16 %v720
    %v2916 = vunpack.c.l.b16 %v721
    %v2917 = vunpack.c.h.b16 %v721
    %v2918 = vunpack.c.l.b16 %v722
    %v2919 = vunpack.c.h.b16 %v722
    %v2920 = vunpack.c.l.b16 %v723
    %v2921 = vunpack.c.h.b16 %v723
    %v2922 = vunpack.c.l.b16 %v724
    %v2923 = vunpack.c.h.b16 %v724
    %v2924 = vunpack.c.l.b16 %v725
    %v2925 = vunpack.c.h.b16 %v725
    %v2926 = vunpack.c.l.b16 %v726
    %v2927 = vunpack.c.h.b16 %v726
    %v2928 = vunpack.c.l.b16 %v727
    %v2929 = vunpack.c.h.b16 %v727
    %v2930 = vunpack.c.l.b16 %v728
    %v2931 = vunpack.c.h.b16 %v728
    %v2932 = vunpack.c.l.b16 %v729
    %v2933 = vunpack.c.h.b16 %v729
    %v2934 = vunpack.c.l.b16 %v730
    %v2935 = vunpack.c.h.b16 %v730
    %v2936 = vunpack.c.l.b16 %v731
    %v2937 = vunpack.c.h.b16 %v731
    %v2938 = vunpack.c.l.b16 %v732
    %v2939 = vunpack.c.h.b16 %v732
    %v2940 = vunpack.c.l.b16 %v733
    %v2941 = vunpack.c.h.b16 %v733
    %v2942 = vunpack.c.l.b16 %v734
    %v2943 = vunpack.c.h.b16 %v734
    %v2944 = vunpack.c.l.b16 %v735
    %v2945 = vunpack.c.h.b16 %v735
    %v2946 = vunpack.c.l.b16 %v736
    %v2947 = vunpack.c.h.b16 %v736
    %v2948 = vunpack.c.l.b16 %v737
    %v2949 = vunpack.c.h.b16 %v737
    %v2950 = vunpack.c.l.b16 %v738
    %v2951 = vunpack.c.h.b16 %v738
    %v2952 = vunpack.c.l.b16 %v739
    %v2953 = vunpack.c.h.b16 %v739
    %v2954 = vunpack.c.l.b16 %v740
    %v2955 = vunpack.c.h.b16 %v740
    %v2956 = vunpack.c.l.b16 %v741
    %v2957 = vunpack.c.h.b16 %v741
    %v2958 = vunpack.c.l.b16 %v742
    %v2959 = vunpack.c.h.b16 %v742
    %v2960 = vunpack.c.l.b16 %v743
    %v2961 = vunpack.c.h.b16 %v743
    %v2962 = vunpack.c.l.b16 %v744
    %v2963 = vunpack.c.h.b16 %v744
    %v2964 = vunpack.c.l.b16 %v745
    %v2965 = vunpack.c.h.b16 %v745
    %v2966 = vunpack.c.l.b16 %v746
    %v2967 = vunpack.c.h.b16 %v746
    %v2968 = vunpack.c.l.b16 %v747
    %v2969 = vunpack.c.h.b16 %v747
    %v2970 = vunpack.c.l.b16 %v748
    %v2971 = vunpack.c.h.b16 %v748
    %v2972 = vunpack.c.l.b16 %v749
    %v2973 = vunpack.c.h.b16 %v749
    %v2974 = vunpack.c.l.b16 %v750
    %v2975 = vunpack.c.h.b16 %v750
    %v2976 = vunpack.c.l.b16 %v751
    %v2977 = vunpack.c.h.b16 %v751
    %v2978 = vunpack.c.l.b16 %v752
    %v2979 = vunpack.c.h.b16 %v752
    %v2980 = vunpack.c.l.b16 %v753
    %v2981 = vunpack.c.h.b16 %v753
    %v2982 = vunpack.c.l.b16 %v754
    %v2983 = vunpack.c.h.b16 %v754
    %v2984 = vunpack.c.l.b16 %v755
    %v2985 = vunpack.c.h.b16 %v755
    %v2986 = vunpack.c.l.b16 %v756
    %v2987 = vunpack.c.h.b16 %v756
    %v2988 = vunpack.c.l.b16 %v757
    %v2989 = vunpack.c.h.b16 %v757
    %v2990 = vunpack.c.l.b16 %v758
    %v2991 = vunpack.c.h.b16 %v758
    %v2992 = vunpack.c.l.b16 %v759
    %v2993 = vunpack.c.h.b16 %v759
    %v2994 = vunpack.c.l.b16 %v760
    %v2995 = vunpack.c.h.b16 %v760
    %v2996 = vunpack.c.l.b16 %v761
    %v2997 = vunpack.c.h.b16 %v761
    %v2998 = vunpack.c.l.b16 %v762
    %v2999 = vunpack.c.h.b16 %v762
    %v3000 = vunpack.c.l.b16 %v763
    %v3001 = vunpack.c.h.b16 %v763
    %v3002 = vunpack.c.l.b16 %v764
    %v3003 = vunpack.c.h.b16 %v764
    %v3004 = vunpack.c.l.b16 %v765
    %v3005 = vunpack.c.h.b16 %v765
    %v3006 = vunpack.c.l.b16 %v766
    %v3007 = vunpack.c.h.b16 %v766
    %v3008 = vunpack.c.l.b16 %v767
    %v3009 = vunpack.c.h.b16 %v767
    %v3010 = vunpack.c.l.b16 %v768
    %v3011 = vunpack.c.h.b16 %v768
    %v3012 = vunpack.c.l.b16 %v769
    %v3013 = vunpack.c.h.b16 %v769
    %v3014 = vunpack.c.l.b16 %v770
    %v3015 = vunpack.c.h.b16 %v770
    %v3016 = vunpack.c.l.b16 %v771
    %v3017 = vunpack.c.h.b16 %v771
    %v3018 = vunpack.c.l.b16 %v772
    %v3019 = vunpack.c.h.b16 %v772
    %v3020 = vunpack.c.l.b16 %v773
    %v3021 = vunpack.c.h.b16 %v773
    %v3022 = vunpack.c.l.b16 %v774
    %v3023 = vunpack.c.h.b16 %v774
    %v3024 = vunpack.c.l.b16 %v775
    %v3025 = vunpack.c.h.b16 %v775
    %v3026 = vunpack.c.l.b16 %v776
    %v3027 = vunpack.c.h.b16 %v776
    %v3028 = vunpack.c.l.b16 %v777
    %v3029 = vunpack.c.h.b16 %v777
    %v3030 = vunpack.c.l.b16 %v778
    %v3031 = vunpack.c.h.b16 %v778
    %v3032 = vunpack.c.l.b16 %v779
    %v3033 = vunpack.c.h.b16 %v779
    %v3034 = vunpack.c.l.b16 %v780
    %v3035 = vunpack.c.h.b16 %v780
    %v3036 = vunpack.c.l.b16 %v781
    %v3037 = vunpack.c.h.b16 %v781
    %v3038 = vunpack.c.l.b16 %v782
    %v3039 = vunpack.c.h.b16 %v782
    %v3040 = vunpack.c.l.b16 %v783
    %v3041 = vunpack.c.h.b16 %v783
    %v3042 = vunpack.c.l.b16 %v784
    %v3043 = vunpack.c.h.b16 %v784
    %v3044 = vunpack.c.l.b16 %v785
    %v3045 = vunpack.c.h.b16 %v785
    %v3046 = vunpack.c.l.b16 %v786
    %v3047 = vunpack.c.h.b16 %v786
    %v3048 = vunpack.c.l.b16 %v787
    %v3049 = vunpack.c.h.b16 %v787
    %v3050 = vunpack.c.l.b16 %v788
    %v3051 = vunpack.c.h.b16 %v788
    %v3052 = vunpack.c.l.b16 %v789
    %v3053 = vunpack.c.h.b16 %v789
    %v3054 = vunpack.c.l.b16 %v790
    %v3055 = vunpack.c.h.b16 %v790
    %v3056 = vunpack.c.l.b16 %v791
    %v3057 = vunpack.c.h.b16 %v791
    %v3058 = vunpack.c.l.b16 %v792
    %v3059 = vunpack.c.h.b16 %v792
    %v3060 = vunpack.c.l.b16 %v793
    %v3061 = vunpack.c.h.b16 %v793
    %v3062 = vunpack.c.l.b16 %v794
    %v3063 = vunpack.c.h.b16 %v794
    %v3064 = vunpack.c.l.b16 %v795
    %v3065 = vunpack.c.h.b16 %v795
    %v3066 = vunpack.c.l.b16 %v796
    %v3067 = vunpack.c.h.b16 %v796
    %v3068 = vunpack.c.l.b16 %v797
    %v3069 = vunpack.c.h.b16 %v797
    %v3070 = vunpack.c.l.b16 %v798
    %v3071 = vunpack.c.h.b16 %v798
    %v3072 = vunpack.c.l.b16 %v799
    %v3073 = vunpack.c.h.b16 %v799
    %v3074 = vunpack.c.l.b16 %v800
    %v3075 = vunpack.c.h.b16 %v800
    %v3076 = vunpack.c.l.b16 %v801
    %v3077 = vunpack.c.h.b16 %v801
    %v3078 = vunpack.c.l.b16 %v802
    %v3079 = vunpack.c.h.b16 %v802
    %v3080 = vunpack.c.l.b16 %v803
    %v3081 = vunpack.c.h.b16 %v803
    %v3082 = vunpack.c.l.b16 %v804
    %v3083 = vunpack.c.h.b16 %v804
    %v3084 = vunpack.c.l.b16 %v805
    %v3085 = vunpack.c.h.b16 %v805
    %v3086 = vunpack.c.l.b16 %v806
    %v3087 = vunpack.c.h.b16 %v806
    %v3088 = vunpack.c.l.b16 %v807
    %v3089 = vunpack.c.h.b16 %v807
    %v3090 = vunpack.c.l.b16 %v808
    %v3091 = vunpack.c.h.b16 %v808
    %v3092 = vunpack.c.l.b16 %v809
    %v3093 = vunpack.c.h.b16 %v809
    %v3094 = vunpack.c.l.b16 %v810
    %v3095 = vunpack.c.h.b16 %v810
    %v3096 = vunpack.c.l.b16 %v811
    %v3097 = vunpack.c.h.b16 %v811
    %v3098 = vunpack.c.l.b16 %v812
    %v3099 = vunpack.c.h.b16 %v812
    %v3100 = vunpack.c.l.b16 %v813
    %v3101 = vunpack.c.h.b16 %v813
    %v3102 = vunpack.c.l.b16 %v814
    %v3103 = vunpack.c.h.b16 %v814
    %v3104 = vunpack.c.l.b16 %v815
    %v3105 = vunpack.c.h.b16 %v815
    %v3106 = vunpack.c.l.b16 %v816
    %v3107 = vunpack.c.h.b16 %v816
    %v3108 = vunpack.c.l.b16 %v817
    %v3109 = vunpack.c.h.b16 %v817
    %v3110 = vunpack.c.l.b16 %v818
    %v3111 = vunpack.c.h.b16 %v818
    %v3112 = vunpack.c.l.b16 %v819
    %v3113 = vunpack.c.h.b16 %v819
    %v3114 = vunpack.c.l.b16 %v820
    %v3115 = vunpack.c.h.b16 %v820
    %v3116 = vunpack.c.l.b16 %v821
    %v3117 = vunpack.c.h.b16 %v821
    %v3118 = vunpack.c.l.b16 %v822
    %v3119 = vunpack.c.h.b16 %v822
    %v3120 = vunpack.c.l.b16 %v823
    %v3121 = vunpack.c.h.b16 %v823
    %v3122 = vunpack.c.l.b16 %v824
    %v3123 = vunpack.c.h.b16 %v824
    %v3124 = vunpack.c.l.b16 %v825
    %v3125 = vunpack.c.h.b16 %v825
    %v3126 = vunpack.c.l.b16 %v826
    %v3127 = vunpack.c.h.b16 %v826
    %v3128 = vunpack.c.l.b16 %v827
    %v3129 = vunpack.c.h.b16 %v827
    %v3130 = vunpack.c.l.b16 %v828
    %v3131 = vunpack.c.h.b16 %v828
    %v3132 = vunpack.c.l.b16 %v829
    %v3133 = vunpack.c.h.b16 %v829
    %v3134 = vunpack.c.l.b16 %v830
    %v3135 = vunpack.c.h.b16 %v830
    %v3136 = vunpack.c.l.b16 %v831
    %v3137 = vunpack.c.h.b16 %v831
    %v3138 = vunpack.c.l.b16 %v832
    %v3139 = vunpack.c.h.b16 %v832
    %v3140 = vunpack.c.l.b16 %v833
    %v3141 = vunpack.c.h.b16 %v833
    %v3142 = vunpack.c.l.b16 %v834
    %v3143 = vunpack.c.h.b16 %v834
    %v3144 = vunpack.c.l.b16 %v835
    %v3145 = vunpack.c.h.b16 %v835
    %v3146 = vunpack.c.l.b16 %v836
    %v3147 = vunpack.c.h.b16 %v836
    %v3148 = vunpack.c.l.b16 %v837
    %v3149 = vunpack.c.h.b16 %v837
    %v3150 = vunpack.c.l.b16 %v838
    %v3151 = vunpack.c.h.b16 %v838
    %v3152 = vunpack.c.l.b16 %v839
    %v3153 = vunpack.c.h.b16 %v839
    %v3154 = vunpack.c.l.b16 %v840
    %v3155 = vunpack.c.h.b16 %v840
    %v3156 = vunpack.c.l.b16 %v841
    %v3157 = vunpack.c.h.b16 %v841
    %v3158 = vunpack.c.l.b16 %v842
    %v3159 = vunpack.c.h.b16 %v842
    %v3160 = vunpack.c.l.b16 %v843
    %v3161 = vunpack.c.h.b16 %v843
    %v3162 = vpack.c.b16 %v1632, %v1626
    %v3163 = vpack.c.b16 %v1633, %v1627
    %v3164 = vpack.c.b16 %v1634, %v1628
    %v3165 = vpack.c.b16 %v1635, %v1629
    %v3166 = vpack.c.b16 %v1636, %v1630
    %v3167 = vpack.c.b16 %v1637, %v1631
    %v3168 = vpack.c.b16 %v1644, %v1638
    %v3169 = vpack.c.b16 %v1645, %v1639
    %v3170 = vpack.c.b16 %v1646, %v1640
    %v3171 = vpack.c.b16 %v1647, %v1641
    %v3172 = vpack.c.b16 %v1648, %v1642
    %v3173 = vpack.c.b16 %v1649, %v1643
    %v3174 = vpack.c.b16 %v1656, %v1650
    %v3175 = vpack.c.b16 %v1657, %v1651
    %v3176 = vpack.c.b16 %v1658, %v1652
    %v3177 = vpack.c.b16 %v1659, %v1653
    %v3178 = vpack.c.b16 %v1660, %v1654
    %v3179 = vpack.c.b16 %v1661, %v1655
    %v3180 = vpack.c.b16 %v1668, %v1662
    %v3181 = vpack.c.b16 %v1669, %v1663
    %v3182 = vpack.c.b16 %v1670, %v1664
    %v3183 = vpack.c.b16 %v1671, %v1665
    %v3184 = vpack.c.b16 %v1672, %v1666
    %v3185 = vpack.c.b16 %v1673, %v1667
    %v3186 = vpack.c.b16 %v1680, %v1674
    %v3187 = vpack.c.b16 %v1681, %v1675
    %v3188 = vpack.c.b16 %v1682, %v1676
    %v3189 = vpack.c.b16 %v1683, %v1677
    %v3190 = vpack.c.b16 %v1684, %v1678
    %v3191 = vpack.c.b16 %v1685, %v1679
    %v3192 = vpack.c.b16 %v1692, %v1686
    %v3193 = vpack.c.b16 %v1693, %v1687
    %v3194 = vpack.c.b16 %v1694, %v1688
    %v3195 = vpack.c.b16 %v1695, %v1689
    %v3196 = vpack.c.b16 %v1696, %v1690
    %v3197 = vpack.c.b16 %v1697, %v1691
    %v3198 = vpack.c.b16 %v1704, %v1698
    %v3199 = vpack.c.b16 %v1705, %v1699
    %v3200 = vpack.c.b16 %v1706, %v1700
    %v3201 = vpack.c.b16 %v1707, %v1701
    %v3202 = vpack.c.b16 %v1708, %v1702
    %v3203 = vpack.c.b16 %v1709, %v1703
    %v3204 = vpack.c.b16 %v1716, %v1710
    %v3205 = vpack.c.b16 %v1717, %v1711
    %v3206 = vpack.c.b16 %v1718, %v1712
    %v3207 = vpack.c.b16 %v1719, %v1713
    %v3208 = vpack.c.b16 %v1720, %v1714
    %v3209 = vpack.c.b16 %v1721, %v1715
    %v3210 = vpack.c.b16 %v1728, %v1722
    %v3211 = vpack.c.b16 %v1729, %v1723
    %v3212 = vpack.c.b16 %v1730, %v1724
    %v3213 = vpack.c.b16 %v1731, %v1725
    %v3214 = vpack.c.b16 %v1732, %v1726
    %v3215 = vpack.c.b16 %v1733, %v1727
    %v3216 = vpack.c.b16 %v1740, %v1734
    %v3217 = vpack.c.b16 %v1741, %v1735
    %v3218 = vpack.c.b16 %v1742, %v1736
    %v3219 = vpack.c.b16 %v1743, %v1737
    %v3220 = vpack.c.b16 %v1744, %v1738
    %v3221 = vpack.c.b16 %v1745, %v1739
    %v3222 = vpack.c.b16 %v1752, %v1746
    %v3223 = vpack.c.b16 %v1753, %v1747
    %v3224 = vpack.c.b16 %v1754, %v1748
    %v3225 = vpack.c.b16 %v1755, %v1749
    %v3226 = vpack.c.b16 %v1756, %v1750
    %v3227 = vpack.c.b16 %v1757, %v1751
    %v3228 = vpack.c.b16 %v1764, %v1758
    %v3229 = vpack.c.b16 %v1765, %v1759
    %v3230 = vpack.c.b16 %v1766, %v1760
    %v3231 = vpack.c.b16 %v1767, %v1761
    %v3232 = vpack.c.b16 %v1768, %v1762
    %v3233 = vpack.c.b16 %v1769, %v1763
    %v3234 = vpack.c.b16 %v1776, %v1770
    %v3235 = vpack.c.b16 %v1777, %v1771
    %v3236 = vpack.c.b16 %v1778, %v1772
    %v3237 = vpack.c.b16 %v1779, %v1773
    %v3238 = vpack.c.b16 %v1780, %v1774
    %v3239 = vpack.c.b16 %v1781, %v1775
    %v3240 = vpack.c.b16 %v1788, %v1782
    %v3241 = vpack.c.b16 %v1789, %v1783
    %v3242 = vpack.c.b16 %v1790, %v1784
    %v3243 = vpack.c.b16 %v1791, %v1785
    %v3244 = vpack.c.b16 %v1792, %v1786
    %v3245 = vpack.c.b16 %v1793, %v1787
    %v3246 = vpack.c.b16 %v1800, %v1794
    %v3247 = vpack.c.b16 %v1801, %v1795
    %v3248 = vpack.c.b16 %v1802, %v1796
    %v3249 = vpack.c.b16 %v1803, %v1797
    %v3250 = vpack.c.b16 %v1804, %v1798
    %v3251 = vpack.c.b16 %v1805, %v1799
    %v3252 = vpack.c.b16 %v1812, %v1806
    %v3253 = vpack.c.b16 %v1813, %v1807
    %v3254 = vpack.c.b16 %v1814, %v1808
    %v3255 = vpack.c.b16 %v1815, %v1809
    %v3256 = vpack.c.b16 %v1816, %v1810
    %v3257 = vpack.c.b16 %v1817, %v1811
    %v3258 = vpack.c.b16 %v1824, %v1818
    %v3259 = vpack.c.b16 %v1825, %v1819
    %v3260 = vpack.c.b16 %v1826, %v1820
    %v3261 = vpack.c.b16 %v1827, %v1821
    %v3262 = vpack.c.b16 %v1828, %v1822
    %v3263 = vpack.c.b16 %v1829, %v1823
    %v3264 = vpack.c.b16 %v1836, %v1830
    %v3265 = vpack.c.b16 %v1837, %v1831
    %v3266 = vpack.c.b16 %v1838, %v1832
    %v3267 = vpack.c.b16 %v1839, %v1833
    %v3268 = vpack.c.b16 %v1840, %v1834
    %v3269 = vpack.c.b16 %v1841, %v1835
    %v3270 = vpack.c.b16 %v1848, %v1842
    %v3271 = vpack.c.b16 %v1849, %v1843
    %v3272 = vpack.c.b16 %v1850, %v1844
    %v3273 = vpack.c.b16 %v1851, %v1845
    %v3274 = vpack.c.b16 %v1852, %v1846
    %v3275 = vpack.c.b16 %v1853, %v1847
    %v3276 = vpack.c.b16 %v1860, %v1854
    %v3277 = vpack.c.b16 %v1861, %v1855
    %v3278 = vpack.c.b16 %v1862, %v1856
    %v3279 = vpack.c.b16 %v1863, %v1857
    %v3280 = vpack.c.b16 %v1864, %v1858
    %v3281 = vpack.c.b16 %v1865, %v1859
    %v3282 = vpack.c.b16 %v1872, %v1866
    %v3283 = vpack.c.b16 %v1873, %v1867
    %v3284 = vpack.c.b16 %v1874, %v1868
    %v3285 = vpack.c.b16 %v1875, %v1869
    %v3286 = vpack.c.b16 %v1876, %v1870
    %v3287 = vpack.c.b16 %v1877, %v1871
    %v3288 = vpack.c.b16 %v1884, %v1878
    %v3289 = vpack.c.b16 %v1885, %v1879
    %v3290 = vpack.c.b16 %v1886, %v1880
    %v3291 = vpack.c.b16 %v1887, %v1881
    %v3292 = vpack.c.b16 %v1888, %v1882
    %v3293 = vpack.c.b16 %v1889, %v1883
    %v3294 = vpack.c.b16 %v1896, %v1890
    %v3295 = vpack.c.b16 %v1897, %v1891
    %v3296 = vpack.c.b16 %v1898, %v1892
    %v3297 = vpack.c.b16 %v1899, %v1893
    %v3298 = vpack.c.b16 %v1900, %v1894
    %v3299 = vpack.c.b16 %v1901, %v1895
    %v3300 = vpack.c.b16 %v1908, %v1902
    %v3301 = vpack.c.b16 %v1909, %v1903
    %v3302 = vpack.c.b16 %v1910, %v1904
    %v3303 = vpack.c.b16 %v1911, %v1905
    %v3304 = vpack.c.b16 %v1912, %v1906
    %v3305 = vpack.c.b16 %v1913, %v1907
    %v3306 = vpack.c.b16 %v1920, %v1914
    %v3307 = vpack.c.b16 %v1921, %v1915
    %v3308 = vpack.c.b16 %v1922, %v1916
    %v3309 = vpack.c.b16 %v1923, %v1917
    %v3310 = vpack.c.b16 %v1924, %v1918
    %v3311 = vpack.c.b16 %v1925, %v1919
    %v3312 = vpack.c.b16 %v1932, %v1926
    %v3313 = vpack.c.b16 %v1933, %v1927
    %v3314 = vpack.c.b16 %v1934, %v1928
    %v3315 = vpack.c.b16 %v1935, %v1929
    %v3316 = vpack.c.b16 %v1936, %v1930
    %v3317 = vpack.c.b16 %v1937, %v1931
    %v3318 = vpack.c.b16 %v1944, %v1938
    %v3319 = vpack.c.b16 %v1945, %v1939
    %v3320 = vpack.c.b16 %v1946, %v1940
    %v3321 = vpack.c.b16 %v1947, %v1941
    %v3322 = vpack.c.b16 %v1948, %v1942
    %v3323 = vpack.c.b16 %v1949, %v1943
    %v3324 = vpack.c.b16 %v1956, %v1950
    %v3325 = vpack.c.b16 %v1957, %v1951
    %v3326 = vpack.c.b16 %v1958, %v1952
    %v3327 = vpack.c.b16 %v1959, %v1953
    %v3328 = vpack.c.b16 %v1960, %v1954
    %v3329 = vpack.c.b16 %v1961, %v1955
    %v3330 = vpack.c.b16 %v1968, %v1962
    %v3331 = vpack.c.b16 %v1969, %v1963
    %v3332 = vpack.c.b16 %v1970, %v1964
    %v3333 = vpack.c.b16 %v1971, %v1965
    %v3334 = vpack.c.b16 %v1972, %v1966
    %v3335 = vpack.c.b16 %v1973, %v1967
    %v3336 = vpack.c.b16 %v1980, %v1974
    %v3337 = vpack.c.b16 %v1981, %v1975
    %v3338 = vpack.c.b16 %v1982, %v1976
    %v3339 = vpack.c.b16 %v1983, %v1977
    %v3340 = vpack.c.b16 %v1984, %v1978
    %v3341 = vpack.c.b16 %v1985, %v1979
    %v3342 = vpack.c.b16 %v1992, %v1986
    %v3343 = vpack.c.b16 %v1993, %v1987
    %v3344 = vpack.c.b16 %v1994, %v1988
    %v3345 = vpack.c.b16 %v1995, %v1989
    %v3346 = vpack.c.b16 %v1996, %v1990
    %v3347 = vpack.c.b16 %v1997, %v1991
    %v3348 = vpack.c.b16 %v2004, %v1998
    %v3349 = vpack.c.b16 %v2005, %v1999
    %v3350 = vpack.c.b16 %v2006, %v2000
    %v3351 = vpack.c.b16 %v2007, %v2001
    %v3352 = vpack.c.b16 %v2008, %v2002
    %v3353 = vpack.c.b16 %v2009, %v2003
    %v3354 = vpack.c.b16 %v2016, %v2010
    %v3355 = vpack.c.b16 %v2017, %v2011
    %v3356 = vpack.c.b16 %v2018, %v2012
    %v3357 = vpack.c.b16 %v2019, %v2013
    %v3358 = vpack.c.b16 %v2020, %v2014
    %v3359 = vpack.c.b16 %v2021, %v2015
    %v3360 = vpack.c.b16 %v2028, %v2022
    %v3361 = vpack.c.b16 %v2029, %v2023
    %v3362 = vpack.c.b16 %v2030, %v2024
    %v3363 = vpack.c.b16 %v2031, %v2025
    %v3364 = vpack.c.b16 %v2032, %v2026
    %v3365 = vpack.c.b16 %v2033, %v2027
    %v3366 = vpack.c.b16 %v2040, %v2034
    %v3367 = vpack.c.b16 %v2041, %v2035
    %v3368 = vpack.c.b16 %v2042, %v2036
    %v3369 = vpack.c.b16 %v2043, %v2037
    %v3370 = vpack.c.b16 %v2044, %v2038
    %v3371 = vpack.c.b16 %v2045, %v2039
    %v3372 = vpack.c.b16 %v2052, %v2046
    %v3373 = vpack.c.b16 %v2053, %v2047
    %v3374 = vpack.c.b16 %v2054, %v2048
    %v3375 = vpack.c.b16 %v2055, %v2049
    %v3376 = vpack.c.b16 %v2056, %v2050
    %v3377 = vpack.c.b16 %v2057, %v2051
    %v3378 = vpack.c.b16 %v2064, %v2058
    %v3379 = vpack.c.b16 %v2065, %v2059
    %v3380 = vpack.c.b16 %v2066, %v2060
    %v3381 = vpack.c.b16 %v2067, %v2061
    %v3382 = vpack.c.b16 %v2068, %v2062
    %v3383 = vpack.c.b16 %v2069, %v2063
    %v3384 = vpack.c.b16 %v2076, %v2070
    %v3385 = vpack.c.b16 %v2077, %v2071
    %v3386 = vpack.c.b16 %v2078, %v2072
    %v3387 = vpack.c.b16 %v2079, %v2073
    %v3388 = vpack.c.b16 %v2080, %v2074
    %v3389 = vpack.c.b16 %v2081, %v2075
    %v3390 = vpack.c.b16 %v2088, %v2082
    %v3391 = vpack.c.b16 %v2089, %v2083
    %v3392 = vpack.c.b16 %v2090, %v2084
    %v3393 = vpack.c.b16 %v2091, %v2085
    %v3394 = vpack.c.b16 %v2092, %v2086
    %v3395 = vpack.c.b16 %v2093, %v2087
    %v3396 = vpack.c.b16 %v2100, %v2094
    %v3397 = vpack.c.b16 %v2101, %v2095
    %v3398 = vpack.c.b16 %v2102, %v2096
    %v3399 = vpack.c.b16 %v2103, %v2097
    %v3400 = vpack.c.b16 %v2104, %v2098
    %v3401 = vpack.c.b16 %v2105, %v2099
    %v3402 = vpack.c.b16 %v2112, %v2106
    %v3403 = vpack.c.b16 %v2113, %v2107
    %v3404 = vpack.c.b16 %v2114, %v2108
    %v3405 = vpack.c.b16 %v2115, %v2109
    %v3406 = vpack.c.b16 %v2116, %v2110
    %v3407 = vpack.c.b16 %v2117, %v2111
    %v3408 = vpack.c.b16 %v2124, %v2118
    %v3409 = vpack.c.b16 %v2125, %v2119
    %v3410 = vpack.c.b16 %v2126, %v2120
    %v3411 = vpack.c.b16 %v2127, %v2121
    %v3412 = vpack.c.b16 %v2128, %v2122
    %v3413 = vpack.c.b16 %v2129, %v2123
    %v3414 = vpack.c.b16 %v2136, %v2130
    %v3415 = vpack.c.b16 %v2137, %v2131
    %v3416 = vpack.c.b16 %v2138, %v2132
    %v3417 = vpack.c.b16 %v2139, %v2133
    %v3418 = vpack.c.b16 %v2140, %v2134
    %v3419 = vpack.c.b16 %v2141, %v2135
    %v3420 = vpack.c.b16 %v2148, %v2142
    %v3421 = vpack.c.b16 %v2149, %v2143
    %v3422 = vpack.c.b16 %v2150, %v2144
    %v3423 = vpack.c.b16 %v2151, %v2145
    %v3424 = vpack.c.b16 %v2152, %v2146
    %v3425 = vpack.c.b16 %v2153, %v2147
    %v3426 = vpack.c.b16 %v2160, %v2154
    %v3427 = vpack.c.b16 %v2161, %v2155
    %v3428 = vpack.c.b16 %v2162, %v2156
    %v3429 = vpack.c.b16 %v2163, %v2157
    %v3430 = vpack.c.b16 %v2164, %v2158
    %v3431 = vpack.c.b16 %v2165, %v2159
    %v3432 = vpack.c.b16 %v2172, %v2166
    %v3433 = vpack.c.b16 %v2173, %v2167
    %v3434 = vpack.c.b16 %v2174, %v2168
    %v3435 = vpack.c.b16 %v2175, %v2169
    %v3436 = vpack.c.b16 %v2176, %v2170
    %v3437 = vpack.c.b16 %v2177, %v2171
    %v3438 = vpack.c.b16 %v2184, %v2178
    %v3439 = vpack.c.b16 %v2185, %v2179
    %v3440 = vpack.c.b16 %v2186, %v2180
    %v3441 = vpack.c.b16 %v2187, %v2181
    %v3442 = vpack.c.b16 %v2188, %v2182
    %v3443 = vpack.c.b16 %v2189, %v2183
    %v3444 = vpack.c.b16 %v2196, %v2190
    %v3445 = vpack.c.b16 %v2197, %v2191
    %v3446 = vpack.c.b16 %v2198, %v2192
    %v3447 = vpack.c.b16 %v2199, %v2193
    %v3448 = vpack.c.b16 %v2200, %v2194
    %v3449 = vpack.c.b16 %v2201, %v2195
    %v3450 = vpack.c.b16 %v2208, %v2202
    %v3451 = vpack.c.b16 %v2209, %v2203
    %v3452 = vpack.c.b16 %v2210, %v2204
    %v3453 = vpack.c.b16 %v2211, %v2205
    %v3454 = vpack.c.b16 %v2212, %v2206
    %v3455 = vpack.c.b16 %v2213, %v2207
    %v3456 = vpack.c.b16 %v2220, %v2214
    %v3457 = vpack.c.b16 %v2221, %v2215
    %v3458 = vpack.c.b16 %v2222, %v2216
    %v3459 = vpack.c.b16 %v2223, %v2217
    %v3460 = vpack.c.b16 %v2224, %v2218
    %v3461 = vpack.c.b16 %v2225, %v2219
    %v3462 = vpack.c.b16 %v2232, %v2226
    %v3463 = vpack.c.b16 %v2233, %v2227
    %v3464 = vpack.c.b16 %v2234, %v2228
    %v3465 = vpack.c.b16 %v2235, %v2229
    %v3466 = vpack.c.b16 %v2236, %v2230
    %v3467 = vpack.c.b16 %v2237, %v2231
    %v3468 = vpack.c.b16 %v2244, %v2238
    %v3469 = vpack.c.b16 %v2245, %v2239
    %v3470 = vpack.c.b16 %v2246, %v2240
    %v3471 = vpack.c.b16 %v2247, %v2241
    %v3472 = vpack.c.b16 %v2248, %v2242
    %v3473 = vpack.c.b16 %v2249, %v2243
    %v3474 = vpack.c.b16 %v2256, %v2250
    %v3475 = vpack.c.b16 %v2257, %v2251
    %v3476 = vpack.c.b16 %v2258, %v2252
    %v3477 = vpack.c.b16 %v2259, %v2253
    %v3478 = vpack.c.b16 %v2260, %v2254
    %v3479 = vpack.c.b16 %v2261, %v2255
    %v3480 = vpack.c.b16 %v2268, %v2262
    %v3481 = vpack.c.b16 %v2269, %v2263
    %v3482 = vpack.c.b16 %v2270, %v2264
    %v3483 = vpack.c.b16 %v2271, %v2265
    %v3484 = vpack.c.b16 %v2272, %v2266
    %v3485 = vpack.c.b16 %v2273, %v2267
    %v3486 = vpack.c.b16 %v2280, %v2274
    %v3487 = vpack.c.b16 %v2281, %v2275
    %v3488 = vpack.c.b16 %v2282, %v2276
    %v3489 = vpack.c.b16 %v2283, %v2277
    %v3490 = vpack.c.b16 %v2284, %v2278
    %v3491 = vpack.c.b16 %v2285, %v2279
    %v3492 = vpack.c.b16 %v2292, %v2286
    %v3493 = vpack.c.b16 %v2293, %v2287
    %v3494 = vpack.c.b16 %v2294, %v2288
    %v3495 = vpack.c.b16 %v2295, %v2289
    %v3496 = vpack.c.b16 %v2296, %v2290
    %v3497 = vpack.c.b16 %v2297, %v2291
    %v3498 = vpack.c.b16 %v2304, %v2298
    %v3499 = vpack.c.b16 %v2305, %v2299
    %v3500 = vpack.c.b16 %v2306, %v2300
    %v3501 = vpack.c.b16 %v2307, %v2301
    %v3502 = vpack.c.b16 %v2308, %v2302
    %v3503 = vpack.c.b16 %v2309, %v2303
    %v3504 = vpack.c.b16 %v2316, %v2310
    %v3505 = vpack.c.b16 %v2317, %v2311
    %v3506 = vpack.c.b16 %v2318, %v2312
    %v3507 = vpack.c.b16 %v2319, %v2313
    %v3508 = vpack.c.b16 %v2320, %v2314
    %v3509 = vpack.c.b16 %v2321, %v2315
    %v3510 = vpack.c.b16 %v2328, %v2322
    %v3511 = vpack.c.b16 %v2329, %v2323
    %v3512 = vpack.c.b16 %v2330, %v2324
    %v3513 = vpack.c.b16 %v2331, %v2325
    %v3514 = vpack.c.b16 %v2332, %v2326
    %v3515 = vpack.c.b16 %v2333, %v2327
    %v3516 = vpack.c.b16 %v2340, %v2334
    %v3517 = vpack.c.b16 %v2341, %v2335
    %v3518 = vpack.c.b16 %v2342, %v2336
    %v3519 = vpack.c.b16 %v2343, %v2337
    %v3520 = vpack.c.b16 %v2344, %v2338
    %v3521 = vpack.c.b16 %v2345, %v2339
    %v3522 = vpack.c.b16 %v2352, %v2346
    %v3523 = vpack.c.b16 %v2353, %v2347
    %v3524 = vpack.c.b16 %v2354, %v2348
    %v3525 = vpack.c.b16 %v2355, %v2349
    %v3526 = vpack.c.b16 %v2356, %v2350
    %v3527 = vpack.c.b16 %v2357, %v2351
    %v3528 = vpack.c.b16 %v2364, %v2358
    %v3529 = vpack.c.b16 %v2365, %v2359
    %v3530 = vpack.c.b16 %v2366, %v2360
    %v3531 = vpack.c.b16 %v2367, %v2361
    %v3532 = vpack.c.b16 %v2368, %v2362
    %v3533 = vpack.c.b16 %v2369, %v2363
    %v3534 = vpack.c.b16 %v2376, %v2370
    %v3535 = vpack.c.b16 %v2377, %v2371
    %v3536 = vpack.c.b16 %v2378, %v2372
    %v3537 = vpack.c.b16 %v2379, %v2373
    %v3538 = vpack.c.b16 %v2380, %v2374
    %v3539 = vpack.c.b16 %v2381, %v2375
    %v3540 = vpack.c.b16 %v2388, %v2382
    %v3541 = vpack.c.b16 %v2389, %v2383
    %v3542 = vpack.c.b16 %v2390, %v2384
    %v3543 = vpack.c.b16 %v2391, %v2385
    %v3544 = vpack.c.b16 %v2392, %v2386
    %v3545 = vpack.c.b16 %v2393, %v2387
    %v3546 = vpack.c.b16 %v2400, %v2394
    %v3547 = vpack.c.b16 %v2401, %v2395
    %v3548 = vpack.c.b16 %v2402, %v2396
    %v3549 = vpack.c.b16 %v2403, %v2397
    %v3550 = vpack.c.b16 %v2404, %v2398
    %v3551 = vpack.c.b16 %v2405, %v2399
    %v3552 = vpack.c.b16 %v2412, %v2406
    %v3553 = vpack.c.b16 %v2413, %v2407
    %v3554 = vpack.c.b16 %v2414, %v2408
    %v3555 = vpack.c.b16 %v2415, %v2409
    %v3556 = vpack.c.b16 %v2416, %v2410
    %v3557 = vpack.c.b16 %v2417, %v2411
    %v3558 = vpack.c.b16 %v2424, %v2418
    %v3559 = vpack.c.b16 %v2425, %v2419
    %v3560 = vpack.c.b16 %v2426, %v2420
    %v3561 = vpack.c.b16 %v2427, %v2421
    %v3562 = vpack.c.b16 %v2428, %v2422
    %v3563 = vpack.c.b16 %v2429, %v2423
    %v3564 = vpack.c.b16 %v2436, %v2430
    %v3565 = vpack.c.b16 %v2437, %v2431
    %v3566 = vpack.c.b16 %v2438, %v2432
    %v3567 = vpack.c.b16 %v2439, %v2433
    %v3568 = vpack.c.b16 %v2440, %v2434
    %v3569 = vpack.c.b16 %v2441, %v2435
    %v3570 = vpack.c.b16 %v2448, %v2442
    %v3571 = vpack.c.b16 %v2449, %v2443
    %v3572 = vpack.c.b16 %v2450, %v2444
    %v3573 = vpack.c.b16 %v2451, %v2445
    %v3574 = vpack.c.b16 %v2452, %v2446
    %v3575 = vpack.c.b16 %v2453, %v2447
    %v3576 = vpack.c.b16 %v2460, %v2454
    %v3577 = vpack.c.b16 %v2461, %v2455
    %v3578 = vpack.c.b16 %v2462, %v2456
    %v3579 = vpack.c.b16 %v2463, %v2457
    %v3580 = vpack.c.b16 %v2464, %v2458
    %v3581 = vpack.c.b16 %v2465, %v2459
    %v3582 = vpack.c.b16 %v2472, %v2466
    %v3583 = vpack.c.b16 %v2473, %v2467
    %v3584 = vpack.c.b16 %v2474, %v2468
    %v3585 = vpack.c.b16 %v2475, %v2469
    %v3586 = vpack.c.b16 %v2476, %v2470
    %v3587 = vpack.c.b16 %v2477, %v2471
    %v3588 = vpack.c.b16 %v2484, %v2478
    %v3589 = vpack.c.b16 %v2485, %v2479
    %v3590 = vpack.c.b16 %v2486, %v2480
    %v3591 = vpack.c.b16 %v2487, %v2481
    %v3592 = vpack.c.b16 %v2488, %v2482
    %v3593 = vpack.c.b16 %v2489, %v2483
    %v3594 = vpack.c.b16 %v2496, %v2490
    %v3595 = vpack.c.b16 %v2497, %v2491
    %v3596 = vpack.c.b16 %v2498, %v2492
    %v3597 = vpack.c.b16 %v2499, %v2493
    %v3598 = vpack.c.b16 %v2500, %v2494
    %v3599 = vpack.c.b16 %v2501, %v2495
    %v3600 = vpack.c.b16 %v2508, %v2502
    %v3601 = vpack.c.b16 %v2509, %v2503
    %v3602 = vpack.c.b16 %v2510, %v2504
    %v3603 = vpack.c.b16 %v2511, %v2505
    %v3604 = vpack.c.b16 %v2512, %v2506
    %v3605 = vpack.c.b16 %v2513, %v2507
    %v3606 = vpack.c.b16 %v2520, %v2514
    %v3607 = vpack.c.b16 %v2521, %v2515
    %v3608 = vpack.c.b16 %v2522, %v2516
    %v3609 = vpack.c.b16 %v2523, %v2517
    %v3610 = vpack.c.b16 %v2524, %v2518
    %v3611 = vpack.c.b16 %v2525, %v2519
    %v3612 = vpack.c.b16 %v2532, %v2526
    %v3613 = vpack.c.b16 %v2533, %v2527
    %v3614 = vpack.c.b16 %v2534, %v2528
    %v3615 = vpack.c.b16 %v2535, %v2529
    %v3616 = vpack.c.b16 %v2536, %v2530
    %v3617 = vpack.c.b16 %v2537, %v2531
    %v3618 = vpack.c.b16 %v2544, %v2538
    %v3619 = vpack.c.b16 %v2545, %v2539
    %v3620 = vpack.c.b16 %v2546, %v2540
    %v3621 = vpack.c.b16 %v2547, %v2541
    %v3622 = vpack.c.b16 %v2548, %v2542
    %v3623 = vpack.c.b16 %v2549, %v2543
    %v3624 = vpack.c.b16 %v2556, %v2550
    %v3625 = vpack.c.b16 %v2557, %v2551
    %v3626 = vpack.c.b16 %v2558, %v2552
    %v3627 = vpack.c.b16 %v2559, %v2553
    %v3628 = vpack.c.b16 %v2560, %v2554
    %v3629 = vpack.c.b16 %v2561, %v2555
    %v3630 = vpack.c.b16 %v2568, %v2562
    %v3631 = vpack.c.b16 %v2569, %v2563
    %v3632 = vpack.c.b16 %v2570, %v2564
    %v3633 = vpack.c.b16 %v2571, %v2565
    %v3634 = vpack.c.b16 %v2572, %v2566
    %v3635 = vpack.c.b16 %v2573, %v2567
    %v3636 = vpack.c.b16 %v2580, %v2574
    %v3637 = vpack.c.b16 %v2581, %v2575
    %v3638 = vpack.c.b16 %v2582, %v2576
    %v3639 = vpack.c.b16 %v2583, %v2577
    %v3640 = vpack.c.b16 %v2584, %v2578
    %v3641 = vpack.c.b16 %v2585, %v2579
    %v3642 = vpack.c.b16 %v2592, %v2586
    %v3643 = vpack.c.b16 %v2593, %v2587
    %v3644 = vpack.c.b16 %v2594, %v2588
    %v3645 = vpack.c.b16 %v2595, %v2589
    %v3646 = vpack.c.b16 %v2596, %v2590
    %v3647 = vpack.c.b16 %v2597, %v2591
    %v3648 = vpack.c.b16 %v2604, %v2598
    %v3649 = vpack.c.b16 %v2605, %v2599
    %v3650 = vpack.c.b16 %v2606, %v2600
    %v3651 = vpack.c.b16 %v2607, %v2601
    %v3652 = vpack.c.b16 %v2608, %v2602
    %v3653 = vpack.c.b16 %v2609, %v2603
    %v3654 = vpack.c.b16 %v2616, %v2610
    %v3655 = vpack.c.b16 %v2617, %v2611
    %v3656 = vpack.c.b16 %v2618, %v2612
    %v3657 = vpack.c.b16 %v2619, %v2613
    %v3658 = vpack.c.b16 %v2620, %v2614
    %v3659 = vpack.c.b16 %v2621, %v2615
    %v3660 = vpack.c.b16 %v2628, %v2622
    %v3661 = vpack.c.b16 %v2629, %v2623
    %v3662 = vpack.c.b16 %v2630, %v2624
    %v3663 = vpack.c.b16 %v2631, %v2625
    %v3664 = vpack.c.b16 %v2632, %v2626
    %v3665 = vpack.c.b16 %v2633, %v2627
    %v3666 = vpack.c.b16 %v2640, %v2634
    %v3667 = vpack.c.b16 %v2641, %v2635
    %v3668 = vpack.c.b16 %v2642, %v2636
    %v3669 = vpack.c.b16 %v2643, %v2637
    %v3670 = vpack.c.b16 %v2644, %v2638
    %v3671 = vpack.c.b16 %v2645, %v2639
    %v3672 = vpack.c.b16 %v2652, %v2646
    %v3673 = vpack.c.b16 %v2653, %v2647
    %v3674 = vpack.c.b16 %v2654, %v2648
    %v3675 = vpack.c.b16 %v2655, %v2649
    %v3676 = vpack.c.b16 %v2656, %v2650
    %v3677 = vpack.c.b16 %v2657, %v2651
    %v3678 = vpack.c.b16 %v2664, %v2658
    %v3679 = vpack.c.b16 %v2665, %v2659
    %v3680 = vpack.c.b16 %v2666, %v2660
    %v3681 = vpack.c.b16 %v2667, %v2661
    %v3682 = vpack.c.b16 %v2668, %v2662
    %v3683 = vpack.c.b16 %v2669, %v2663
    %v3684 = vpack.c.b16 %v2676, %v2670
    %v3685 = vpack.c.b16 %v2677, %v2671
    %v3686 = vpack.c.b16 %v2678, %v2672
    %v3687 = vpack.c.b16 %v2679, %v2673
    %v3688 = vpack.c.b16 %v2680, %v2674
    %v3689 = vpack.c.b16 %v2681, %v2675
    %v3690 = vpack.c.b16 %v2688, %v2682
    %v3691 = vpack.c.b16 %v2689, %v2683
    %v3692 = vpack.c.b16 %v2690, %v2684
    %v3693 = vpack.c.b16 %v2691, %v2685
    %v3694 = vpack.c.b16 %v2692, %v2686
    %v3695 = vpack.c.b16 %v2693, %v2687
    %v3696 = vpack.c.b16 %v2700, %v2694
    %v3697 = vpack.c.b16 %v2701, %v2695
    %v3698 = vpack.c.b16 %v2702, %v2696
    %v3699 = vpack.c.b16 %v2703, %v2697
    %v3700 = vpack.c.b16 %v2704, %v2698
    %v3701 = vpack.c.b16 %v2705, %v2699
    %v3702 = vpack.c.b16 %v2712, %v2706
    %v3703 = vpack.c.b16 %v2713, %v2707
    %v3704 = vpack.c.b16 %v2714, %v2708
    %v3705 = vpack.c.b16 %v2715, %v2709
    %v3706 = vpack.c.b16 %v2716, %v2710
    %v3707 = vpack.c.b16 %v2717, %v2711
    %v3708 = vpack.c.b16 %v2724, %v2718
    %v3709 = vpack.c.b16 %v2725, %v2719
    %v3710 = vpack.c.b16 %v2726, %v2720
    %v3711 = vpack.c.b16 %v2727, %v2721
    %v3712 = vpack.c.b16 %v2728, %v2722
    %v3713 = vpack.c.b16 %v2729, %v2723
    %v3714 = vpack.c.b16 %v2736, %v2730
    %v3715 = vpack.c.b16 %v2737, %v2731
    %v3716 = vpack.c.b16 %v2738, %v2732
    %v3717 = vpack.c.b16 %v2739, %v2733
    %v3718 = vpack.c.b16 %v2740, %v2734
    %v3719 = vpack.c.b16 %v2741, %v2735
    %v3720 = vpack.c.b16 %v2748, %v2742
    %v3721 = vpack.c.b16 %v2749, %v2743
    %v3722 = vpack.c.b16 %v2750, %v2744
    %v3723 = vpack.c.b16 %v2751, %v2745
    %v3724 = vpack.c.b16 %v2752, %v2746
    %v3725 = vpack.c.b16 %v2753, %v2747
    %v3726 = vpack.c.b16 %v2760, %v2754
    %v3727 = vpack.c.b16 %v2761, %v2755
    %v3728 = vpack.c.b16 %v2762, %v2756
    %v3729 = vpack.c.b16 %v2763, %v2757
    %v3730 = vpack.c.b16 %v2764, %v2758
    %v3731 = vpack.c.b16 %v2765, %v2759
    %v3732 = vpack.c.b16 %v2772, %v2766
    %v3733 = vpack.c.b16 %v2773, %v2767
    %v3734 = vpack.c.b16 %v2774, %v2768
    %v3735 = vpack.c.b16 %v2775, %v2769
    %v3736 = vpack.c.b16 %v2776, %v2770
    %v3737 = vpack.c.b16 %v2777, %v2771
    %v3738 = vpack.c.b16 %v2784, %v2778
    %v3739 = vpack.c.b16 %v2785, %v2779
    %v3740 = vpack.c.b16 %v2786, %v2780
    %v3741 = vpack.c.b16 %v2787, %v2781
    %v3742 = vpack.c.b16 %v2788, %v2782
    %v3743 = vpack.c.b16 %v2789, %v2783
    %v3744 = vpack.c.b16 %v2796, %v2790
    %v3745 = vpack.c.b16 %v2797, %v2791
    %v3746 = vpack.c.b16 %v2798, %v2792
    %v3747 = vpack.c.b16 %v2799, %v2793
    %v3748 = vpack.c.b16 %v2800, %v2794
    %v3749 = vpack.c.b16 %v2801, %v2795
    %v3750 = vpack.c.b16 %v2808, %v2802
    %v3751 = vpack.c.b16 %v2809, %v2803
    %v3752 = vpack.c.b16 %v2810, %v2804
    %v3753 = vpack.c.b16 %v2811, %v2805
    %v3754 = vpack.c.b16 %v2812, %v2806
    %v3755 = vpack.c.b16 %v2813, %v2807
    %v3756 = vpack.c.b16 %v2820, %v2814
    %v3757 = vpack.c.b16 %v2821, %v2815
    %v3758 = vpack.c.b16 %v2822, %v2816
    %v3759 = vpack.c.b16 %v2823, %v2817
    %v3760 = vpack.c.b16 %v2824, %v2818
    %v3761 = vpack.c.b16 %v2825, %v2819
    %v3762 = vpack.c.b16 %v2832, %v2826
    %v3763 = vpack.c.b16 %v2833, %v2827
    %v3764 = vpack.c.b16 %v2834, %v2828
    %v3765 = vpack.c.b16 %v2835, %v2829
    %v3766 = vpack.c.b16 %v2836, %v2830
    %v3767 = vpack.c.b16 %v2837, %v2831
    %v3768 = vpack.c.b16 %v2844, %v2838
    %v3769 = vpack.c.b16 %v2845, %v2839
    %v3770 = vpack.c.b16 %v2846, %v2840
    %v3771 = vpack.c.b16 %v2847, %v2841
    %v3772 = vpack.c.b16 %v2848, %v2842
    %v3773 = vpack.c.b16 %v2849, %v2843
    %v3774 = vpack.c.b16 %v2856, %v2850
    %v3775 = vpack.c.b16 %v2857, %v2851
    %v3776 = vpack.c.b16 %v2858, %v2852
    %v3777 = vpack.c.b16 %v2859, %v2853
    %v3778 = vpack.c.b16 %v2860, %v2854
    %v3779 = vpack.c.b16 %v2861, %v2855
    %v3780 = vpack.c.b16 %v2868, %v2862
    %v3781 = vpack.c.b16 %v2869, %v2863
    %v3782 = vpack.c.b16 %v2870, %v2864
    %v3783 = vpack.c.b16 %v2871, %v2865
    %v3784 = vpack.c.b16 %v2872, %v2866
    %v3785 = vpack.c.b16 %v2873, %v2867
    %v3786 = vpack.c.b16 %v2880, %v2874
    %v3787 = vpack.c.b16 %v2881, %v2875
    %v3788 = vpack.c.b16 %v2882, %v2876
    %v3789 = vpack.c.b16 %v2883, %v2877
    %v3790 = vpack.c.b16 %v2884, %v2878
    %v3791 = vpack.c.b16 %v2885, %v2879
    %v3792 = vpack.c.b16 %v2892, %v2886
    %v3793 = vpack.c.b16 %v2893, %v2887
    %v3794 = vpack.c.b16 %v2894, %v2888
    %v3795 = vpack.c.b16 %v2895, %v2889
    %v3796 = vpack.c.b16 %v2896, %v2890
    %v3797 = vpack.c.b16 %v2897, %v2891
    %v3798 = vpack.c.b16 %v2904, %v2898
    %v3799 = vpack.c.b16 %v2905, %v2899
    %v3800 = vpack.c.b16 %v2906, %v2900
    %v3801 = vpack.c.b16 %v2907, %v2901
    %v3802 = vpack.c.b16 %v2908, %v2902
    %v3803 = vpack.c.b16 %v2909, %v2903
    %v3804 = vpack.c.b16 %v2916, %v2910
    %v3805 = vpack.c.b16 %v2917, %v2911
    %v3806 = vpack.c.b16 %v2918, %v2912
    %v3807 = vpack.c.b16 %v2919, %v2913
    %v3808 = vpack.c.b16 %v2920, %v2914
    %v3809 = vpack.c.b16 %v2921, %v2915
    %v3810 = vpack.c.b16 %v2928, %v2922
    %v3811 = vpack.c.b16 %v2929, %v2923
    %v3812 = vpack.c.b16 %v2930, %v2924
    %v3813 = vpack.c.b16 %v2931, %v2925
    %v3814 = vpack.c.b16 %v2932, %v2926
    %v3815 = vpack.c.b16 %v2933, %v2927
    %v3816 = vpack.c.b16 %v2940, %v2934
    %v3817 = vpack.c.b16 %v2941, %v2935
    %v3818 = vpack.c.b16 %v2942, %v2936
    %v3819 = vpack.c.b16 %v2943, %v2937
    %v3820 = vpack.c.b16 %v2944, %v2938
    %v3821 = vpack.c.b16 %v2945, %v2939
    %v3822 = vpack.c.b16 %v2952, %v2946
    %v3823 = vpack.c.b16 %v2953, %v2947
    %v3824 = vpack.c.b16 %v2954, %v2948
    %v3825 = vpack.c.b16 %v2955, %v2949
    %v3826 = vpack.c.b16 %v2956, %v2950
    %v3827 = vpack.c.b16 %v2957, %v2951
    %v3828 = vpack.c.b16 %v2964, %v2958
    %v3829 = vpack.c.b16 %v2965, %v2959
    %v3830 = vpack.c.b16 %v2966, %v2960
    %v3831 = vpack.c.b16 %v2967, %v2961
    %v3832 = vpack.c.b16 %v2968, %v2962
    %v3833 = vpack.c.b16 %v2969, %v2963
    %v3834 = vpack.c.b16 %v2976, %v2970
    %v3835 = vpack.c.b16 %v2977, %v2971
    %v3836 = vpack.c.b16 %v2978, %v2972
    %v3837 = vpack.c.b16 %v2979, %v2973
    %v3838 = vpack.c.b16 %v2980, %v2974
    %v3839 = vpack.c.b16 %v2981, %v2975
    %v3840 = vpack.c.b16 %v2988, %v2982
    %v3841 = vpack.c.b16 %v2989, %v2983
    %v3842 = vpack.c.b16 %v2990, %v2984
    %v3843 = vpack.c.b16 %v2991, %v2985
    %v3844 = vpack.c.b16 %v2992, %v2986
    %v3845 = vpack.c.b16 %v2993, %v2987
    %v3846 = vpack.c.b16 %v3000, %v2994
    %v3847 = vpack.c.b16 %v3001, %v2995
    %v3848 = vpack.c.b16 %v3002, %v2996
    %v3849 = vpack.c.b16 %v3003, %v2997
    %v3850 = vpack.c.b16 %v3004, %v2998
    %v3851 = vpack.c.b16 %v3005, %v2999
    %v3852 = vpack.c.b16 %v3012, %v3006
    %v3853 = vpack.c.b16 %v3013, %v3007
    %v3854 = vpack.c.b16 %v3014, %v3008
    %v3855 = vpack.c.b16 %v3015, %v3009
    %v3856 = vpack.c.b16 %v3016, %v3010
    %v3857 = vpack.c.b16 %v3017, %v3011
    %v3858 = vpack.c.b16 %v3024, %v3018
    %v3859 = vpack.c.b16 %v3025, %v3019
    %v3860 = vpack.c.b16 %v3026, %v3020
    %v3861 = vpack.c.b16 %v3027, %v3021
    %v3862 = vpack.c.b16 %v3028, %v3022
    %v3863 = vpack.c.b16 %v3029, %v3023
    %v3864 = vpack.c.b16 %v3036, %v3030
    %v3865 = vpack.c.b16 %v3037, %v3031
    %v3866 = vpack.c.b16 %v3038, %v3032
    %v3867 = vpack.c.b16 %v3039, %v3033
    %v3868 = vpack.c.b16 %v3040, %v3034
    %v3869 = vpack.c.b16 %v3041, %v3035
    %v3870 = vpack.c.b16 %v3048, %v3042
    %v3871 = vpack.c.b16 %v3049, %v3043
    %v3872 = vpack.c.b16 %v3050, %v3044
    %v3873 = vpack.c.b16 %v3051, %v3045
    %v3874 = vpack.c.b16 %v3052, %v3046
    %v3875 = vpack.c.b16 %v3053, %v3047
    %v3876 = vpack.c.b16 %v3060, %v3054
    %v3877 = vpack.c.b16 %v3061, %v3055
    %v3878 = vpack.c.b16 %v3062, %v3056
    %v3879 = vpack.c.b16 %v3063, %v3057
    %v3880 = vpack.c.b16 %v3064, %v3058
    %v3881 = vpack.c.b16 %v3065, %v3059
    %v3882 = vpack.c.b16 %v3072, %v3066
    %v3883 = vpack.c.b16 %v3073, %v3067
    %v3884 = vpack.c.b16 %v3074, %v3068
    %v3885 = vpack.c.b16 %v3075, %v3069
    %v3886 = vpack.c.b16 %v3076, %v3070
    %v3887 = vpack.c.b16 %v3077, %v3071
    %v3888 = vpack.c.b16 %v3084, %v3078
    %v3889 = vpack.c.b16 %v3085, %v3079
    %v3890 = vpack.c.b16 %v3086, %v3080
    %v3891 = vpack.c.b16 %v3087, %v3081
    %v3892 = vpack.c.b16 %v3088, %v3082
    %v3893 = vpack.c.b16 %v3089, %v3083
    %v3894 = vpack.c.b16 %v3096, %v3090
    %v3895 = vpack.c.b16 %v3097, %v3091
    %v3896 = vpack.c.b16 %v3098, %v3092
    %v3897 = vpack.c.b16 %v3099, %v3093
    %v3898 = vpack.c.b16 %v3100, %v3094
    %v3899 = vpack.c.b16 %v3101, %v3095
    %v3900 = vpack.c.b16 %v3108, %v3102
    %v3901 = vpack.c.b16 %v3109, %v3103
    %v3902 = vpack.c.b16 %v3110, %v3104
    %v3903 = vpack.c.b16 %v3111, %v3105
    %v3904 = vpack.c.b16 %v3112, %v3106
    %v3905 = vpack.c.b16 %v3113, %v3107
    %v3906 = vpack.c.b16 %v3120, %v3114
    %v3907 = vpack.c.b16 %v3121, %v3115
    %v3908 = vpack.c.b16 %v3122, %v3116
    %v3909 = vpack.c.b16 %v3123, %v3117
    %v3910 = vpack.c.b16 %v3124, %v3118
    %v3911 = vpack.c.b16 %v3125, %v3119
    %v3912 = vpack.c.b16 %v3132, %v3126
    %v3913 = vpack.c.b16 %v3133, %v3127
    %v3914 = vpack.c.b16 %v3134, %v3128
    %v3915 = vpack.c.b16 %v3135, %v3129
    %v3916 = vpack.c.b16 %v3136, %v3130
    %v3917 = vpack.c.b16 %v3137, %v3131
    %v3918 = vpack.c.b16 %v3144, %v3138
    %v3919 = vpack.c.b16 %v3145, %v3139
    %v3920 = vpack.c.b16 %v3146, %v3140
    %v3921 = vpack.c.b16 %v3147, %v3141
    %v3922 = vpack.c.b16 %v3148, %v3142
    %v3923 = vpack.c.b16 %v3149, %v3143
    %v3924 = vpack.c.b16 %v3156, %v3150
    %v3925 = vpack.c.b16 %v3157, %v3151
    %v3926 = vpack.c.b16 %v3158, %v3152
    %v3927 = vpack.c.b16 %v3159, %v3153
    %v3928 = vpack.c.b16 %v3160, %v3154
    %v3929 = vpack.c.b16 %v3161, %v3155
    %4698 = vmatpush.bf16.msra.mxu0 %v3204
    %4699 = vmatpush.bf16.msra.mxu0 %v3198
    %4700 = vmatpush.bf16.msra.mxu0 %v3192
    %4701 = vmatpush.bf16.msra.mxu0 %v3186
    %4702 = vmatpush.bf16.msra.mxu0 %v3180
    %4703 = vmatpush.bf16.msra.mxu0 %v3174
    %4704 = vmatpush.bf16.msra.mxu0 %v3168
    %4705 = vmatpush.bf16.msra.mxu0 %v3162
    %4706 = vmatmul.bf16.gmra.mxu0 %v60
    %v4707 = vpop.f32.mrf.mxu0
    %v4708 = vadd.f32 %v846, %v4707
    %v4709 = vpop.f32.mrf.mxu0
    %4710 = vdwg.mxu0
    %4711 = vmatpush.bf16.msra.mxu0 %v3252
    %4712 = vmatpush.bf16.msra.mxu0 %v3246
    %4713 = vmatpush.bf16.msra.mxu0 %v3240
    %4714 = vmatpush.bf16.msra.mxu0 %v3234
    %4715 = vmatpush.bf16.msra.mxu0 %v3228
    %4716 = vmatpush.bf16.msra.mxu0 %v3222
    %4717 = vmatpush.bf16.msra.mxu0 %v3216
    %4718 = vmatpush.bf16.msra.mxu0 %v3210
    %4719 = vmatmul.bf16.gmra.mxu0 %v61
    %v4720 = vpop.f32.mrf.mxu0
    %v4721 = vadd.f32 %v4708, %v4720
    %v4722 = vpop.f32.mrf.mxu0
    %4723 = vdwg.mxu0
    %4724 = vmatpush.bf16.msra.mxu0 %v3300
    %4725 = vmatpush.bf16.msra.mxu0 %v3294
    %4726 = vmatpush.bf16.msra.mxu0 %v3288
    %4727 = vmatpush.bf16.msra.mxu0 %v3282
    %4728 = vmatpush.bf16.msra.mxu0 %v3276
    %4729 = vmatpush.bf16.msra.mxu0 %v3270
    %4730 = vmatpush.bf16.msra.mxu0 %v3264
    %4731 = vmatpush.bf16.msra.mxu0 %v3258
    %4732 = vmatmul.bf16.gmra.mxu0 %v62
    %v4733 = vpop.f32.mrf.mxu0
    %v4734 = vadd.f32 %v4721, %v4733
    %v4735 = vpop.f32.mrf.mxu0
    %4736 = vdwg.mxu0
    %4737 = vmatpush.bf16.msra.mxu0 %v3348
    %4738 = vmatpush.bf16.msra.mxu0 %v3342
    %4739 = vmatpush.bf16.msra.mxu0 %v3336
    %4740 = vmatpush.bf16.msra.mxu0 %v3330
    %4741 = vmatpush.bf16.msra.mxu0 %v3324
    %4742 = vmatpush.bf16.msra.mxu0 %v3318
    %4743 = vmatpush.bf16.msra.mxu0 %v3312
    %4744 = vmatpush.bf16.msra.mxu0 %v3306
    %4745 = vmatmul.bf16.gmra.mxu0 %v63
    %v4746 = vpop.f32.mrf.mxu0
    %v4747 = vadd.f32 %v4734, %v4746
    %v4748 = vpop.f32.mrf.mxu0
    %4749 = vdwg.mxu0
    %4750 = vmatpush.bf16.msra.mxu0 %v3396
    %4751 = vmatpush.bf16.msra.mxu0 %v3390
    %4752 = vmatpush.bf16.msra.mxu0 %v3384
    %4753 = vmatpush.bf16.msra.mxu0 %v3378
    %4754 = vmatpush.bf16.msra.mxu0 %v3372
    %4755 = vmatpush.bf16.msra.mxu0 %v3366
    %4756 = vmatpush.bf16.msra.mxu0 %v3360
    %4757 = vmatpush.bf16.msra.mxu0 %v3354
    %4758 = vmatmul.bf16.gmra.mxu0 %v64
    %v4759 = vpop.f32.mrf.mxu0
    %v4760 = vadd.f32 %v4747, %v4759
    %v4761 = vpop.f32.mrf.mxu0
    %4762 = vdwg.mxu0
    %4763 = vmatpush.bf16.msra.mxu0 %v3444
    %4764 = vmatpush.bf16.msra.mxu0 %v3438
    %4765 = vmatpush.bf16.msra.mxu0 %v3432
    %4766 = vmatpush.bf16.msra.mxu0 %v3426
    %4767 = vmatpush.bf16.msra.mxu0 %v3420
    %4768 = vmatpush.bf16.msra.mxu0 %v3414
    %4769 = vmatpush.bf16.msra.mxu0 %v3408
    %4770 = vmatpush.bf16.msra.mxu0 %v3402
    %4771 = vmatmul.bf16.gmra.mxu0 %v65
    %v4772 = vpop.f32.mrf.mxu0
    %v4773 = vadd.f32 %v4760, %v4772
    %v4774 = vpop.f32.mrf.mxu0
    %4775 = vdwg.mxu0
    %4776 = vmatpush.bf16.msra.mxu0 %v3492
    %4777 = vmatpush.bf16.msra.mxu0 %v3486
    %4778 = vmatpush.bf16.msra.mxu0 %v3480
    %4779 = vmatpush.bf16.msra.mxu0 %v3474
    %4780 = vmatpush.bf16.msra.mxu0 %v3468
    %4781 = vmatpush.bf16.msra.mxu0 %v3462
    %4782 = vmatpush.bf16.msra.mxu0 %v3456
    %4783 = vmatpush.bf16.msra.mxu0 %v3450
    %4784 = vmatmul.bf16.gmra.mxu0 %v66
    %v4785 = vpop.f32.mrf.mxu0
    %v4786 = vadd.f32 %v4773, %v4785
    %v4787 = vpop.f32.mrf.mxu0
    %4788 = vdwg.mxu0
    %4789 = vmatpush.bf16.msra.mxu0 %v3540
    %4790 = vmatpush.bf16.msra.mxu0 %v3534
    %4791 = vmatpush.bf16.msra.mxu0 %v3528
    %4792 = vmatpush.bf16.msra.mxu0 %v3522
    %4793 = vmatpush.bf16.msra.mxu0 %v3516
    %4794 = vmatpush.bf16.msra.mxu0 %v3510
    %4795 = vmatpush.bf16.msra.mxu0 %v3504
    %4796 = vmatpush.bf16.msra.mxu0 %v3498
    %4797 = vmatmul.bf16.gmra.mxu0 %v67
    %v4798 = vpop.f32.mrf.mxu0
    %v4799 = vadd.f32 %v4786, %v4798
    %v4800 = vpop.f32.mrf.mxu0
    %4801 = vdwg.mxu0
    %4802 = vmatpush.bf16.msra.mxu0 %v3588
    %4803 = vmatpush.bf16.msra.mxu0 %v3582
    %4804 = vmatpush.bf16.msra.mxu0 %v3576
    %4805 = vmatpush.bf16.msra.mxu0 %v3570
    %4806 = vmatpush.bf16.msra.mxu0 %v3564
    %4807 = vmatpush.bf16.msra.mxu0 %v3558
    %4808 = vmatpush.bf16.msra.mxu0 %v3552
    %4809 = vmatpush.bf16.msra.mxu0 %v3546
    %4810 = vmatmul.bf16.gmra.mxu0 %v68
    %v4811 = vpop.f32.mrf.mxu0
    %v4812 = vadd.f32 %v4799, %v4811
    %v4813 = vpop.f32.mrf.mxu0
    %4814 = vdwg.mxu0
    %4815 = vmatpush.bf16.msra.mxu0 %v3636
    %4816 = vmatpush.bf16.msra.mxu0 %v3630
    %4817 = vmatpush.bf16.msra.mxu0 %v3624
    %4818 = vmatpush.bf16.msra.mxu0 %v3618
    %4819 = vmatpush.bf16.msra.mxu0 %v3612
    %4820 = vmatpush.bf16.msra.mxu0 %v3606
    %4821 = vmatpush.bf16.msra.mxu0 %v3600
    %4822 = vmatpush.bf16.msra.mxu0 %v3594
    %4823 = vmatmul.bf16.gmra.mxu0 %v69
    %v4824 = vpop.f32.mrf.mxu0
    %v4825 = vadd.f32 %v4812, %v4824
    %v4826 = vpop.f32.mrf.mxu0
    %4827 = vdwg.mxu0
    %4828 = vmatpush.bf16.msra.mxu0 %v3684
    %4829 = vmatpush.bf16.msra.mxu0 %v3678
    %4830 = vmatpush.bf16.msra.mxu0 %v3672
    %4831 = vmatpush.bf16.msra.mxu0 %v3666
    %4832 = vmatpush.bf16.msra.mxu0 %v3660
    %4833 = vmatpush.bf16.msra.mxu0 %v3654
    %4834 = vmatpush.bf16.msra.mxu0 %v3648
    %4835 = vmatpush.bf16.msra.mxu0 %v3642
    %4836 = vmatmul.bf16.gmra.mxu0 %v70
    %v4837 = vpop.f32.mrf.mxu0
    %v4838 = vadd.f32 %v4825, %v4837
    %v4839 = vpop.f32.mrf.mxu0
    %4840 = vdwg.mxu0
    %4841 = vmatpush.bf16.msra.mxu0 %v3732
    %4842 = vmatpush.bf16.msra.mxu0 %v3726
    %4843 = vmatpush.bf16.msra.mxu0 %v3720
    %4844 = vmatpush.bf16.msra.mxu0 %v3714
    %4845 = vmatpush.bf16.msra.mxu0 %v3708
    %4846 = vmatpush.bf16.msra.mxu0 %v3702
    %4847 = vmatpush.bf16.msra.mxu0 %v3696
    %4848 = vmatpush.bf16.msra.mxu0 %v3690
    %4849 = vmatmul.bf16.gmra.mxu0 %v71
    %v4850 = vpop.f32.mrf.mxu0
    %v4851 = vadd.f32 %v4838, %v4850
    %v4852 = vpop.f32.mrf.mxu0
    %4853 = vdwg.mxu0
    %4854 = vmatpush.bf16.msra.mxu0 %v3780
    %4855 = vmatpush.bf16.msra.mxu0 %v3774
    %4856 = vmatpush.bf16.msra.mxu0 %v3768
    %4857 = vmatpush.bf16.msra.mxu0 %v3762
    %4858 = vmatpush.bf16.msra.mxu0 %v3756
    %4859 = vmatpush.bf16.msra.mxu0 %v3750
    %4860 = vmatpush.bf16.msra.mxu0 %v3744
    %4861 = vmatpush.bf16.msra.mxu0 %v3738
    %4862 = vmatmul.bf16.gmra.mxu0 %v72
    %v4863 = vpop.f32.mrf.mxu0
    %v4864 = vadd.f32 %v4851, %v4863
    %v4865 = vpop.f32.mrf.mxu0
    %4866 = vdwg.mxu0
    %4867 = vmatpush.bf16.msra.mxu0 %v3828
    %4868 = vmatpush.bf16.msra.mxu0 %v3822
    %4869 = vmatpush.bf16.msra.mxu0 %v3816
    %4870 = vmatpush.bf16.msra.mxu0 %v3810
    %4871 = vmatpush.bf16.msra.mxu0 %v3804
    %4872 = vmatpush.bf16.msra.mxu0 %v3798
    %4873 = vmatpush.bf16.msra.mxu0 %v3792
    %4874 = vmatpush.bf16.msra.mxu0 %v3786
    %4875 = vmatmul.bf16.gmra.mxu0 %v73
    %v4876 = vpop.f32.mrf.mxu0
    %v4877 = vadd.f32 %v4864, %v4876
    %v4878 = vpop.f32.mrf.mxu0
    %4879 = vdwg.mxu0
    %4880 = vmatpush.bf16.msra.mxu0 %v3876
    %4881 = vmatpush.bf16.msra.mxu0 %v3870
    %4882 = vmatpush.bf16.msra.mxu0 %v3864
    %4883 = vmatpush.bf16.msra.mxu0 %v3858
    %4884 = vmatpush.bf16.msra.mxu0 %v3852
    %4885 = vmatpush.bf16.msra.mxu0 %v3846
    %4886 = vmatpush.bf16.msra.mxu0 %v3840
    %4887 = vmatpush.bf16.msra.mxu0 %v3834
    %4888 = vmatmul.bf16.gmra.mxu0 %v74
    %v4889 = vpop.f32.mrf.mxu0
    %v4890 = vadd.f32 %v4877, %v4889
    %v4891 = vpop.f32.mrf.mxu0
    %4892 = vdwg.mxu0
    %4893 = vmatpush.bf16.msra.mxu0 %v3924
    %4894 = vmatpush.bf16.msra.mxu0 %v3918
    %4895 = vmatpush.bf16.msra.mxu0 %v3912
    %4896 = vmatpush.bf16.msra.mxu0 %v3906
    %4897 = vmatpush.bf16.msra.mxu0 %v3900
    %4898 = vmatpush.bf16.msra.mxu0 %v3894
    %4899 = vmatpush.bf16.msra.mxu0 %v3888
    %4900 = vmatpush.bf16.msra.mxu0 %v3882
    %4901 = vmatmul.bf16.gmra.mxu0 %v75
    %v4902 = vpop.f32.mrf.mxu0
    %v4903 = vadd.f32 %v4890, %v4902
    %v4904 = vpop.f32.mrf.mxu0
    %4905 = vdwg.mxu0
    %4906 = vmatpush.bf16.msra.mxu0 %v3205
    %4907 = vmatpush.bf16.msra.mxu0 %v3199
    %4908 = vmatpush.bf16.msra.mxu0 %v3193
    %4909 = vmatpush.bf16.msra.mxu0 %v3187
    %4910 = vmatpush.bf16.msra.mxu0 %v3181
    %4911 = vmatpush.bf16.msra.mxu0 %v3175
    %4912 = vmatpush.bf16.msra.mxu0 %v3169
    %4913 = vmatpush.bf16.msra.mxu0 %v3163
    %4914 = vmatmul.bf16.gmra.mxu0 %v60
    %v4915 = vpop.f32.mrf.mxu0
    %v4916 = vadd.f32 %v847, %v4915
    %v4917 = vpop.f32.mrf.mxu0
    %4918 = vdwg.mxu0
    %4919 = vmatpush.bf16.msra.mxu0 %v3253
    %4920 = vmatpush.bf16.msra.mxu0 %v3247
    %4921 = vmatpush.bf16.msra.mxu0 %v3241
    %4922 = vmatpush.bf16.msra.mxu0 %v3235
    %4923 = vmatpush.bf16.msra.mxu0 %v3229
    %4924 = vmatpush.bf16.msra.mxu0 %v3223
    %4925 = vmatpush.bf16.msra.mxu0 %v3217
    %4926 = vmatpush.bf16.msra.mxu0 %v3211
    %4927 = vmatmul.bf16.gmra.mxu0 %v61
    %v4928 = vpop.f32.mrf.mxu0
    %v4929 = vadd.f32 %v4916, %v4928
    %v4930 = vpop.f32.mrf.mxu0
    %4931 = vdwg.mxu0
    %4932 = vmatpush.bf16.msra.mxu0 %v3301
    %4933 = vmatpush.bf16.msra.mxu0 %v3295
    %4934 = vmatpush.bf16.msra.mxu0 %v3289
    %4935 = vmatpush.bf16.msra.mxu0 %v3283
    %4936 = vmatpush.bf16.msra.mxu0 %v3277
    %4937 = vmatpush.bf16.msra.mxu0 %v3271
    %4938 = vmatpush.bf16.msra.mxu0 %v3265
    %4939 = vmatpush.bf16.msra.mxu0 %v3259
    %4940 = vmatmul.bf16.gmra.mxu0 %v62
    %v4941 = vpop.f32.mrf.mxu0
    %v4942 = vadd.f32 %v4929, %v4941
    %v4943 = vpop.f32.mrf.mxu0
    %4944 = vdwg.mxu0
    %4945 = vmatpush.bf16.msra.mxu0 %v3349
    %4946 = vmatpush.bf16.msra.mxu0 %v3343
    %4947 = vmatpush.bf16.msra.mxu0 %v3337
    %4948 = vmatpush.bf16.msra.mxu0 %v3331
    %4949 = vmatpush.bf16.msra.mxu0 %v3325
    %4950 = vmatpush.bf16.msra.mxu0 %v3319
    %4951 = vmatpush.bf16.msra.mxu0 %v3313
    %4952 = vmatpush.bf16.msra.mxu0 %v3307
    %4953 = vmatmul.bf16.gmra.mxu0 %v63
    %v4954 = vpop.f32.mrf.mxu0
    %v4955 = vadd.f32 %v4942, %v4954
    %v4956 = vpop.f32.mrf.mxu0
    %4957 = vdwg.mxu0
    %4958 = vmatpush.bf16.msra.mxu0 %v3397
    %4959 = vmatpush.bf16.msra.mxu0 %v3391
    %4960 = vmatpush.bf16.msra.mxu0 %v3385
    %4961 = vmatpush.bf16.msra.mxu0 %v3379
    %4962 = vmatpush.bf16.msra.mxu0 %v3373
    %4963 = vmatpush.bf16.msra.mxu0 %v3367
    %4964 = vmatpush.bf16.msra.mxu0 %v3361
    %4965 = vmatpush.bf16.msra.mxu0 %v3355
    %4966 = vmatmul.bf16.gmra.mxu0 %v64
    %v4967 = vpop.f32.mrf.mxu0
    %v4968 = vadd.f32 %v4955, %v4967
    %v4969 = vpop.f32.mrf.mxu0
    %4970 = vdwg.mxu0
    %4971 = vmatpush.bf16.msra.mxu0 %v3445
    %4972 = vmatpush.bf16.msra.mxu0 %v3439
    %4973 = vmatpush.bf16.msra.mxu0 %v3433
    %4974 = vmatpush.bf16.msra.mxu0 %v3427
    %4975 = vmatpush.bf16.msra.mxu0 %v3421
    %4976 = vmatpush.bf16.msra.mxu0 %v3415
    %4977 = vmatpush.bf16.msra.mxu0 %v3409
    %4978 = vmatpush.bf16.msra.mxu0 %v3403
    %4979 = vmatmul.bf16.gmra.mxu0 %v65
    %v4980 = vpop.f32.mrf.mxu0
    %v4981 = vadd.f32 %v4968, %v4980
    %v4982 = vpop.f32.mrf.mxu0
    %4983 = vdwg.mxu0
    %4984 = vmatpush.bf16.msra.mxu0 %v3493
    %4985 = vmatpush.bf16.msra.mxu0 %v3487
    %4986 = vmatpush.bf16.msra.mxu0 %v3481
    %4987 = vmatpush.bf16.msra.mxu0 %v3475
    %4988 = vmatpush.bf16.msra.mxu0 %v3469
    %4989 = vmatpush.bf16.msra.mxu0 %v3463
    %4990 = vmatpush.bf16.msra.mxu0 %v3457
    %4991 = vmatpush.bf16.msra.mxu0 %v3451
    %4992 = vmatmul.bf16.gmra.mxu0 %v66
    %v4993 = vpop.f32.mrf.mxu0
    %v4994 = vadd.f32 %v4981, %v4993
    %v4995 = vpop.f32.mrf.mxu0
    %4996 = vdwg.mxu0
    %4997 = vmatpush.bf16.msra.mxu0 %v3541
    %4998 = vmatpush.bf16.msra.mxu0 %v3535
    %4999 = vmatpush.bf16.msra.mxu0 %v3529
    %5000 = vmatpush.bf16.msra.mxu0 %v3523
    %5001 = vmatpush.bf16.msra.mxu0 %v3517
    %5002 = vmatpush.bf16.msra.mxu0 %v3511
    %5003 = vmatpush.bf16.msra.mxu0 %v3505
    %5004 = vmatpush.bf16.msra.mxu0 %v3499
    %5005 = vmatmul.bf16.gmra.mxu0 %v67
    %v5006 = vpop.f32.mrf.mxu0
    %v5007 = vadd.f32 %v4994, %v5006
    %v5008 = vpop.f32.mrf.mxu0
    %5009 = vdwg.mxu0
    %5010 = vmatpush.bf16.msra.mxu0 %v3589
    %5011 = vmatpush.bf16.msra.mxu0 %v3583
    %5012 = vmatpush.bf16.msra.mxu0 %v3577
    %5013 = vmatpush.bf16.msra.mxu0 %v3571
    %5014 = vmatpush.bf16.msra.mxu0 %v3565
    %5015 = vmatpush.bf16.msra.mxu0 %v3559
    %5016 = vmatpush.bf16.msra.mxu0 %v3553
    %5017 = vmatpush.bf16.msra.mxu0 %v3547
    %5018 = vmatmul.bf16.gmra.mxu0 %v68
    %v5019 = vpop.f32.mrf.mxu0
    %v5020 = vadd.f32 %v5007, %v5019
    %v5021 = vpop.f32.mrf.mxu0
    %5022 = vdwg.mxu0
    %5023 = vmatpush.bf16.msra.mxu0 %v3637
    %5024 = vmatpush.bf16.msra.mxu0 %v3631
    %5025 = vmatpush.bf16.msra.mxu0 %v3625
    %5026 = vmatpush.bf16.msra.mxu0 %v3619
    %5027 = vmatpush.bf16.msra.mxu0 %v3613
    %5028 = vmatpush.bf16.msra.mxu0 %v3607
    %5029 = vmatpush.bf16.msra.mxu0 %v3601
    %5030 = vmatpush.bf16.msra.mxu0 %v3595
    %5031 = vmatmul.bf16.gmra.mxu0 %v69
    %v5032 = vpop.f32.mrf.mxu0
    %v5033 = vadd.f32 %v5020, %v5032
    %v5034 = vpop.f32.mrf.mxu0
    %5035 = vdwg.mxu0
    %5036 = vmatpush.bf16.msra.mxu0 %v3685
    %5037 = vmatpush.bf16.msra.mxu0 %v3679
    %5038 = vmatpush.bf16.msra.mxu0 %v3673
    %5039 = vmatpush.bf16.msra.mxu0 %v3667
    %5040 = vmatpush.bf16.msra.mxu0 %v3661
    %5041 = vmatpush.bf16.msra.mxu0 %v3655
    %5042 = vmatpush.bf16.msra.mxu0 %v3649
    %5043 = vmatpush.bf16.msra.mxu0 %v3643
    %5044 = vmatmul.bf16.gmra.mxu0 %v70
    %v5045 = vpop.f32.mrf.mxu0
    %v5046 = vadd.f32 %v5033, %v5045
    %v5047 = vpop.f32.mrf.mxu0
    %5048 = vdwg.mxu0
    %5049 = vmatpush.bf16.msra.mxu0 %v3733
    %5050 = vmatpush.bf16.msra.mxu0 %v3727
    %5051 = vmatpush.bf16.msra.mxu0 %v3721
    %5052 = vmatpush.bf16.msra.mxu0 %v3715
    %5053 = vmatpush.bf16.msra.mxu0 %v3709
    %5054 = vmatpush.bf16.msra.mxu0 %v3703
    %5055 = vmatpush.bf16.msra.mxu0 %v3697
    %5056 = vmatpush.bf16.msra.mxu0 %v3691
    %5057 = vmatmul.bf16.gmra.mxu0 %v71
    %v5058 = vpop.f32.mrf.mxu0
    %v5059 = vadd.f32 %v5046, %v5058
    %v5060 = vpop.f32.mrf.mxu0
    %5061 = vdwg.mxu0
    %5062 = vmatpush.bf16.msra.mxu0 %v3781
    %5063 = vmatpush.bf16.msra.mxu0 %v3775
    %5064 = vmatpush.bf16.msra.mxu0 %v3769
    %5065 = vmatpush.bf16.msra.mxu0 %v3763
    %5066 = vmatpush.bf16.msra.mxu0 %v3757
    %5067 = vmatpush.bf16.msra.mxu0 %v3751
    %5068 = vmatpush.bf16.msra.mxu0 %v3745
    %5069 = vmatpush.bf16.msra.mxu0 %v3739
    %5070 = vmatmul.bf16.gmra.mxu0 %v72
    %v5071 = vpop.f32.mrf.mxu0
    %v5072 = vadd.f32 %v5059, %v5071
    %v5073 = vpop.f32.mrf.mxu0
    %5074 = vdwg.mxu0
    %5075 = vmatpush.bf16.msra.mxu0 %v3829
    %5076 = vmatpush.bf16.msra.mxu0 %v3823
    %5077 = vmatpush.bf16.msra.mxu0 %v3817
    %5078 = vmatpush.bf16.msra.mxu0 %v3811
    %5079 = vmatpush.bf16.msra.mxu0 %v3805
    %5080 = vmatpush.bf16.msra.mxu0 %v3799
    %5081 = vmatpush.bf16.msra.mxu0 %v3793
    %5082 = vmatpush.bf16.msra.mxu0 %v3787
    %5083 = vmatmul.bf16.gmra.mxu0 %v73
    %v5084 = vpop.f32.mrf.mxu0
    %v5085 = vadd.f32 %v5072, %v5084
    %v5086 = vpop.f32.mrf.mxu0
    %5087 = vdwg.mxu0
    %5088 = vmatpush.bf16.msra.mxu0 %v3877
    %5089 = vmatpush.bf16.msra.mxu0 %v3871
    %5090 = vmatpush.bf16.msra.mxu0 %v3865
    %5091 = vmatpush.bf16.msra.mxu0 %v3859
    %5092 = vmatpush.bf16.msra.mxu0 %v3853
    %5093 = vmatpush.bf16.msra.mxu0 %v3847
    %5094 = vmatpush.bf16.msra.mxu0 %v3841
    %5095 = vmatpush.bf16.msra.mxu0 %v3835
    %5096 = vmatmul.bf16.gmra.mxu0 %v74
    %v5097 = vpop.f32.mrf.mxu0
    %v5098 = vadd.f32 %v5085, %v5097
    %v5099 = vpop.f32.mrf.mxu0
    %5100 = vdwg.mxu0
    %5101 = vmatpush.bf16.msra.mxu0 %v3925
    %5102 = vmatpush.bf16.msra.mxu0 %v3919
    %5103 = vmatpush.bf16.msra.mxu0 %v3913
    %5104 = vmatpush.bf16.msra.mxu0 %v3907
    %5105 = vmatpush.bf16.msra.mxu0 %v3901
    %5106 = vmatpush.bf16.msra.mxu0 %v3895
    %5107 = vmatpush.bf16.msra.mxu0 %v3889
    %5108 = vmatpush.bf16.msra.mxu0 %v3883
    %5109 = vmatmul.bf16.gmra.mxu0 %v75
    %v5110 = vpop.f32.mrf.mxu0
    %v5111 = vadd.f32 %v5098, %v5110
    %v5112 = vpop.f32.mrf.mxu0
    %5113 = vdwg.mxu0
    %5114 = vmatpush.bf16.msra.mxu0 %v3206
    %5115 = vmatpush.bf16.msra.mxu0 %v3200
    %5116 = vmatpush.bf16.msra.mxu0 %v3194
    %5117 = vmatpush.bf16.msra.mxu0 %v3188
    %5118 = vmatpush.bf16.msra.mxu0 %v3182
    %5119 = vmatpush.bf16.msra.mxu0 %v3176
    %5120 = vmatpush.bf16.msra.mxu0 %v3170
    %5121 = vmatpush.bf16.msra.mxu0 %v3164
    %5122 = vmatmul.bf16.gmra.mxu0 %v60
    %v5123 = vpop.f32.mrf.mxu0
    %v5124 = vadd.f32 %v848, %v5123
    %v5125 = vpop.f32.mrf.mxu0
    %5126 = vdwg.mxu0
    %5127 = vmatpush.bf16.msra.mxu0 %v3254
    %5128 = vmatpush.bf16.msra.mxu0 %v3248
    %5129 = vmatpush.bf16.msra.mxu0 %v3242
    %5130 = vmatpush.bf16.msra.mxu0 %v3236
    %5131 = vmatpush.bf16.msra.mxu0 %v3230
    %5132 = vmatpush.bf16.msra.mxu0 %v3224
    %5133 = vmatpush.bf16.msra.mxu0 %v3218
    %5134 = vmatpush.bf16.msra.mxu0 %v3212
    %5135 = vmatmul.bf16.gmra.mxu0 %v61
    %v5136 = vpop.f32.mrf.mxu0
    %v5137 = vadd.f32 %v5124, %v5136
    %v5138 = vpop.f32.mrf.mxu0
    %5139 = vdwg.mxu0
    %5140 = vmatpush.bf16.msra.mxu0 %v3302
    %5141 = vmatpush.bf16.msra.mxu0 %v3296
    %5142 = vmatpush.bf16.msra.mxu0 %v3290
    %5143 = vmatpush.bf16.msra.mxu0 %v3284
    %5144 = vmatpush.bf16.msra.mxu0 %v3278
    %5145 = vmatpush.bf16.msra.mxu0 %v3272
    %5146 = vmatpush.bf16.msra.mxu0 %v3266
    %5147 = vmatpush.bf16.msra.mxu0 %v3260
    %5148 = vmatmul.bf16.gmra.mxu0 %v62
    %v5149 = vpop.f32.mrf.mxu0
    %v5150 = vadd.f32 %v5137, %v5149
    %v5151 = vpop.f32.mrf.mxu0
    %5152 = vdwg.mxu0
    %5153 = vmatpush.bf16.msra.mxu0 %v3350
    %5154 = vmatpush.bf16.msra.mxu0 %v3344
    %5155 = vmatpush.bf16.msra.mxu0 %v3338
    %5156 = vmatpush.bf16.msra.mxu0 %v3332
    %5157 = vmatpush.bf16.msra.mxu0 %v3326
    %5158 = vmatpush.bf16.msra.mxu0 %v3320
    %5159 = vmatpush.bf16.msra.mxu0 %v3314
    %5160 = vmatpush.bf16.msra.mxu0 %v3308
    %5161 = vmatmul.bf16.gmra.mxu0 %v63
    %v5162 = vpop.f32.mrf.mxu0
    %v5163 = vadd.f32 %v5150, %v5162
    %v5164 = vpop.f32.mrf.mxu0
    %5165 = vdwg.mxu0
    %5166 = vmatpush.bf16.msra.mxu0 %v3398
    %5167 = vmatpush.bf16.msra.mxu0 %v3392
    %5168 = vmatpush.bf16.msra.mxu0 %v3386
    %5169 = vmatpush.bf16.msra.mxu0 %v3380
    %5170 = vmatpush.bf16.msra.mxu0 %v3374
    %5171 = vmatpush.bf16.msra.mxu0 %v3368
    %5172 = vmatpush.bf16.msra.mxu0 %v3362
    %5173 = vmatpush.bf16.msra.mxu0 %v3356
    %5174 = vmatmul.bf16.gmra.mxu0 %v64
    %v5175 = vpop.f32.mrf.mxu0
    %v5176 = vadd.f32 %v5163, %v5175
    %v5177 = vpop.f32.mrf.mxu0
    %5178 = vdwg.mxu0
    %5179 = vmatpush.bf16.msra.mxu0 %v3446
    %5180 = vmatpush.bf16.msra.mxu0 %v3440
    %5181 = vmatpush.bf16.msra.mxu0 %v3434
    %5182 = vmatpush.bf16.msra.mxu0 %v3428
    %5183 = vmatpush.bf16.msra.mxu0 %v3422
    %5184 = vmatpush.bf16.msra.mxu0 %v3416
    %5185 = vmatpush.bf16.msra.mxu0 %v3410
    %5186 = vmatpush.bf16.msra.mxu0 %v3404
    %5187 = vmatmul.bf16.gmra.mxu0 %v65
    %v5188 = vpop.f32.mrf.mxu0
    %v5189 = vadd.f32 %v5176, %v5188
    %v5190 = vpop.f32.mrf.mxu0
    %5191 = vdwg.mxu0
    %5192 = vmatpush.bf16.msra.mxu0 %v3494
    %5193 = vmatpush.bf16.msra.mxu0 %v3488
    %5194 = vmatpush.bf16.msra.mxu0 %v3482
    %5195 = vmatpush.bf16.msra.mxu0 %v3476
    %5196 = vmatpush.bf16.msra.mxu0 %v3470
    %5197 = vmatpush.bf16.msra.mxu0 %v3464
    %5198 = vmatpush.bf16.msra.mxu0 %v3458
    %5199 = vmatpush.bf16.msra.mxu0 %v3452
    %5200 = vmatmul.bf16.gmra.mxu0 %v66
    %v5201 = vpop.f32.mrf.mxu0
    %v5202 = vadd.f32 %v5189, %v5201
    %v5203 = vpop.f32.mrf.mxu0
    %5204 = vdwg.mxu0
    %5205 = vmatpush.bf16.msra.mxu0 %v3542
    %5206 = vmatpush.bf16.msra.mxu0 %v3536
    %5207 = vmatpush.bf16.msra.mxu0 %v3530
    %5208 = vmatpush.bf16.msra.mxu0 %v3524
    %5209 = vmatpush.bf16.msra.mxu0 %v3518
    %5210 = vmatpush.bf16.msra.mxu0 %v3512
    %5211 = vmatpush.bf16.msra.mxu0 %v3506
    %5212 = vmatpush.bf16.msra.mxu0 %v3500
    %5213 = vmatmul.bf16.gmra.mxu0 %v67
    %v5214 = vpop.f32.mrf.mxu0
    %v5215 = vadd.f32 %v5202, %v5214
    %v5216 = vpop.f32.mrf.mxu0
    %5217 = vdwg.mxu0
    %5218 = vmatpush.bf16.msra.mxu0 %v3590
    %5219 = vmatpush.bf16.msra.mxu0 %v3584
    %5220 = vmatpush.bf16.msra.mxu0 %v3578
    %5221 = vmatpush.bf16.msra.mxu0 %v3572
    %5222 = vmatpush.bf16.msra.mxu0 %v3566
    %5223 = vmatpush.bf16.msra.mxu0 %v3560
    %5224 = vmatpush.bf16.msra.mxu0 %v3554
    %5225 = vmatpush.bf16.msra.mxu0 %v3548
    %5226 = vmatmul.bf16.gmra.mxu0 %v68
    %v5227 = vpop.f32.mrf.mxu0
    %v5228 = vadd.f32 %v5215, %v5227
    %v5229 = vpop.f32.mrf.mxu0
    %5230 = vdwg.mxu0
    %5231 = vmatpush.bf16.msra.mxu0 %v3638
    %5232 = vmatpush.bf16.msra.mxu0 %v3632
    %5233 = vmatpush.bf16.msra.mxu0 %v3626
    %5234 = vmatpush.bf16.msra.mxu0 %v3620
    %5235 = vmatpush.bf16.msra.mxu0 %v3614
    %5236 = vmatpush.bf16.msra.mxu0 %v3608
    %5237 = vmatpush.bf16.msra.mxu0 %v3602
    %5238 = vmatpush.bf16.msra.mxu0 %v3596
    %5239 = vmatmul.bf16.gmra.mxu0 %v69
    %v5240 = vpop.f32.mrf.mxu0
    %v5241 = vadd.f32 %v5228, %v5240
    %v5242 = vpop.f32.mrf.mxu0
    %5243 = vdwg.mxu0
    %5244 = vmatpush.bf16.msra.mxu0 %v3686
    %5245 = vmatpush.bf16.msra.mxu0 %v3680
    %5246 = vmatpush.bf16.msra.mxu0 %v3674
    %5247 = vmatpush.bf16.msra.mxu0 %v3668
    %5248 = vmatpush.bf16.msra.mxu0 %v3662
    %5249 = vmatpush.bf16.msra.mxu0 %v3656
    %5250 = vmatpush.bf16.msra.mxu0 %v3650
    %5251 = vmatpush.bf16.msra.mxu0 %v3644
    %5252 = vmatmul.bf16.gmra.mxu0 %v70
    %v5253 = vpop.f32.mrf.mxu0
    %v5254 = vadd.f32 %v5241, %v5253
    %v5255 = vpop.f32.mrf.mxu0
    %5256 = vdwg.mxu0
    %5257 = vmatpush.bf16.msra.mxu0 %v3734
    %5258 = vmatpush.bf16.msra.mxu0 %v3728
    %5259 = vmatpush.bf16.msra.mxu0 %v3722
    %5260 = vmatpush.bf16.msra.mxu0 %v3716
    %5261 = vmatpush.bf16.msra.mxu0 %v3710
    %5262 = vmatpush.bf16.msra.mxu0 %v3704
    %5263 = vmatpush.bf16.msra.mxu0 %v3698
    %5264 = vmatpush.bf16.msra.mxu0 %v3692
    %5265 = vmatmul.bf16.gmra.mxu0 %v71
    %v5266 = vpop.f32.mrf.mxu0
    %v5267 = vadd.f32 %v5254, %v5266
    %v5268 = vpop.f32.mrf.mxu0
    %5269 = vdwg.mxu0
    %5270 = vmatpush.bf16.msra.mxu0 %v3782
    %5271 = vmatpush.bf16.msra.mxu0 %v3776
    %5272 = vmatpush.bf16.msra.mxu0 %v3770
    %5273 = vmatpush.bf16.msra.mxu0 %v3764
    %5274 = vmatpush.bf16.msra.mxu0 %v3758
    %5275 = vmatpush.bf16.msra.mxu0 %v3752
    %5276 = vmatpush.bf16.msra.mxu0 %v3746
    %5277 = vmatpush.bf16.msra.mxu0 %v3740
    %5278 = vmatmul.bf16.gmra.mxu0 %v72
    %v5279 = vpop.f32.mrf.mxu0
    %v5280 = vadd.f32 %v5267, %v5279
    %v5281 = vpop.f32.mrf.mxu0
    %5282 = vdwg.mxu0
    %5283 = vmatpush.bf16.msra.mxu0 %v3830
    %5284 = vmatpush.bf16.msra.mxu0 %v3824
    %5285 = vmatpush.bf16.msra.mxu0 %v3818
    %5286 = vmatpush.bf16.msra.mxu0 %v3812
    %5287 = vmatpush.bf16.msra.mxu0 %v3806
    %5288 = vmatpush.bf16.msra.mxu0 %v3800
    %5289 = vmatpush.bf16.msra.mxu0 %v3794
    %5290 = vmatpush.bf16.msra.mxu0 %v3788
    %5291 = vmatmul.bf16.gmra.mxu0 %v73
    %v5292 = vpop.f32.mrf.mxu0
    %v5293 = vadd.f32 %v5280, %v5292
    %v5294 = vpop.f32.mrf.mxu0
    %5295 = vdwg.mxu0
    %5296 = vmatpush.bf16.msra.mxu0 %v3878
    %5297 = vmatpush.bf16.msra.mxu0 %v3872
    %5298 = vmatpush.bf16.msra.mxu0 %v3866
    %5299 = vmatpush.bf16.msra.mxu0 %v3860
    %5300 = vmatpush.bf16.msra.mxu0 %v3854
    %5301 = vmatpush.bf16.msra.mxu0 %v3848
    %5302 = vmatpush.bf16.msra.mxu0 %v3842
    %5303 = vmatpush.bf16.msra.mxu0 %v3836
    %5304 = vmatmul.bf16.gmra.mxu0 %v74
    %v5305 = vpop.f32.mrf.mxu0
    %v5306 = vadd.f32 %v5293, %v5305
    %v5307 = vpop.f32.mrf.mxu0
    %5308 = vdwg.mxu0
    %5309 = vmatpush.bf16.msra.mxu0 %v3926
    %5310 = vmatpush.bf16.msra.mxu0 %v3920
    %5311 = vmatpush.bf16.msra.mxu0 %v3914
    %5312 = vmatpush.bf16.msra.mxu0 %v3908
    %5313 = vmatpush.bf16.msra.mxu0 %v3902
    %5314 = vmatpush.bf16.msra.mxu0 %v3896
    %5315 = vmatpush.bf16.msra.mxu0 %v3890
    %5316 = vmatpush.bf16.msra.mxu0 %v3884
    %5317 = vmatmul.bf16.gmra.mxu0 %v75
    %v5318 = vpop.f32.mrf.mxu0
    %v5319 = vadd.f32 %v5306, %v5318
    %v5320 = vpop.f32.mrf.mxu0
    %5321 = vdwg.mxu0
    %5322 = vmatpush.bf16.msra.mxu0 %v3207
    %5323 = vmatpush.bf16.msra.mxu0 %v3201
    %5324 = vmatpush.bf16.msra.mxu0 %v3195
    %5325 = vmatpush.bf16.msra.mxu0 %v3189
    %5326 = vmatpush.bf16.msra.mxu0 %v3183
    %5327 = vmatpush.bf16.msra.mxu0 %v3177
    %5328 = vmatpush.bf16.msra.mxu0 %v3171
    %5329 = vmatpush.bf16.msra.mxu0 %v3165
    %5330 = vmatmul.bf16.gmra.mxu0 %v60
    %v5331 = vpop.f32.mrf.mxu0
    %v5332 = vadd.f32 %v849, %v5331
    %v5333 = vpop.f32.mrf.mxu0
    %5334 = vdwg.mxu0
    %5335 = vmatpush.bf16.msra.mxu0 %v3255
    %5336 = vmatpush.bf16.msra.mxu0 %v3249
    %5337 = vmatpush.bf16.msra.mxu0 %v3243
    %5338 = vmatpush.bf16.msra.mxu0 %v3237
    %5339 = vmatpush.bf16.msra.mxu0 %v3231
    %5340 = vmatpush.bf16.msra.mxu0 %v3225
    %5341 = vmatpush.bf16.msra.mxu0 %v3219
    %5342 = vmatpush.bf16.msra.mxu0 %v3213
    %5343 = vmatmul.bf16.gmra.mxu0 %v61
    %v5344 = vpop.f32.mrf.mxu0
    %v5345 = vadd.f32 %v5332, %v5344
    %v5346 = vpop.f32.mrf.mxu0
    %5347 = vdwg.mxu0
    %5348 = vmatpush.bf16.msra.mxu0 %v3303
    %5349 = vmatpush.bf16.msra.mxu0 %v3297
    %5350 = vmatpush.bf16.msra.mxu0 %v3291
    %5351 = vmatpush.bf16.msra.mxu0 %v3285
    %5352 = vmatpush.bf16.msra.mxu0 %v3279
    %5353 = vmatpush.bf16.msra.mxu0 %v3273
    %5354 = vmatpush.bf16.msra.mxu0 %v3267
    %5355 = vmatpush.bf16.msra.mxu0 %v3261
    %5356 = vmatmul.bf16.gmra.mxu0 %v62
    %v5357 = vpop.f32.mrf.mxu0
    %v5358 = vadd.f32 %v5345, %v5357
    %v5359 = vpop.f32.mrf.mxu0
    %5360 = vdwg.mxu0
    %5361 = vmatpush.bf16.msra.mxu0 %v3351
    %5362 = vmatpush.bf16.msra.mxu0 %v3345
    %5363 = vmatpush.bf16.msra.mxu0 %v3339
    %5364 = vmatpush.bf16.msra.mxu0 %v3333
    %5365 = vmatpush.bf16.msra.mxu0 %v3327
    %5366 = vmatpush.bf16.msra.mxu0 %v3321
    %5367 = vmatpush.bf16.msra.mxu0 %v3315
    %5368 = vmatpush.bf16.msra.mxu0 %v3309
    %5369 = vmatmul.bf16.gmra.mxu0 %v63
    %v5370 = vpop.f32.mrf.mxu0
    %v5371 = vadd.f32 %v5358, %v5370
    %v5372 = vpop.f32.mrf.mxu0
    %5373 = vdwg.mxu0
    %5374 = vmatpush.bf16.msra.mxu0 %v3399
    %5375 = vmatpush.bf16.msra.mxu0 %v3393
    %5376 = vmatpush.bf16.msra.mxu0 %v3387
    %5377 = vmatpush.bf16.msra.mxu0 %v3381
    %5378 = vmatpush.bf16.msra.mxu0 %v3375
    %5379 = vmatpush.bf16.msra.mxu0 %v3369
    %5380 = vmatpush.bf16.msra.mxu0 %v3363
    %5381 = vmatpush.bf16.msra.mxu0 %v3357
    %5382 = vmatmul.bf16.gmra.mxu0 %v64
    %v5383 = vpop.f32.mrf.mxu0
    %v5384 = vadd.f32 %v5371, %v5383
    %v5385 = vpop.f32.mrf.mxu0
    %5386 = vdwg.mxu0
    %5387 = vmatpush.bf16.msra.mxu0 %v3447
    %5388 = vmatpush.bf16.msra.mxu0 %v3441
    %5389 = vmatpush.bf16.msra.mxu0 %v3435
    %5390 = vmatpush.bf16.msra.mxu0 %v3429
    %5391 = vmatpush.bf16.msra.mxu0 %v3423
    %5392 = vmatpush.bf16.msra.mxu0 %v3417
    %5393 = vmatpush.bf16.msra.mxu0 %v3411
    %5394 = vmatpush.bf16.msra.mxu0 %v3405
    %5395 = vmatmul.bf16.gmra.mxu0 %v65
    %v5396 = vpop.f32.mrf.mxu0
    %v5397 = vadd.f32 %v5384, %v5396
    %v5398 = vpop.f32.mrf.mxu0
    %5399 = vdwg.mxu0
    %5400 = vmatpush.bf16.msra.mxu0 %v3495
    %5401 = vmatpush.bf16.msra.mxu0 %v3489
    %5402 = vmatpush.bf16.msra.mxu0 %v3483
    %5403 = vmatpush.bf16.msra.mxu0 %v3477
    %5404 = vmatpush.bf16.msra.mxu0 %v3471
    %5405 = vmatpush.bf16.msra.mxu0 %v3465
    %5406 = vmatpush.bf16.msra.mxu0 %v3459
    %5407 = vmatpush.bf16.msra.mxu0 %v3453
    %5408 = vmatmul.bf16.gmra.mxu0 %v66
    %v5409 = vpop.f32.mrf.mxu0
    %v5410 = vadd.f32 %v5397, %v5409
    %v5411 = vpop.f32.mrf.mxu0
    %5412 = vdwg.mxu0
    %5413 = vmatpush.bf16.msra.mxu0 %v3543
    %5414 = vmatpush.bf16.msra.mxu0 %v3537
    %5415 = vmatpush.bf16.msra.mxu0 %v3531
    %5416 = vmatpush.bf16.msra.mxu0 %v3525
    %5417 = vmatpush.bf16.msra.mxu0 %v3519
    %5418 = vmatpush.bf16.msra.mxu0 %v3513
    %5419 = vmatpush.bf16.msra.mxu0 %v3507
    %5420 = vmatpush.bf16.msra.mxu0 %v3501
    %5421 = vmatmul.bf16.gmra.mxu0 %v67
    %v5422 = vpop.f32.mrf.mxu0
    %v5423 = vadd.f32 %v5410, %v5422
    %v5424 = vpop.f32.mrf.mxu0
    %5425 = vdwg.mxu0
    %5426 = vmatpush.bf16.msra.mxu0 %v3591
    %5427 = vmatpush.bf16.msra.mxu0 %v3585
    %5428 = vmatpush.bf16.msra.mxu0 %v3579
    %5429 = vmatpush.bf16.msra.mxu0 %v3573
    %5430 = vmatpush.bf16.msra.mxu0 %v3567
    %5431 = vmatpush.bf16.msra.mxu0 %v3561
    %5432 = vmatpush.bf16.msra.mxu0 %v3555
    %5433 = vmatpush.bf16.msra.mxu0 %v3549
    %5434 = vmatmul.bf16.gmra.mxu0 %v68
    %v5435 = vpop.f32.mrf.mxu0
    %v5436 = vadd.f32 %v5423, %v5435
    %v5437 = vpop.f32.mrf.mxu0
    %5438 = vdwg.mxu0
    %5439 = vmatpush.bf16.msra.mxu0 %v3639
    %5440 = vmatpush.bf16.msra.mxu0 %v3633
    %5441 = vmatpush.bf16.msra.mxu0 %v3627
    %5442 = vmatpush.bf16.msra.mxu0 %v3621
    %5443 = vmatpush.bf16.msra.mxu0 %v3615
    %5444 = vmatpush.bf16.msra.mxu0 %v3609
    %5445 = vmatpush.bf16.msra.mxu0 %v3603
    %5446 = vmatpush.bf16.msra.mxu0 %v3597
    %5447 = vmatmul.bf16.gmra.mxu0 %v69
    %v5448 = vpop.f32.mrf.mxu0
    %v5449 = vadd.f32 %v5436, %v5448
    %v5450 = vpop.f32.mrf.mxu0
    %5451 = vdwg.mxu0
    %5452 = vmatpush.bf16.msra.mxu0 %v3687
    %5453 = vmatpush.bf16.msra.mxu0 %v3681
    %5454 = vmatpush.bf16.msra.mxu0 %v3675
    %5455 = vmatpush.bf16.msra.mxu0 %v3669
    %5456 = vmatpush.bf16.msra.mxu0 %v3663
    %5457 = vmatpush.bf16.msra.mxu0 %v3657
    %5458 = vmatpush.bf16.msra.mxu0 %v3651
    %5459 = vmatpush.bf16.msra.mxu0 %v3645
    %5460 = vmatmul.bf16.gmra.mxu0 %v70
    %v5461 = vpop.f32.mrf.mxu0
    %v5462 = vadd.f32 %v5449, %v5461
    %v5463 = vpop.f32.mrf.mxu0
    %5464 = vdwg.mxu0
    %5465 = vmatpush.bf16.msra.mxu0 %v3735
    %5466 = vmatpush.bf16.msra.mxu0 %v3729
    %5467 = vmatpush.bf16.msra.mxu0 %v3723
    %5468 = vmatpush.bf16.msra.mxu0 %v3717
    %5469 = vmatpush.bf16.msra.mxu0 %v3711
    %5470 = vmatpush.bf16.msra.mxu0 %v3705
    %5471 = vmatpush.bf16.msra.mxu0 %v3699
    %5472 = vmatpush.bf16.msra.mxu0 %v3693
    %5473 = vmatmul.bf16.gmra.mxu0 %v71
    %v5474 = vpop.f32.mrf.mxu0
    %v5475 = vadd.f32 %v5462, %v5474
    %v5476 = vpop.f32.mrf.mxu0
    %5477 = vdwg.mxu0
    %5478 = vmatpush.bf16.msra.mxu0 %v3783
    %5479 = vmatpush.bf16.msra.mxu0 %v3777
    %5480 = vmatpush.bf16.msra.mxu0 %v3771
    %5481 = vmatpush.bf16.msra.mxu0 %v3765
    %5482 = vmatpush.bf16.msra.mxu0 %v3759
    %5483 = vmatpush.bf16.msra.mxu0 %v3753
    %5484 = vmatpush.bf16.msra.mxu0 %v3747
    %5485 = vmatpush.bf16.msra.mxu0 %v3741
    %5486 = vmatmul.bf16.gmra.mxu0 %v72
    %v5487 = vpop.f32.mrf.mxu0
    %v5488 = vadd.f32 %v5475, %v5487
    %v5489 = vpop.f32.mrf.mxu0
    %5490 = vdwg.mxu0
    %5491 = vmatpush.bf16.msra.mxu0 %v3831
    %5492 = vmatpush.bf16.msra.mxu0 %v3825
    %5493 = vmatpush.bf16.msra.mxu0 %v3819
    %5494 = vmatpush.bf16.msra.mxu0 %v3813
    %5495 = vmatpush.bf16.msra.mxu0 %v3807
    %5496 = vmatpush.bf16.msra.mxu0 %v3801
    %5497 = vmatpush.bf16.msra.mxu0 %v3795
    %5498 = vmatpush.bf16.msra.mxu0 %v3789
    %5499 = vmatmul.bf16.gmra.mxu0 %v73
    %v5500 = vpop.f32.mrf.mxu0
    %v5501 = vadd.f32 %v5488, %v5500
    %v5502 = vpop.f32.mrf.mxu0
    %5503 = vdwg.mxu0
    %5504 = vmatpush.bf16.msra.mxu0 %v3879
    %5505 = vmatpush.bf16.msra.mxu0 %v3873
    %5506 = vmatpush.bf16.msra.mxu0 %v3867
    %5507 = vmatpush.bf16.msra.mxu0 %v3861
    %5508 = vmatpush.bf16.msra.mxu0 %v3855
    %5509 = vmatpush.bf16.msra.mxu0 %v3849
    %5510 = vmatpush.bf16.msra.mxu0 %v3843
    %5511 = vmatpush.bf16.msra.mxu0 %v3837
    %5512 = vmatmul.bf16.gmra.mxu0 %v74
    %v5513 = vpop.f32.mrf.mxu0
    %v5514 = vadd.f32 %v5501, %v5513
    %v5515 = vpop.f32.mrf.mxu0
    %5516 = vdwg.mxu0
    %5517 = vmatpush.bf16.msra.mxu0 %v3927
    %5518 = vmatpush.bf16.msra.mxu0 %v3921
    %5519 = vmatpush.bf16.msra.mxu0 %v3915
    %5520 = vmatpush.bf16.msra.mxu0 %v3909
    %5521 = vmatpush.bf16.msra.mxu0 %v3903
    %5522 = vmatpush.bf16.msra.mxu0 %v3897
    %5523 = vmatpush.bf16.msra.mxu0 %v3891
    %5524 = vmatpush.bf16.msra.mxu0 %v3885
    %5525 = vmatmul.bf16.gmra.mxu0 %v75
    %v5526 = vpop.f32.mrf.mxu0
    %v5527 = vadd.f32 %v5514, %v5526
    %v5528 = vpop.f32.mrf.mxu0
    %5529 = vdwg.mxu0
    %5530 = vmatpush.bf16.msra.mxu0 %v3208
    %5531 = vmatpush.bf16.msra.mxu0 %v3202
    %5532 = vmatpush.bf16.msra.mxu0 %v3196
    %5533 = vmatpush.bf16.msra.mxu0 %v3190
    %5534 = vmatpush.bf16.msra.mxu0 %v3184
    %5535 = vmatpush.bf16.msra.mxu0 %v3178
    %5536 = vmatpush.bf16.msra.mxu0 %v3172
    %5537 = vmatpush.bf16.msra.mxu0 %v3166
    %5538 = vmatmul.bf16.gmra.mxu0 %v60
    %v5539 = vpop.f32.mrf.mxu0
    %v5540 = vadd.f32 %v850, %v5539
    %v5541 = vpop.f32.mrf.mxu0
    %5542 = vdwg.mxu0
    %5543 = vmatpush.bf16.msra.mxu0 %v3256
    %5544 = vmatpush.bf16.msra.mxu0 %v3250
    %5545 = vmatpush.bf16.msra.mxu0 %v3244
    %5546 = vmatpush.bf16.msra.mxu0 %v3238
    %5547 = vmatpush.bf16.msra.mxu0 %v3232
    %5548 = vmatpush.bf16.msra.mxu0 %v3226
    %5549 = vmatpush.bf16.msra.mxu0 %v3220
    %5550 = vmatpush.bf16.msra.mxu0 %v3214
    %5551 = vmatmul.bf16.gmra.mxu0 %v61
    %v5552 = vpop.f32.mrf.mxu0
    %v5553 = vadd.f32 %v5540, %v5552
    %v5554 = vpop.f32.mrf.mxu0
    %5555 = vdwg.mxu0
    %5556 = vmatpush.bf16.msra.mxu0 %v3304
    %5557 = vmatpush.bf16.msra.mxu0 %v3298
    %5558 = vmatpush.bf16.msra.mxu0 %v3292
    %5559 = vmatpush.bf16.msra.mxu0 %v3286
    %5560 = vmatpush.bf16.msra.mxu0 %v3280
    %5561 = vmatpush.bf16.msra.mxu0 %v3274
    %5562 = vmatpush.bf16.msra.mxu0 %v3268
    %5563 = vmatpush.bf16.msra.mxu0 %v3262
    %5564 = vmatmul.bf16.gmra.mxu0 %v62
    %v5565 = vpop.f32.mrf.mxu0
    %v5566 = vadd.f32 %v5553, %v5565
    %v5567 = vpop.f32.mrf.mxu0
    %5568 = vdwg.mxu0
    %5569 = vmatpush.bf16.msra.mxu0 %v3352
    %5570 = vmatpush.bf16.msra.mxu0 %v3346
    %5571 = vmatpush.bf16.msra.mxu0 %v3340
    %5572 = vmatpush.bf16.msra.mxu0 %v3334
    %5573 = vmatpush.bf16.msra.mxu0 %v3328
    %5574 = vmatpush.bf16.msra.mxu0 %v3322
    %5575 = vmatpush.bf16.msra.mxu0 %v3316
    %5576 = vmatpush.bf16.msra.mxu0 %v3310
    %5577 = vmatmul.bf16.gmra.mxu0 %v63
    %v5578 = vpop.f32.mrf.mxu0
    %v5579 = vadd.f32 %v5566, %v5578
    %v5580 = vpop.f32.mrf.mxu0
    %5581 = vdwg.mxu0
    %5582 = vmatpush.bf16.msra.mxu0 %v3400
    %5583 = vmatpush.bf16.msra.mxu0 %v3394
    %5584 = vmatpush.bf16.msra.mxu0 %v3388
    %5585 = vmatpush.bf16.msra.mxu0 %v3382
    %5586 = vmatpush.bf16.msra.mxu0 %v3376
    %5587 = vmatpush.bf16.msra.mxu0 %v3370
    %5588 = vmatpush.bf16.msra.mxu0 %v3364
    %5589 = vmatpush.bf16.msra.mxu0 %v3358
    %5590 = vmatmul.bf16.gmra.mxu0 %v64
    %v5591 = vpop.f32.mrf.mxu0
    %v5592 = vadd.f32 %v5579, %v5591
    %v5593 = vpop.f32.mrf.mxu0
    %5594 = vdwg.mxu0
    %5595 = vmatpush.bf16.msra.mxu0 %v3448
    %5596 = vmatpush.bf16.msra.mxu0 %v3442
    %5597 = vmatpush.bf16.msra.mxu0 %v3436
    %5598 = vmatpush.bf16.msra.mxu0 %v3430
    %5599 = vmatpush.bf16.msra.mxu0 %v3424
    %5600 = vmatpush.bf16.msra.mxu0 %v3418
    %5601 = vmatpush.bf16.msra.mxu0 %v3412
    %5602 = vmatpush.bf16.msra.mxu0 %v3406
    %5603 = vmatmul.bf16.gmra.mxu0 %v65
    %v5604 = vpop.f32.mrf.mxu0
    %v5605 = vadd.f32 %v5592, %v5604
    %v5606 = vpop.f32.mrf.mxu0
    %5607 = vdwg.mxu0
    %5608 = vmatpush.bf16.msra.mxu0 %v3496
    %5609 = vmatpush.bf16.msra.mxu0 %v3490
    %5610 = vmatpush.bf16.msra.mxu0 %v3484
    %5611 = vmatpush.bf16.msra.mxu0 %v3478
    %5612 = vmatpush.bf16.msra.mxu0 %v3472
    %5613 = vmatpush.bf16.msra.mxu0 %v3466
    %5614 = vmatpush.bf16.msra.mxu0 %v3460
    %5615 = vmatpush.bf16.msra.mxu0 %v3454
    %5616 = vmatmul.bf16.gmra.mxu0 %v66
    %v5617 = vpop.f32.mrf.mxu0
    %v5618 = vadd.f32 %v5605, %v5617
    %v5619 = vpop.f32.mrf.mxu0
    %5620 = vdwg.mxu0
    %5621 = vmatpush.bf16.msra.mxu0 %v3544
    %5622 = vmatpush.bf16.msra.mxu0 %v3538
    %5623 = vmatpush.bf16.msra.mxu0 %v3532
    %5624 = vmatpush.bf16.msra.mxu0 %v3526
    %5625 = vmatpush.bf16.msra.mxu0 %v3520
    %5626 = vmatpush.bf16.msra.mxu0 %v3514
    %5627 = vmatpush.bf16.msra.mxu0 %v3508
    %5628 = vmatpush.bf16.msra.mxu0 %v3502
    %5629 = vmatmul.bf16.gmra.mxu0 %v67
    %v5630 = vpop.f32.mrf.mxu0
    %v5631 = vadd.f32 %v5618, %v5630
    %v5632 = vpop.f32.mrf.mxu0
    %5633 = vdwg.mxu0
    %5634 = vmatpush.bf16.msra.mxu0 %v3592
    %5635 = vmatpush.bf16.msra.mxu0 %v3586
    %5636 = vmatpush.bf16.msra.mxu0 %v3580
    %5637 = vmatpush.bf16.msra.mxu0 %v3574
    %5638 = vmatpush.bf16.msra.mxu0 %v3568
    %5639 = vmatpush.bf16.msra.mxu0 %v3562
    %5640 = vmatpush.bf16.msra.mxu0 %v3556
    %5641 = vmatpush.bf16.msra.mxu0 %v3550
    %5642 = vmatmul.bf16.gmra.mxu0 %v68
    %v5643 = vpop.f32.mrf.mxu0
    %v5644 = vadd.f32 %v5631, %v5643
    %v5645 = vpop.f32.mrf.mxu0
    %5646 = vdwg.mxu0
    %5647 = vmatpush.bf16.msra.mxu0 %v3640
    %5648 = vmatpush.bf16.msra.mxu0 %v3634
    %5649 = vmatpush.bf16.msra.mxu0 %v3628
    %5650 = vmatpush.bf16.msra.mxu0 %v3622
    %5651 = vmatpush.bf16.msra.mxu0 %v3616
    %5652 = vmatpush.bf16.msra.mxu0 %v3610
    %5653 = vmatpush.bf16.msra.mxu0 %v3604
    %5654 = vmatpush.bf16.msra.mxu0 %v3598
    %5655 = vmatmul.bf16.gmra.mxu0 %v69
    %v5656 = vpop.f32.mrf.mxu0
    %v5657 = vadd.f32 %v5644, %v5656
    %v5658 = vpop.f32.mrf.mxu0
    %5659 = vdwg.mxu0
    %5660 = vmatpush.bf16.msra.mxu0 %v3688
    %5661 = vmatpush.bf16.msra.mxu0 %v3682
    %5662 = vmatpush.bf16.msra.mxu0 %v3676
    %5663 = vmatpush.bf16.msra.mxu0 %v3670
    %5664 = vmatpush.bf16.msra.mxu0 %v3664
    %5665 = vmatpush.bf16.msra.mxu0 %v3658
    %5666 = vmatpush.bf16.msra.mxu0 %v3652
    %5667 = vmatpush.bf16.msra.mxu0 %v3646
    %5668 = vmatmul.bf16.gmra.mxu0 %v70
    %v5669 = vpop.f32.mrf.mxu0
    %v5670 = vadd.f32 %v5657, %v5669
    %v5671 = vpop.f32.mrf.mxu0
    %5672 = vdwg.mxu0
    %5673 = vmatpush.bf16.msra.mxu0 %v3736
    %5674 = vmatpush.bf16.msra.mxu0 %v3730
    %5675 = vmatpush.bf16.msra.mxu0 %v3724
    %5676 = vmatpush.bf16.msra.mxu0 %v3718
    %5677 = vmatpush.bf16.msra.mxu0 %v3712
    %5678 = vmatpush.bf16.msra.mxu0 %v3706
    %5679 = vmatpush.bf16.msra.mxu0 %v3700
    %5680 = vmatpush.bf16.msra.mxu0 %v3694
    %5681 = vmatmul.bf16.gmra.mxu0 %v71
    %v5682 = vpop.f32.mrf.mxu0
    %v5683 = vadd.f32 %v5670, %v5682
    %v5684 = vpop.f32.mrf.mxu0
    %5685 = vdwg.mxu0
    %5686 = vmatpush.bf16.msra.mxu0 %v3784
    %5687 = vmatpush.bf16.msra.mxu0 %v3778
    %5688 = vmatpush.bf16.msra.mxu0 %v3772
    %5689 = vmatpush.bf16.msra.mxu0 %v3766
    %5690 = vmatpush.bf16.msra.mxu0 %v3760
    %5691 = vmatpush.bf16.msra.mxu0 %v3754
    %5692 = vmatpush.bf16.msra.mxu0 %v3748
    %5693 = vmatpush.bf16.msra.mxu0 %v3742
    %5694 = vmatmul.bf16.gmra.mxu0 %v72
    %v5695 = vpop.f32.mrf.mxu0
    %v5696 = vadd.f32 %v5683, %v5695
    %v5697 = vpop.f32.mrf.mxu0
    %5698 = vdwg.mxu0
    %5699 = vmatpush.bf16.msra.mxu0 %v3832
    %5700 = vmatpush.bf16.msra.mxu0 %v3826
    %5701 = vmatpush.bf16.msra.mxu0 %v3820
    %5702 = vmatpush.bf16.msra.mxu0 %v3814
    %5703 = vmatpush.bf16.msra.mxu0 %v3808
    %5704 = vmatpush.bf16.msra.mxu0 %v3802
    %5705 = vmatpush.bf16.msra.mxu0 %v3796
    %5706 = vmatpush.bf16.msra.mxu0 %v3790
    %5707 = vmatmul.bf16.gmra.mxu0 %v73
    %v5708 = vpop.f32.mrf.mxu0
    %v5709 = vadd.f32 %v5696, %v5708
    %v5710 = vpop.f32.mrf.mxu0
    %5711 = vdwg.mxu0
    %5712 = vmatpush.bf16.msra.mxu0 %v3880
    %5713 = vmatpush.bf16.msra.mxu0 %v3874
    %5714 = vmatpush.bf16.msra.mxu0 %v3868
    %5715 = vmatpush.bf16.msra.mxu0 %v3862
    %5716 = vmatpush.bf16.msra.mxu0 %v3856
    %5717 = vmatpush.bf16.msra.mxu0 %v3850
    %5718 = vmatpush.bf16.msra.mxu0 %v3844
    %5719 = vmatpush.bf16.msra.mxu0 %v3838
    %5720 = vmatmul.bf16.gmra.mxu0 %v74
    %v5721 = vpop.f32.mrf.mxu0
    %v5722 = vadd.f32 %v5709, %v5721
    %v5723 = vpop.f32.mrf.mxu0
    %5724 = vdwg.mxu0
    %5725 = vmatpush.bf16.msra.mxu0 %v3928
    %5726 = vmatpush.bf16.msra.mxu0 %v3922
    %5727 = vmatpush.bf16.msra.mxu0 %v3916
    %5728 = vmatpush.bf16.msra.mxu0 %v3910
    %5729 = vmatpush.bf16.msra.mxu0 %v3904
    %5730 = vmatpush.bf16.msra.mxu0 %v3898
    %5731 = vmatpush.bf16.msra.mxu0 %v3892
    %5732 = vmatpush.bf16.msra.mxu0 %v3886
    %5733 = vmatmul.bf16.gmra.mxu0 %v75
    %v5734 = vpop.f32.mrf.mxu0
    %v5735 = vadd.f32 %v5722, %v5734
    %v5736 = vpop.f32.mrf.mxu0
    %5737 = vdwg.mxu0
    %5738 = vmatpush.bf16.msra.mxu0 %v3209
    %5739 = vmatpush.bf16.msra.mxu0 %v3203
    %5740 = vmatpush.bf16.msra.mxu0 %v3197
    %5741 = vmatpush.bf16.msra.mxu0 %v3191
    %5742 = vmatpush.bf16.msra.mxu0 %v3185
    %5743 = vmatpush.bf16.msra.mxu0 %v3179
    %5744 = vmatpush.bf16.msra.mxu0 %v3173
    %5745 = vmatpush.bf16.msra.mxu0 %v3167
    %5746 = vmatmul.bf16.gmra.mxu0 %v60
    %v5747 = vpop.f32.mrf.mxu0
    %v5748 = vadd.f32 %v851, %v5747
    %v5749 = vpop.f32.mrf.mxu0
    %5750 = vdwg.mxu0
    %5751 = vmatpush.bf16.msra.mxu0 %v3257
    %5752 = vmatpush.bf16.msra.mxu0 %v3251
    %5753 = vmatpush.bf16.msra.mxu0 %v3245
    %5754 = vmatpush.bf16.msra.mxu0 %v3239
    %5755 = vmatpush.bf16.msra.mxu0 %v3233
    %5756 = vmatpush.bf16.msra.mxu0 %v3227
    %5757 = vmatpush.bf16.msra.mxu0 %v3221
    %5758 = vmatpush.bf16.msra.mxu0 %v3215
    %5759 = vmatmul.bf16.gmra.mxu0 %v61
    %v5760 = vpop.f32.mrf.mxu0
    %v5761 = vadd.f32 %v5748, %v5760
    %v5762 = vpop.f32.mrf.mxu0
    %5763 = vdwg.mxu0
    %5764 = vmatpush.bf16.msra.mxu0 %v3305
    %5765 = vmatpush.bf16.msra.mxu0 %v3299
    %5766 = vmatpush.bf16.msra.mxu0 %v3293
    %5767 = vmatpush.bf16.msra.mxu0 %v3287
    %5768 = vmatpush.bf16.msra.mxu0 %v3281
    %5769 = vmatpush.bf16.msra.mxu0 %v3275
    %5770 = vmatpush.bf16.msra.mxu0 %v3269
    %5771 = vmatpush.bf16.msra.mxu0 %v3263
    %5772 = vmatmul.bf16.gmra.mxu0 %v62
    %v5773 = vpop.f32.mrf.mxu0
    %v5774 = vadd.f32 %v5761, %v5773
    %v5775 = vpop.f32.mrf.mxu0
    %5776 = vdwg.mxu0
    %5777 = vmatpush.bf16.msra.mxu0 %v3353
    %5778 = vmatpush.bf16.msra.mxu0 %v3347
    %5779 = vmatpush.bf16.msra.mxu0 %v3341
    %5780 = vmatpush.bf16.msra.mxu0 %v3335
    %5781 = vmatpush.bf16.msra.mxu0 %v3329
    %5782 = vmatpush.bf16.msra.mxu0 %v3323
    %5783 = vmatpush.bf16.msra.mxu0 %v3317
    %5784 = vmatpush.bf16.msra.mxu0 %v3311
    %5785 = vmatmul.bf16.gmra.mxu0 %v63
    %v5786 = vpop.f32.mrf.mxu0
    %v5787 = vadd.f32 %v5774, %v5786
    %v5788 = vpop.f32.mrf.mxu0
    %5789 = vdwg.mxu0
    %5790 = vmatpush.bf16.msra.mxu0 %v3401
    %5791 = vmatpush.bf16.msra.mxu0 %v3395
    %5792 = vmatpush.bf16.msra.mxu0 %v3389
    %5793 = vmatpush.bf16.msra.mxu0 %v3383
    %5794 = vmatpush.bf16.msra.mxu0 %v3377
    %5795 = vmatpush.bf16.msra.mxu0 %v3371
    %5796 = vmatpush.bf16.msra.mxu0 %v3365
    %5797 = vmatpush.bf16.msra.mxu0 %v3359
    %5798 = vmatmul.bf16.gmra.mxu0 %v64
    %v5799 = vpop.f32.mrf.mxu0
    %v5800 = vadd.f32 %v5787, %v5799
    %v5801 = vpop.f32.mrf.mxu0
    %5802 = vdwg.mxu0
    %5803 = vmatpush.bf16.msra.mxu0 %v3449
    %5804 = vmatpush.bf16.msra.mxu0 %v3443
    %5805 = vmatpush.bf16.msra.mxu0 %v3437
    %5806 = vmatpush.bf16.msra.mxu0 %v3431
    %5807 = vmatpush.bf16.msra.mxu0 %v3425
    %5808 = vmatpush.bf16.msra.mxu0 %v3419
    %5809 = vmatpush.bf16.msra.mxu0 %v3413
    %5810 = vmatpush.bf16.msra.mxu0 %v3407
    %5811 = vmatmul.bf16.gmra.mxu0 %v65
    %v5812 = vpop.f32.mrf.mxu0
    %v5813 = vadd.f32 %v5800, %v5812
    %v5814 = vpop.f32.mrf.mxu0
    %5815 = vdwg.mxu0
    %5816 = vmatpush.bf16.msra.mxu0 %v3497
    %5817 = vmatpush.bf16.msra.mxu0 %v3491
    %5818 = vmatpush.bf16.msra.mxu0 %v3485
    %5819 = vmatpush.bf16.msra.mxu0 %v3479
    %5820 = vmatpush.bf16.msra.mxu0 %v3473
    %5821 = vmatpush.bf16.msra.mxu0 %v3467
    %5822 = vmatpush.bf16.msra.mxu0 %v3461
    %5823 = vmatpush.bf16.msra.mxu0 %v3455
    %5824 = vmatmul.bf16.gmra.mxu0 %v66
    %v5825 = vpop.f32.mrf.mxu0
    %v5826 = vadd.f32 %v5813, %v5825
    %v5827 = vpop.f32.mrf.mxu0
    %5828 = vdwg.mxu0
    %5829 = vmatpush.bf16.msra.mxu0 %v3545
    %5830 = vmatpush.bf16.msra.mxu0 %v3539
    %5831 = vmatpush.bf16.msra.mxu0 %v3533
    %5832 = vmatpush.bf16.msra.mxu0 %v3527
    %5833 = vmatpush.bf16.msra.mxu0 %v3521
    %5834 = vmatpush.bf16.msra.mxu0 %v3515
    %5835 = vmatpush.bf16.msra.mxu0 %v3509
    %5836 = vmatpush.bf16.msra.mxu0 %v3503
    %5837 = vmatmul.bf16.gmra.mxu0 %v67
    %v5838 = vpop.f32.mrf.mxu0
    %v5839 = vadd.f32 %v5826, %v5838
    %v5840 = vpop.f32.mrf.mxu0
    %5841 = vdwg.mxu0
    %5842 = vmatpush.bf16.msra.mxu0 %v3593
    %5843 = vmatpush.bf16.msra.mxu0 %v3587
    %5844 = vmatpush.bf16.msra.mxu0 %v3581
    %5845 = vmatpush.bf16.msra.mxu0 %v3575
    %5846 = vmatpush.bf16.msra.mxu0 %v3569
    %5847 = vmatpush.bf16.msra.mxu0 %v3563
    %5848 = vmatpush.bf16.msra.mxu0 %v3557
    %5849 = vmatpush.bf16.msra.mxu0 %v3551
    %5850 = vmatmul.bf16.gmra.mxu0 %v68
    %v5851 = vpop.f32.mrf.mxu0
    %v5852 = vadd.f32 %v5839, %v5851
    %v5853 = vpop.f32.mrf.mxu0
    %5854 = vdwg.mxu0
    %5855 = vmatpush.bf16.msra.mxu0 %v3641
    %5856 = vmatpush.bf16.msra.mxu0 %v3635
    %5857 = vmatpush.bf16.msra.mxu0 %v3629
    %5858 = vmatpush.bf16.msra.mxu0 %v3623
    %5859 = vmatpush.bf16.msra.mxu0 %v3617
    %5860 = vmatpush.bf16.msra.mxu0 %v3611
    %5861 = vmatpush.bf16.msra.mxu0 %v3605
    %5862 = vmatpush.bf16.msra.mxu0 %v3599
    %5863 = vmatmul.bf16.gmra.mxu0 %v69
    %v5864 = vpop.f32.mrf.mxu0
    %v5865 = vadd.f32 %v5852, %v5864
    %v5866 = vpop.f32.mrf.mxu0
    %5867 = vdwg.mxu0
    %5868 = vmatpush.bf16.msra.mxu0 %v3689
    %5869 = vmatpush.bf16.msra.mxu0 %v3683
    %5870 = vmatpush.bf16.msra.mxu0 %v3677
    %5871 = vmatpush.bf16.msra.mxu0 %v3671
    %5872 = vmatpush.bf16.msra.mxu0 %v3665
    %5873 = vmatpush.bf16.msra.mxu0 %v3659
    %5874 = vmatpush.bf16.msra.mxu0 %v3653
    %5875 = vmatpush.bf16.msra.mxu0 %v3647
    %5876 = vmatmul.bf16.gmra.mxu0 %v70
    %v5877 = vpop.f32.mrf.mxu0
    %v5878 = vadd.f32 %v5865, %v5877
    %v5879 = vpop.f32.mrf.mxu0
    %5880 = vdwg.mxu0
    %5881 = vmatpush.bf16.msra.mxu0 %v3737
    %5882 = vmatpush.bf16.msra.mxu0 %v3731
    %5883 = vmatpush.bf16.msra.mxu0 %v3725
    %5884 = vmatpush.bf16.msra.mxu0 %v3719
    %5885 = vmatpush.bf16.msra.mxu0 %v3713
    %5886 = vmatpush.bf16.msra.mxu0 %v3707
    %5887 = vmatpush.bf16.msra.mxu0 %v3701
    %5888 = vmatpush.bf16.msra.mxu0 %v3695
    %5889 = vmatmul.bf16.gmra.mxu0 %v71
    %v5890 = vpop.f32.mrf.mxu0
    %v5891 = vadd.f32 %v5878, %v5890
    %v5892 = vpop.f32.mrf.mxu0
    %5893 = vdwg.mxu0
    %5894 = vmatpush.bf16.msra.mxu0 %v3785
    %5895 = vmatpush.bf16.msra.mxu0 %v3779
    %5896 = vmatpush.bf16.msra.mxu0 %v3773
    %5897 = vmatpush.bf16.msra.mxu0 %v3767
    %5898 = vmatpush.bf16.msra.mxu0 %v3761
    %5899 = vmatpush.bf16.msra.mxu0 %v3755
    %5900 = vmatpush.bf16.msra.mxu0 %v3749
    %5901 = vmatpush.bf16.msra.mxu0 %v3743
    %5902 = vmatmul.bf16.gmra.mxu0 %v72
    %v5903 = vpop.f32.mrf.mxu0
    %v5904 = vadd.f32 %v5891, %v5903
    %v5905 = vpop.f32.mrf.mxu0
    %5906 = vdwg.mxu0
    %5907 = vmatpush.bf16.msra.mxu0 %v3833
    %5908 = vmatpush.bf16.msra.mxu0 %v3827
    %5909 = vmatpush.bf16.msra.mxu0 %v3821
    %5910 = vmatpush.bf16.msra.mxu0 %v3815
    %5911 = vmatpush.bf16.msra.mxu0 %v3809
    %5912 = vmatpush.bf16.msra.mxu0 %v3803
    %5913 = vmatpush.bf16.msra.mxu0 %v3797
    %5914 = vmatpush.bf16.msra.mxu0 %v3791
    %5915 = vmatmul.bf16.gmra.mxu0 %v73
    %v5916 = vpop.f32.mrf.mxu0
    %v5917 = vadd.f32 %v5904, %v5916
    %v5918 = vpop.f32.mrf.mxu0
    %5919 = vdwg.mxu0
    %5920 = vmatpush.bf16.msra.mxu0 %v3881
    %5921 = vmatpush.bf16.msra.mxu0 %v3875
    %5922 = vmatpush.bf16.msra.mxu0 %v3869
    %5923 = vmatpush.bf16.msra.mxu0 %v3863
    %5924 = vmatpush.bf16.msra.mxu0 %v3857
    %5925 = vmatpush.bf16.msra.mxu0 %v3851
    %5926 = vmatpush.bf16.msra.mxu0 %v3845
    %5927 = vmatpush.bf16.msra.mxu0 %v3839
    %5928 = vmatmul.bf16.gmra.mxu0 %v74
    %v5929 = vpop.f32.mrf.mxu0
    %v5930 = vadd.f32 %v5917, %v5929
    %v5931 = vpop.f32.mrf.mxu0
    %5932 = vdwg.mxu0
    %5933 = vmatpush.bf16.msra.mxu0 %v3929
    %5934 = vmatpush.bf16.msra.mxu0 %v3923
    %5935 = vmatpush.bf16.msra.mxu0 %v3917
    %5936 = vmatpush.bf16.msra.mxu0 %v3911
    %5937 = vmatpush.bf16.msra.mxu0 %v3905
    %5938 = vmatpush.bf16.msra.mxu0 %v3899
    %5939 = vmatpush.bf16.msra.mxu0 %v3893
    %5940 = vmatpush.bf16.msra.mxu0 %v3887
    %5941 = vmatmul.bf16.gmra.mxu0 %v75
    %v5942 = vpop.f32.mrf.mxu0
    %v5943 = vadd.f32 %v5930, %v5942
    %v5944 = vpop.f32.mrf.mxu0
    %5945 = vdwg.mxu0
    %5946 = vst [vmem:[%s3] sm:$0xff] %v4903
    %5947 = vst [vmem:[%s3 + $0x8] sm:$0xff] %v5111
    %5948 = vst [vmem:[%s3 + $0x10] sm:$0xff] %v5319
    %5949 = vst [vmem:[%s3 + $0x18] sm:$0xff] %v5527
    %5950 = vst [vmem:[%s3 + $0x20] sm:$0xff] %v5735
    %5951 = vst [vmem:[%s3 + $0x28] sm:$0xff] %v5943
    // Predicated region
    $region22: #{m1501_head.1} parent=1 // pred_check
      _
    $region23: #{m1501_head.1} parent=1 // pred_check_branch
      %5953 = sbr.rel (0) target = $region25
    $region24: #{m1501_head.1} parent=1 // pred_region
      _
    $region25: #{m1501_head.1} parent=1 // pred_fallthru
      _
    // Predicated region
    $region26: #{m1501_head.1} parent=1 // pred_check
      _
    $region27: #{m1501_head.1} parent=1 // pred_check_branch
      %5955 = sbr.rel (0) target = $region29
    $region28: #{m1501_head.1} parent=1 // pred_region
      _
    $region29: #{m1501_head.1} parent=1 // pred_fallthru
      _
    %5956 = vsyncpa [#allocation3], 1
    %5957 = vsyncpa [#allocation5], 1

</llo_original>
